<compile_context>
chip_gen: v7x
topology: tpu7x:2x2x1
jax: 0.10.0
libtpu: 0.0.40
codegen_flags: <defaults>
</compile_context>

<pallas_src>
import math

import jax
import jax.numpy as jnp
from jax.experimental import pallas as pl
from jax.experimental.pallas import tpu as pltpu


# ----------------------------------------------------------------------------
# Kernel factory (all static dims / slab row offsets baked in as Python ints)
# ----------------------------------------------------------------------------
def make_vae_kernel(S, Din, H, L, P, off):
    G = 4 * H            # fused LSTM gate width (i|f|g|o)
    SD = S * Din         # recon lane width (batch-major, time flattened)

    def kernel(x_ref, wihbd_ref, w_ref, out_ref):
        f32 = jnp.float32
        B = x_ref.shape[0]

        def lrelu(v):
            return jnp.where(v > 0, v, 0.01 * v)

        def gates_to_hc(g, c_prev):
            # PyTorch gate order [i, f, g, o]; b_ih + b_hh already folded.
            sg = jax.nn.sigmoid(g)                    # one full-width EUP pass
            gg = jnp.tanh(g[:, 2 * H:3 * H])          # tanh only on the g slice
            i = sg[:, 0:H]
            f = sg[:, H:2 * H]
            o = sg[:, 3 * H:4 * H]
            c_new = f * c_prev + i * gg
            h_new = o * jnp.tanh(c_new)
            return h_new, c_new

        # ---------------- Encoder LSTM ----------------
        # Input projection for every timestep in one block-diagonal matmul:
        # (B, S*Din) @ (S*Din, S*4H) -> (B, S*4H). Step t occupies lanes
        # [t*4H, (t+1)*4H) (128-lane aligned for H=32), so x stays batch-major.
        gx = jnp.dot(x_ref[...], wihbd_ref[...], preferred_element_type=f32)

        e_whh = w_ref[off['e_whh']:off['e_whh'] + H, 0:G]
        e_b = w_ref[off['e_b']:off['e_b'] + 1, 0:G]

        h = jnp.zeros((B, H), f32)
        c = jnp.zeros((B, H), f32)
        # TODO(synk): hold e_whh / d_whh resident in the MXU across the
        # unrolled steps via pltpu.matmul_push_rhs/matmul_acc_lhs/matmul_pop
        # once that path is validated on all target generations; jnp.dot
        # re-pushes the RHS every step.
        for t in range(S):                            # static unroll, S tiny
            g = (gx[:, t * G:(t + 1) * G] + e_b
                 + jnp.dot(h, e_whh, preferred_element_type=f32))
            h, c = gates_to_hc(g, c)

        # torch: concat((h_n, c_n), dim=2).squeeze(0) -> (B, 2H)
        hc = jnp.concatenate([h, c], axis=1)
        w_mulv = w_ref[off['w_mulv']:off['w_mulv'] + 2 * H, 0:2 * L]
        b_mulv = w_ref[off['b_mulv']:off['b_mulv'] + 1, 0:2 * L]
        mulv = jnp.dot(hc, w_mulv, preferred_element_type=f32) + b_mulv
        mu = mulv[:, 0:L]
        lv = mulv[:, L:2 * L]

        # NOTE: reparameterize() draws eps ~ N(0,1) but z never reaches the
        # returned outputs (the decoder consumes mu), so sampling is omitted.
        # TODO(synk): add pltpu.prng-based z sampling if z is ever returned.

        # ------- fused mu heads: lat2hid | lat2hid2 | fc_seq | fc_mass -------
        w_mu4 = w_ref[off['w_mu4']:off['w_mu4'] + L, 0:G]
        b_mu4 = w_ref[off['b_mu4']:off['b_mu4'] + 1, 0:G]
        act = lrelu(jnp.dot(mu, w_mu4, preferred_element_type=f32) + b_mu4)
        dh0 = act[:, 0:H]          # decoder h0
        dc0 = act[:, H:2 * H]      # decoder c0
        sq = act[:, 2 * H:3 * H]   # fc_seq branch
        mm = act[:, 3 * H:4 * H]   # fc_mass branch

        # ---------------- Decoder LSTM ----------------
        d_wih = w_ref[off['d_wih']:off['d_wih'] + H, 0:G]
        d_whh = w_ref[off['d_whh']:off['d_whh'] + H, 0:G]
        d_b = w_ref[off['d_b']:off['d_b'] + 1, 0:G]
        # g0 = relu(emb_fc(start_token)) @ W_ih + (b_ih + b_hh): the start
        # token path is input independent, precomputed at param-build time.
        g0 = w_ref[off['g0']:off['g0'] + 1, 0:G]

        h, c = dh0, dc0
        g = g0 + jnp.dot(h, d_whh, preferred_element_type=f32)      # step 0
        h, c = gates_to_hc(g, c)
        h_steps = [h]
        for _ in range(1, S):                         # static unroll
            # forward_step: relu(previous raw LSTM output) is the next input.
            # Two dots per step -> no per-step lane concat on the serial chain.
            g = (jnp.dot(jnp.maximum(h, 0.0), d_wih, preferred_element_type=f32)
                 + jnp.dot(h, d_whh, preferred_element_type=f32) + d_b)
            h, c = gates_to_hc(g, c)
            h_steps.append(h)

        # Output projection for all steps in one block-diagonal matmul that
        # lands directly in batch-major (B, S*Din) lane layout (no transpose).
        h_lanes = jnp.concatenate(h_steps, axis=1)            # (B, S*H)
        out_bd = w_ref[off['out_bd']:off['out_bd'] + S * H, 0:SD]
        out_b = w_ref[off['out_b']:off['out_b'] + 1, 0:SD]
        recon = jnp.dot(h_lanes, out_bd, preferred_element_type=f32) + out_b

        # ---------------- num head ----------------
        seq2_w = w_ref[off['seq2_w']:off['seq2_w'] + H, 0:1]
        seq2_b = w_ref[off['seq2_b']:off['seq2_b'] + 1, 0:1]
        num = jnp.maximum(
            jnp.dot(sq, seq2_w, preferred_element_type=f32) + seq2_b, 0.0)

        # ---------------- mass head ----------------
        m2_w = w_ref[off['m2_w']:off['m2_w'] + H, 0:H]
        m2_b = w_ref[off['m2_b']:off['m2_b'] + 1, 0:H]
        m3_w = w_ref[off['m3_w']:off['m3_w'] + H, 0:P]
        m3_b = w_ref[off['m3_b']:off['m3_b'] + 1, 0:P]
        m = lrelu(jnp.dot(mm, m2_w, preferred_element_type=f32) + m2_b)
        logits = jnp.dot(m, m3_w, preferred_element_type=f32) + m3_b
        logits = logits - jnp.max(logits, axis=-1, keepdims=True)
        e = jnp.exp(logits)
        mass = e / jnp.sum(e, axis=-1, keepdims=True)    # exact softmax

        # ------------- single lane-dense packed output store -------------
        used = SD + 2 * L + 1 + P
        pad = jnp.zeros((B, 128 - used), f32)
        out_ref[...] = jnp.concatenate([recon, mu, lv, num, mass, pad], axis=1)

    return kernel


# ----------------------------------------------------------------------------
# Wrapper
# ----------------------------------------------------------------------------
def vae_forward(x, packed):
    """x: (B, S, Din) f32, batch-major (PyTorch batch_first=True).
    Returns (recon (B,S,Din), mu (B,L), log_var (B,L), num (B,1), mass (B,P))."""
    d = packed['dims']
    S, Din, H, L, P = d['S'], d['Din'], d['H'], d['L'], d['P']
    B = x.shape[0]
    assert x.shape == (B, S, Din)

    kernel = make_vae_kernel(S, Din, H, L, P, packed['off'])
    vmem = pl.BlockSpec(memory_space=pltpu.MemorySpace.VMEM)
    out = pl.pallas_call(
        kernel,
        out_shape=jax.ShapeDtypeStruct((B, 128), jnp.float32),
        in_specs=[vmem, vmem, vmem],
        out_specs=vmem,
    )(x.reshape(B, S * Din), packed['wihbd'], packed['slab'])

    SD = S * Din
    recon = out[:, 0:SD].reshape(B, S, Din)
    mu = out[:, SD:SD + L]
    lv = out[:, SD + L:SD + 2 * L]
    num = out[:, SD + 2 * L:SD + 2 * L + 1]
    mass = out[:, SD + 2 * L + 1:SD + 2 * L + 1 + P]
    return recon, mu, lv, num, mass


# ----------------------------------------------------------------------------
# One-time parameter packing (NOT in the per-call hot path)
# ----------------------------------------------------------------------------
def _pad_block(w):
    assert w.ndim == 2 and w.shape[1] <= 128
    rows = w.shape[0]
    prows = -(-rows // 8) * 8                       # sublane-align each block
    out = jnp.zeros((prows, 128), jnp.float32)
    return out.at[:rows, :w.shape[1]].set(w.astype(jnp.float32)), prows


def pack_params(p, start_token, S):
    """Fuse heads, fold the start-token path, build block-diagonal encoder-in /
    decoder-out projections, and pack everything into one (R, 128) slab."""
    Din, G = p['enc_wih'].shape
    H = G // 4
    L = p['wmu'].shape[1]
    P = p['m3_w'].shape[1]
    assert 4 * H <= 128 and 2 * H <= 128 and S * Din <= 128
    assert S * Din + 2 * L + 1 + P <= 128, "packed output must fit in 128 lanes"

    # heads that share an input -> fused once here (not per call)
    w_mulv = jnp.concatenate([p['wmu'], p['wlv']], axis=1)          # (2H, 2L)
    b_mulv = jnp.concatenate([p['bmu'], p['blv']], axis=1)          # (1, 2L)
    w_mu4 = jnp.concatenate(
        [p['l2h_w'], p['l2h2_w'], p['seq_w'], p['m1_w']], axis=1)   # (L, 4H)
    b_mu4 = jnp.concatenate(
        [p['l2h_b'], p['l2h2_b'], p['seq_b'], p['m1_b']], axis=1)   # (1, 4H)

    # start-token path: emb_fc -> relu -> W_ih + bias (input independent)
    st_emb = start_token @ p['emb_w'] + p['emb_b']                  # (1, H)
    g0 = jnp.maximum(st_emb, 0.0) @ p['dec_wih'] + p['dec_b']       # (1, 4H)

    # block-diagonal projections (kill all time-major transposes)
    eye = jnp.eye(S, dtype=jnp.float32)
    wihbd = jnp.kron(eye, p['enc_wih'].astype(jnp.float32))         # (S*Din, S*4H)
    out_bd = jnp.kron(eye, p['out_w'].astype(jnp.float32))          # (S*H, S*Din)
    out_b = jnp.tile(p['out_b'], (1, S))                            # (1, S*Din)

    blocks = [
        ('e_whh', p['enc_whh']), ('e_b', p['enc_b']),
        ('w_mulv', w_mulv), ('b_mulv', b_mulv),
        ('w_mu4', w_mu4), ('b_mu4', b_mu4),
        ('d_wih', p['dec_wih']), ('d_whh', p['dec_whh']), ('d_b', p['dec_b']),
        ('g0', g0),
        ('out_bd', out_bd), ('out_b', out_b),
        ('seq2_w', p['seq2_w']), ('seq2_b', p['seq2_b']),
        ('m2_w', p['m2_w']), ('m2_b', p['m2_b']),
        ('m3_w', p['m3_w']), ('m3_b', p['m3_b']),
    ]
    off, rows, r = {}, [], 0
    for name, w in blocks:
        padded, prows = _pad_block(jnp.asarray(w, jnp.float32))
        off[name] = r
        rows.append(padded)
        r += prows
    slab = jnp.concatenate(rows, axis=0)                            # (R, 128)

    return dict(slab=slab, wihbd=wihbd, off=off,
                dims=dict(S=S, Din=Din, H=H, L=L, P=P))


# --------------------- deterministic parameter construction ---------------------
def _uniform(key, shape, bound):
    return jax.random.uniform(key, shape, jnp.float32, -bound, bound)


def _linear(key, in_f, out_f):
    k1, k2 = jax.random.split(key)
    b = 1.0 / math.sqrt(in_f)
    w = _uniform(k1, (out_f, in_f), b)   # torch layout (out, in)
    bias = _uniform(k2, (out_f,), b)
    return w, bias


def _lstm(key, in_f, hid):
    k1, k2, k3, k4 = jax.random.split(key, 4)
    b = 1.0 / math.sqrt(hid)
    w_ih = _uniform(k1, (4 * hid, in_f), b)
    w_hh = _uniform(k2, (4 * hid, hid), b)
    b_ih = _uniform(k3, (4 * hid,), b)
    b_hh = _uniform(k4, (4 * hid,), b)
    return w_ih, w_hh, b_ih, b_hh


def make_params(key, input_dim, hidden_dim, latent_dim, num_part):
    ks = jax.random.split(key, 16)
    p = {}

    # encoder
    w_ih, w_hh, b_ih, b_hh = _lstm(ks[0], input_dim, hidden_dim)
    p["enc_wih"] = w_ih.T
    p["enc_whh"] = w_hh.T
    p["enc_b"] = (b_ih + b_hh).reshape(1, -1)
    w, b = _linear(ks[1], 2 * hidden_dim, latent_dim)
    p["wmu"], p["bmu"] = w.T, b.reshape(1, -1)
    w, b = _linear(ks[2], 2 * hidden_dim, latent_dim)
    p["wlv"], p["blv"] = w.T, b.reshape(1, -1)

    # decoder
    w, b = _linear(ks[3], latent_dim, hidden_dim)
    p["l2h_w"], p["l2h_b"] = w.T, b.reshape(1, -1)
    w, b = _linear(ks[4], latent_dim, hidden_dim)
    p["l2h2_w"], p["l2h2_b"] = w.T, b.reshape(1, -1)
    w, b = _linear(ks[5], input_dim, hidden_dim)
    p["emb_w"], p["emb_b"] = w.T, b.reshape(1, -1)
    w_ih, w_hh, b_ih, b_hh = _lstm(ks[6], hidden_dim, hidden_dim)
    p["dec_wih"] = w_ih.T
    p["dec_whh"] = w_hh.T
    p["dec_b"] = (b_ih + b_hh).reshape(1, -1)
    w, b = _linear(ks[7], hidden_dim, input_dim)
    p["out_w"], p["out_b"] = w.T, b.reshape(1, -1)
    w, b = _linear(ks[8], latent_dim, hidden_dim)
    p["seq_w"], p["seq_b"] = w.T, b.reshape(1, -1)
    w, b = _linear(ks[9], hidden_dim, 1)
    p["seq2_w"], p["seq2_b"] = w.T, b.reshape(1, -1)
    w, b = _linear(ks[10], latent_dim, hidden_dim)
    p["m1_w"], p["m1_b"] = w.T, b.reshape(1, -1)
    w, b = _linear(ks[11], hidden_dim, hidden_dim)
    p["m2_w"], p["m2_b"] = w.T, b.reshape(1, -1)
    w, b = _linear(ks[12], hidden_dim, num_part)
    p["m3_w"], p["m3_b"] = w.T, b.reshape(1, -1)
    return p


if __name__ == "__main__":
    B, S = 8, 8
    input_dim, hidden_dim, latent_dim, num_part = 5, 32, 4, 2

    root = jax.random.PRNGKey(0)
    kp, kx = jax.random.split(root)
    params = make_params(kp, input_dim, hidden_dim, latent_dim, num_part)
    start_token = jnp.zeros((1, input_dim), jnp.float32)
    packed = pack_params(params, start_token, S)        # one-time packing

    x = jax.random.normal(kx, (B, S, input_dim), jnp.float32)
    recon, mu, log_var, num, mass = vae_forward(x, packed)
    jax.block_until_ready((recon, mu, log_var, num, mass))

    assert recon.shape == (B, S, input_dim)
    assert mu.shape == (B, latent_dim) and log_var.shape == (B, latent_dim)
    assert num.shape == (B, 1) and mass.shape == (B, num_part)
    print("KERNEL_OK")
</pallas_src>

<mosaic_0001>
module attributes {stable_mosaic.version = 11 : i64} {
  func.func @kernel(%arg0: memref<8x40xf32, #tpu.memory_space<vmem>>, %arg1: memref<40x1024xf32, #tpu.memory_space<vmem>>, %arg2: memref<592x128xf32, #tpu.memory_space<vmem>>, %arg3: memref<8x128xf32, #tpu.memory_space<vmem>>) attributes {dimension_semantics = [], scalar_prefetch = 0 : i64, scratch_operands = 0 : i64, tpu.core_type = #tpu.core_type<tc>} {
    %c0 = arith.constant 0 : index
    %c0_0 = arith.constant 0 : index
    %0 = vector.load %arg0[%c0, %c0_0] : memref<8x40xf32, #tpu.memory_space<vmem>>, vector<8x40xf32>
    %c0_1 = arith.constant 0 : index
    %c0_2 = arith.constant 0 : index
    %1 = vector.load %arg1[%c0_1, %c0_2] : memref<40x1024xf32, #tpu.memory_space<vmem>>, vector<40x1024xf32>
    %cst = arith.constant dense<0.000000e+00> : vector<8x1024xf32>
    %2 = tpu.matmul %0, %1, %cst {dimension_numbers = #tpu.dot_dimension_numbers<[1], [0], [0], [1], [0, 0, 1, 1], [], []>} : vector<8x40xf32>, vector<40x1024xf32>, vector<8x1024xf32> -> vector<8x1024xf32>
    %c0_3 = arith.constant 0 : index
    %c0_4 = arith.constant 0 : index
    %3 = vector.load %arg2[%c0_3, %c0_4] : memref<592x128xf32, #tpu.memory_space<vmem>>, vector<32x128xf32>
    %c32 = arith.constant 32 : index
    %c0_5 = arith.constant 0 : index
    %4 = vector.load %arg2[%c32, %c0_5] : memref<592x128xf32, #tpu.memory_space<vmem>>, vector<1x128xf32>
    %cst_6 = arith.constant 0.000000e+00 : f32
    %5 = vector.broadcast %cst_6 : f32 to vector<8x32xf32>
    %cst_7 = arith.constant 0.000000e+00 : f32
    %6 = vector.broadcast %cst_7 : f32 to vector<8x32xf32>
    %7 = vector.extract_strided_slice %2 {offsets = [0, 0], sizes = [8, 128], strides = [1, 1]} : vector<8x1024xf32> to vector<8x128xf32>
    %8 = vector.broadcast %4 : vector<1x128xf32> to vector<8x128xf32>
    %9 = arith.addf %7, %8 : vector<8x128xf32>
    %cst_8 = arith.constant dense<0.000000e+00> : vector<8x128xf32>
    %10 = tpu.matmul %5, %3, %cst_8 {dimension_numbers = #tpu.dot_dimension_numbers<[1], [0], [0], [1], [0, 0, 1, 1], [], []>} : vector<8x32xf32>, vector<32x128xf32>, vector<8x128xf32> -> vector<8x128xf32>
    %11 = arith.addf %9, %10 : vector<8x128xf32>
    %12 = arith.negf %11 : vector<8x128xf32>
    %13 = math.exp %12 : vector<8x128xf32>
    %cst_9 = arith.constant 1.000000e+00 : f32
    %14 = vector.broadcast %cst_9 : f32 to vector<8x128xf32>
    %15 = arith.addf %14, %13 : vector<8x128xf32>
    %16 = arith.divf %14, %15 : vector<8x128xf32>
    %17 = vector.extract_strided_slice %11 {offsets = [0, 64], sizes = [8, 32], strides = [1, 1]} : vector<8x128xf32> to vector<8x32xf32>
    %18 = math.tanh %17 : vector<8x32xf32>
    %19 = vector.extract_strided_slice %16 {offsets = [0, 0], sizes = [8, 32], strides = [1, 1]} : vector<8x128xf32> to vector<8x32xf32>
    %20 = vector.extract_strided_slice %16 {offsets = [0, 32], sizes = [8, 32], strides = [1, 1]} : vector<8x128xf32> to vector<8x32xf32>
    %21 = vector.extract_strided_slice %16 {offsets = [0, 96], sizes = [8, 32], strides = [1, 1]} : vector<8x128xf32> to vector<8x32xf32>
    %22 = arith.mulf %20, %6 : vector<8x32xf32>
    %23 = arith.mulf %19, %18 : vector<8x32xf32>
    %24 = arith.addf %22, %23 : vector<8x32xf32>
    %25 = math.tanh %24 : vector<8x32xf32>
    %26 = arith.mulf %21, %25 : vector<8x32xf32>
    %27 = vector.extract_strided_slice %2 {offsets = [0, 128], sizes = [8, 128], strides = [1, 1]} : vector<8x1024xf32> to vector<8x128xf32>
    %28 = vector.broadcast %4 : vector<1x128xf32> to vector<8x128xf32>
    %29 = arith.addf %27, %28 : vector<8x128xf32>
    %cst_10 = arith.constant dense<0.000000e+00> : vector<8x128xf32>
    %30 = tpu.matmul %26, %3, %cst_10 {dimension_numbers = #tpu.dot_dimension_numbers<[1], [0], [0], [1], [0, 0, 1, 1], [], []>} : vector<8x32xf32>, vector<32x128xf32>, vector<8x128xf32> -> vector<8x128xf32>
    %31 = arith.addf %29, %30 : vector<8x128xf32>
    %32 = arith.negf %31 : vector<8x128xf32>
    %33 = math.exp %32 : vector<8x128xf32>
    %cst_11 = arith.constant 1.000000e+00 : f32
    %34 = vector.broadcast %cst_11 : f32 to vector<8x128xf32>
    %35 = arith.addf %34, %33 : vector<8x128xf32>
    %36 = arith.divf %34, %35 : vector<8x128xf32>
    %37 = vector.extract_strided_slice %31 {offsets = [0, 64], sizes = [8, 32], strides = [1, 1]} : vector<8x128xf32> to vector<8x32xf32>
    %38 = math.tanh %37 : vector<8x32xf32>
    %39 = vector.extract_strided_slice %36 {offsets = [0, 0], sizes = [8, 32], strides = [1, 1]} : vector<8x128xf32> to vector<8x32xf32>
    %40 = vector.extract_strided_slice %36 {offsets = [0, 32], sizes = [8, 32], strides = [1, 1]} : vector<8x128xf32> to vector<8x32xf32>
    %41 = vector.extract_strided_slice %36 {offsets = [0, 96], sizes = [8, 32], strides = [1, 1]} : vector<8x128xf32> to vector<8x32xf32>
    %42 = arith.mulf %40, %24 : vector<8x32xf32>
    %43 = arith.mulf %39, %38 : vector<8x32xf32>
    %44 = arith.addf %42, %43 : vector<8x32xf32>
    %45 = math.tanh %44 : vector<8x32xf32>
    %46 = arith.mulf %41, %45 : vector<8x32xf32>
    %47 = vector.extract_strided_slice %2 {offsets = [0, 256], sizes = [8, 128], strides = [1, 1]} : vector<8x1024xf32> to vector<8x128xf32>
    %48 = vector.broadcast %4 : vector<1x128xf32> to vector<8x128xf32>
    %49 = arith.addf %47, %48 : vector<8x128xf32>
    %cst_12 = arith.constant dense<0.000000e+00> : vector<8x128xf32>
    %50 = tpu.matmul %46, %3, %cst_12 {dimension_numbers = #tpu.dot_dimension_numbers<[1], [0], [0], [1], [0, 0, 1, 1], [], []>} : vector<8x32xf32>, vector<32x128xf32>, vector<8x128xf32> -> vector<8x128xf32>
    %51 = arith.addf %49, %50 : vector<8x128xf32>
    %52 = arith.negf %51 : vector<8x128xf32>
    %53 = math.exp %52 : vector<8x128xf32>
    %cst_13 = arith.constant 1.000000e+00 : f32
    %54 = vector.broadcast %cst_13 : f32 to vector<8x128xf32>
    %55 = arith.addf %54, %53 : vector<8x128xf32>
    %56 = arith.divf %54, %55 : vector<8x128xf32>
    %57 = vector.extract_strided_slice %51 {offsets = [0, 64], sizes = [8, 32], strides = [1, 1]} : vector<8x128xf32> to vector<8x32xf32>
    %58 = math.tanh %57 : vector<8x32xf32>
    %59 = vector.extract_strided_slice %56 {offsets = [0, 0], sizes = [8, 32], strides = [1, 1]} : vector<8x128xf32> to vector<8x32xf32>
    %60 = vector.extract_strided_slice %56 {offsets = [0, 32], sizes = [8, 32], strides = [1, 1]} : vector<8x128xf32> to vector<8x32xf32>
    %61 = vector.extract_strided_slice %56 {offsets = [0, 96], sizes = [8, 32], strides = [1, 1]} : vector<8x128xf32> to vector<8x32xf32>
    %62 = arith.mulf %60, %44 : vector<8x32xf32>
    %63 = arith.mulf %59, %58 : vector<8x32xf32>
    %64 = arith.addf %62, %63 : vector<8x32xf32>
    %65 = math.tanh %64 : vector<8x32xf32>
    %66 = arith.mulf %61, %65 : vector<8x32xf32>
    %67 = vector.extract_strided_slice %2 {offsets = [0, 384], sizes = [8, 128], strides = [1, 1]} : vector<8x1024xf32> to vector<8x128xf32>
    %68 = vector.broadcast %4 : vector<1x128xf32> to vector<8x128xf32>
    %69 = arith.addf %67, %68 : vector<8x128xf32>
    %cst_14 = arith.constant dense<0.000000e+00> : vector<8x128xf32>
    %70 = tpu.matmul %66, %3, %cst_14 {dimension_numbers = #tpu.dot_dimension_numbers<[1], [0], [0], [1], [0, 0, 1, 1], [], []>} : vector<8x32xf32>, vector<32x128xf32>, vector<8x128xf32> -> vector<8x128xf32>
    %71 = arith.addf %69, %70 : vector<8x128xf32>
    %72 = arith.negf %71 : vector<8x128xf32>
    %73 = math.exp %72 : vector<8x128xf32>
    %cst_15 = arith.constant 1.000000e+00 : f32
    %74 = vector.broadcast %cst_15 : f32 to vector<8x128xf32>
    %75 = arith.addf %74, %73 : vector<8x128xf32>
    %76 = arith.divf %74, %75 : vector<8x128xf32>
    %77 = vector.extract_strided_slice %71 {offsets = [0, 64], sizes = [8, 32], strides = [1, 1]} : vector<8x128xf32> to vector<8x32xf32>
    %78 = math.tanh %77 : vector<8x32xf32>
    %79 = vector.extract_strided_slice %76 {offsets = [0, 0], sizes = [8, 32], strides = [1, 1]} : vector<8x128xf32> to vector<8x32xf32>
    %80 = vector.extract_strided_slice %76 {offsets = [0, 32], sizes = [8, 32], strides = [1, 1]} : vector<8x128xf32> to vector<8x32xf32>
    %81 = vector.extract_strided_slice %76 {offsets = [0, 96], sizes = [8, 32], strides = [1, 1]} : vector<8x128xf32> to vector<8x32xf32>
    %82 = arith.mulf %80, %64 : vector<8x32xf32>
    %83 = arith.mulf %79, %78 : vector<8x32xf32>
    %84 = arith.addf %82, %83 : vector<8x32xf32>
    %85 = math.tanh %84 : vector<8x32xf32>
    %86 = arith.mulf %81, %85 : vector<8x32xf32>
    %87 = vector.extract_strided_slice %2 {offsets = [0, 512], sizes = [8, 128], strides = [1, 1]} : vector<8x1024xf32> to vector<8x128xf32>
    %88 = vector.broadcast %4 : vector<1x128xf32> to vector<8x128xf32>
    %89 = arith.addf %87, %88 : vector<8x128xf32>
    %cst_16 = arith.constant dense<0.000000e+00> : vector<8x128xf32>
    %90 = tpu.matmul %86, %3, %cst_16 {dimension_numbers = #tpu.dot_dimension_numbers<[1], [0], [0], [1], [0, 0, 1, 1], [], []>} : vector<8x32xf32>, vector<32x128xf32>, vector<8x128xf32> -> vector<8x128xf32>
    %91 = arith.addf %89, %90 : vector<8x128xf32>
    %92 = arith.negf %91 : vector<8x128xf32>
    %93 = math.exp %92 : vector<8x128xf32>
    %cst_17 = arith.constant 1.000000e+00 : f32
    %94 = vector.broadcast %cst_17 : f32 to vector<8x128xf32>
    %95 = arith.addf %94, %93 : vector<8x128xf32>
    %96 = arith.divf %94, %95 : vector<8x128xf32>
    %97 = vector.extract_strided_slice %91 {offsets = [0, 64], sizes = [8, 32], strides = [1, 1]} : vector<8x128xf32> to vector<8x32xf32>
    %98 = math.tanh %97 : vector<8x32xf32>
    %99 = vector.extract_strided_slice %96 {offsets = [0, 0], sizes = [8, 32], strides = [1, 1]} : vector<8x128xf32> to vector<8x32xf32>
    %100 = vector.extract_strided_slice %96 {offsets = [0, 32], sizes = [8, 32], strides = [1, 1]} : vector<8x128xf32> to vector<8x32xf32>
    %101 = vector.extract_strided_slice %96 {offsets = [0, 96], sizes = [8, 32], strides = [1, 1]} : vector<8x128xf32> to vector<8x32xf32>
    %102 = arith.mulf %100, %84 : vector<8x32xf32>
    %103 = arith.mulf %99, %98 : vector<8x32xf32>
    %104 = arith.addf %102, %103 : vector<8x32xf32>
    %105 = math.tanh %104 : vector<8x32xf32>
    %106 = arith.mulf %101, %105 : vector<8x32xf32>
    %107 = vector.extract_strided_slice %2 {offsets = [0, 640], sizes = [8, 128], strides = [1, 1]} : vector<8x1024xf32> to vector<8x128xf32>
    %108 = vector.broadcast %4 : vector<1x128xf32> to vector<8x128xf32>
    %109 = arith.addf %107, %108 : vector<8x128xf32>
    %cst_18 = arith.constant dense<0.000000e+00> : vector<8x128xf32>
    %110 = tpu.matmul %106, %3, %cst_18 {dimension_numbers = #tpu.dot_dimension_numbers<[1], [0], [0], [1], [0, 0, 1, 1], [], []>} : vector<8x32xf32>, vector<32x128xf32>, vector<8x128xf32> -> vector<8x128xf32>
    %111 = arith.addf %109, %110 : vector<8x128xf32>
    %112 = arith.negf %111 : vector<8x128xf32>
    %113 = math.exp %112 : vector<8x128xf32>
    %cst_19 = arith.constant 1.000000e+00 : f32
    %114 = vector.broadcast %cst_19 : f32 to vector<8x128xf32>
    %115 = arith.addf %114, %113 : vector<8x128xf32>
    %116 = arith.divf %114, %115 : vector<8x128xf32>
    %117 = vector.extract_strided_slice %111 {offsets = [0, 64], sizes = [8, 32], strides = [1, 1]} : vector<8x128xf32> to vector<8x32xf32>
    %118 = math.tanh %117 : vector<8x32xf32>
    %119 = vector.extract_strided_slice %116 {offsets = [0, 0], sizes = [8, 32], strides = [1, 1]} : vector<8x128xf32> to vector<8x32xf32>
    %120 = vector.extract_strided_slice %116 {offsets = [0, 32], sizes = [8, 32], strides = [1, 1]} : vector<8x128xf32> to vector<8x32xf32>
    %121 = vector.extract_strided_slice %116 {offsets = [0, 96], sizes = [8, 32], strides = [1, 1]} : vector<8x128xf32> to vector<8x32xf32>
    %122 = arith.mulf %120, %104 : vector<8x32xf32>
    %123 = arith.mulf %119, %118 : vector<8x32xf32>
    %124 = arith.addf %122, %123 : vector<8x32xf32>
    %125 = math.tanh %124 : vector<8x32xf32>
    %126 = arith.mulf %121, %125 : vector<8x32xf32>
    %127 = vector.extract_strided_slice %2 {offsets = [0, 768], sizes = [8, 128], strides = [1, 1]} : vector<8x1024xf32> to vector<8x128xf32>
    %128 = vector.broadcast %4 : vector<1x128xf32> to vector<8x128xf32>
    %129 = arith.addf %127, %128 : vector<8x128xf32>
    %cst_20 = arith.constant dense<0.000000e+00> : vector<8x128xf32>
    %130 = tpu.matmul %126, %3, %cst_20 {dimension_numbers = #tpu.dot_dimension_numbers<[1], [0], [0], [1], [0, 0, 1, 1], [], []>} : vector<8x32xf32>, vector<32x128xf32>, vector<8x128xf32> -> vector<8x128xf32>
    %131 = arith.addf %129, %130 : vector<8x128xf32>
    %132 = arith.negf %131 : vector<8x128xf32>
    %133 = math.exp %132 : vector<8x128xf32>
    %cst_21 = arith.constant 1.000000e+00 : f32
    %134 = vector.broadcast %cst_21 : f32 to vector<8x128xf32>
    %135 = arith.addf %134, %133 : vector<8x128xf32>
    %136 = arith.divf %134, %135 : vector<8x128xf32>
    %137 = vector.extract_strided_slice %131 {offsets = [0, 64], sizes = [8, 32], strides = [1, 1]} : vector<8x128xf32> to vector<8x32xf32>
    %138 = math.tanh %137 : vector<8x32xf32>
    %139 = vector.extract_strided_slice %136 {offsets = [0, 0], sizes = [8, 32], strides = [1, 1]} : vector<8x128xf32> to vector<8x32xf32>
    %140 = vector.extract_strided_slice %136 {offsets = [0, 32], sizes = [8, 32], strides = [1, 1]} : vector<8x128xf32> to vector<8x32xf32>
    %141 = vector.extract_strided_slice %136 {offsets = [0, 96], sizes = [8, 32], strides = [1, 1]} : vector<8x128xf32> to vector<8x32xf32>
    %142 = arith.mulf %140, %124 : vector<8x32xf32>
    %143 = arith.mulf %139, %138 : vector<8x32xf32>
    %144 = arith.addf %142, %143 : vector<8x32xf32>
    %145 = math.tanh %144 : vector<8x32xf32>
    %146 = arith.mulf %141, %145 : vector<8x32xf32>
    %147 = vector.extract_strided_slice %2 {offsets = [0, 896], sizes = [8, 128], strides = [1, 1]} : vector<8x1024xf32> to vector<8x128xf32>
    %148 = vector.broadcast %4 : vector<1x128xf32> to vector<8x128xf32>
    %149 = arith.addf %147, %148 : vector<8x128xf32>
    %cst_22 = arith.constant dense<0.000000e+00> : vector<8x128xf32>
    %150 = tpu.matmul %146, %3, %cst_22 {dimension_numbers = #tpu.dot_dimension_numbers<[1], [0], [0], [1], [0, 0, 1, 1], [], []>} : vector<8x32xf32>, vector<32x128xf32>, vector<8x128xf32> -> vector<8x128xf32>
    %151 = arith.addf %149, %150 : vector<8x128xf32>
    %152 = arith.negf %151 : vector<8x128xf32>
    %153 = math.exp %152 : vector<8x128xf32>
    %cst_23 = arith.constant 1.000000e+00 : f32
    %154 = vector.broadcast %cst_23 : f32 to vector<8x128xf32>
    %155 = arith.addf %154, %153 : vector<8x128xf32>
    %156 = arith.divf %154, %155 : vector<8x128xf32>
    %157 = vector.extract_strided_slice %151 {offsets = [0, 64], sizes = [8, 32], strides = [1, 1]} : vector<8x128xf32> to vector<8x32xf32>
    %158 = math.tanh %157 : vector<8x32xf32>
    %159 = vector.extract_strided_slice %156 {offsets = [0, 0], sizes = [8, 32], strides = [1, 1]} : vector<8x128xf32> to vector<8x32xf32>
    %160 = vector.extract_strided_slice %156 {offsets = [0, 32], sizes = [8, 32], strides = [1, 1]} : vector<8x128xf32> to vector<8x32xf32>
    %161 = vector.extract_strided_slice %156 {offsets = [0, 96], sizes = [8, 32], strides = [1, 1]} : vector<8x128xf32> to vector<8x32xf32>
    %162 = arith.mulf %160, %144 : vector<8x32xf32>
    %163 = arith.mulf %159, %158 : vector<8x32xf32>
    %164 = arith.addf %162, %163 : vector<8x32xf32>
    %165 = math.tanh %164 : vector<8x32xf32>
    %166 = arith.mulf %161, %165 : vector<8x32xf32>
    %167 = tpu.concatenate %166, %164 in 1 : vector<8x32xf32>, vector<8x32xf32> -> vector<8x64xf32>
    %c40 = arith.constant 40 : index
    %c0_24 = arith.constant 0 : index
    %168 = vector.load %arg2[%c40, %c0_24] : memref<592x128xf32, #tpu.memory_space<vmem>>, vector<64x8xf32>
    %c104 = arith.constant 104 : index
    %c0_25 = arith.constant 0 : index
    %169 = vector.load %arg2[%c104, %c0_25] : memref<592x128xf32, #tpu.memory_space<vmem>>, vector<1x8xf32>
    %cst_26 = arith.constant dense<0.000000e+00> : vector<8x8xf32>
    %170 = tpu.matmul %167, %168, %cst_26 {dimension_numbers = #tpu.dot_dimension_numbers<[1], [0], [0], [1], [0, 0, 1, 1], [], []>} : vector<8x64xf32>, vector<64x8xf32>, vector<8x8xf32> -> vector<8x8xf32>
    %171 = vector.broadcast %169 : vector<1x8xf32> to vector<8x8xf32>
    %172 = arith.addf %170, %171 : vector<8x8xf32>
    %173 = vector.extract_strided_slice %172 {offsets = [0, 0], sizes = [8, 4], strides = [1, 1]} : vector<8x8xf32> to vector<8x4xf32>
    %174 = vector.extract_strided_slice %172 {offsets = [0, 4], sizes = [8, 4], strides = [1, 1]} : vector<8x8xf32> to vector<8x4xf32>
    %c112 = arith.constant 112 : index
    %c0_27 = arith.constant 0 : index
    %175 = vector.load %arg2[%c112, %c0_27] : memref<592x128xf32, #tpu.memory_space<vmem>>, vector<4x128xf32>
    %c120 = arith.constant 120 : index
    %c0_28 = arith.constant 0 : index
    %176 = vector.load %arg2[%c120, %c0_28] : memref<592x128xf32, #tpu.memory_space<vmem>>, vector<1x128xf32>
    %cst_29 = arith.constant dense<0.000000e+00> : vector<8x128xf32>
    %177 = tpu.matmul %173, %175, %cst_29 {dimension_numbers = #tpu.dot_dimension_numbers<[1], [0], [0], [1], [0, 0, 1, 1], [], []>} : vector<8x4xf32>, vector<4x128xf32>, vector<8x128xf32> -> vector<8x128xf32>
    %178 = vector.broadcast %176 : vector<1x128xf32> to vector<8x128xf32>
    %179 = arith.addf %177, %178 : vector<8x128xf32>
    %cst_30 = arith.constant 0.000000e+00 : f32
    %180 = vector.broadcast %cst_30 : f32 to vector<8x128xf32>
    %181 = arith.cmpf ogt, %179, %180 : vector<8x128xf32>
    %cst_31 = arith.constant 0.00999999977 : f32
    %182 = vector.broadcast %cst_31 : f32 to vector<8x128xf32>
    %183 = arith.mulf %182, %179 : vector<8x128xf32>
    %184 = arith.select %181, %179, %183 : vector<8x128xi1>, vector<8x128xf32>
    %185 = vector.extract_strided_slice %184 {offsets = [0, 0], sizes = [8, 32], strides = [1, 1]} : vector<8x128xf32> to vector<8x32xf32>
    %186 = vector.extract_strided_slice %184 {offsets = [0, 32], sizes = [8, 32], strides = [1, 1]} : vector<8x128xf32> to vector<8x32xf32>
    %187 = vector.extract_strided_slice %184 {offsets = [0, 64], sizes = [8, 32], strides = [1, 1]} : vector<8x128xf32> to vector<8x32xf32>
    %188 = vector.extract_strided_slice %184 {offsets = [0, 96], sizes = [8, 32], strides = [1, 1]} : vector<8x128xf32> to vector<8x32xf32>
    %c128 = arith.constant 128 : index
    %c0_32 = arith.constant 0 : index
    %189 = vector.load %arg2[%c128, %c0_32] : memref<592x128xf32, #tpu.memory_space<vmem>>, vector<32x128xf32>
    %c160 = arith.constant 160 : index
    %c0_33 = arith.constant 0 : index
    %190 = vector.load %arg2[%c160, %c0_33] : memref<592x128xf32, #tpu.memory_space<vmem>>, vector<32x128xf32>
    %c192 = arith.constant 192 : index
    %c0_34 = arith.constant 0 : index
    %191 = vector.load %arg2[%c192, %c0_34] : memref<592x128xf32, #tpu.memory_space<vmem>>, vector<1x128xf32>
    %c200 = arith.constant 200 : index
    %c0_35 = arith.constant 0 : index
    %192 = vector.load %arg2[%c200, %c0_35] : memref<592x128xf32, #tpu.memory_space<vmem>>, vector<1x128xf32>
    %cst_36 = arith.constant dense<0.000000e+00> : vector<8x128xf32>
    %193 = tpu.matmul %185, %190, %cst_36 {dimension_numbers = #tpu.dot_dimension_numbers<[1], [0], [0], [1], [0, 0, 1, 1], [], []>} : vector<8x32xf32>, vector<32x128xf32>, vector<8x128xf32> -> vector<8x128xf32>
    %194 = vector.broadcast %192 : vector<1x128xf32> to vector<8x128xf32>
    %195 = arith.addf %194, %193 : vector<8x128xf32>
    %196 = arith.negf %195 : vector<8x128xf32>
    %197 = math.exp %196 : vector<8x128xf32>
    %cst_37 = arith.constant 1.000000e+00 : f32
    %198 = vector.broadcast %cst_37 : f32 to vector<8x128xf32>
    %199 = arith.addf %198, %197 : vector<8x128xf32>
    %200 = arith.divf %198, %199 : vector<8x128xf32>
    %201 = vector.extract_strided_slice %195 {offsets = [0, 64], sizes = [8, 32], strides = [1, 1]} : vector<8x128xf32> to vector<8x32xf32>
    %202 = math.tanh %201 : vector<8x32xf32>
    %203 = vector.extract_strided_slice %200 {offsets = [0, 0], sizes = [8, 32], strides = [1, 1]} : vector<8x128xf32> to vector<8x32xf32>
    %204 = vector.extract_strided_slice %200 {offsets = [0, 32], sizes = [8, 32], strides = [1, 1]} : vector<8x128xf32> to vector<8x32xf32>
    %205 = vector.extract_strided_slice %200 {offsets = [0, 96], sizes = [8, 32], strides = [1, 1]} : vector<8x128xf32> to vector<8x32xf32>
    %206 = arith.mulf %204, %186 : vector<8x32xf32>
    %207 = arith.mulf %203, %202 : vector<8x32xf32>
    %208 = arith.addf %206, %207 : vector<8x32xf32>
    %209 = math.tanh %208 : vector<8x32xf32>
    %210 = arith.mulf %205, %209 : vector<8x32xf32>
    %cst_38 = arith.constant 0.000000e+00 : f32
    %211 = vector.broadcast %cst_38 : f32 to vector<8x32xf32>
    %212 = arith.maximumf %210, %211 : vector<8x32xf32>
    %cst_39 = arith.constant dense<0.000000e+00> : vector<8x128xf32>
    %213 = tpu.matmul %212, %189, %cst_39 {dimension_numbers = #tpu.dot_dimension_numbers<[1], [0], [0], [1], [0, 0, 1, 1], [], []>} : vector<8x32xf32>, vector<32x128xf32>, vector<8x128xf32> -> vector<8x128xf32>
    %cst_40 = arith.constant dense<0.000000e+00> : vector<8x128xf32>
    %214 = tpu.matmul %210, %190, %cst_40 {dimension_numbers = #tpu.dot_dimension_numbers<[1], [0], [0], [1], [0, 0, 1, 1], [], []>} : vector<8x32xf32>, vector<32x128xf32>, vector<8x128xf32> -> vector<8x128xf32>
    %215 = arith.addf %213, %214 : vector<8x128xf32>
    %216 = vector.broadcast %191 : vector<1x128xf32> to vector<8x128xf32>
    %217 = arith.addf %215, %216 : vector<8x128xf32>
    %218 = arith.negf %217 : vector<8x128xf32>
    %219 = math.exp %218 : vector<8x128xf32>
    %cst_41 = arith.constant 1.000000e+00 : f32
    %220 = vector.broadcast %cst_41 : f32 to vector<8x128xf32>
    %221 = arith.addf %220, %219 : vector<8x128xf32>
    %222 = arith.divf %220, %221 : vector<8x128xf32>
    %223 = vector.extract_strided_slice %217 {offsets = [0, 64], sizes = [8, 32], strides = [1, 1]} : vector<8x128xf32> to vector<8x32xf32>
    %224 = math.tanh %223 : vector<8x32xf32>
    %225 = vector.extract_strided_slice %222 {offsets = [0, 0], sizes = [8, 32], strides = [1, 1]} : vector<8x128xf32> to vector<8x32xf32>
    %226 = vector.extract_strided_slice %222 {offsets = [0, 32], sizes = [8, 32], strides = [1, 1]} : vector<8x128xf32> to vector<8x32xf32>
    %227 = vector.extract_strided_slice %222 {offsets = [0, 96], sizes = [8, 32], strides = [1, 1]} : vector<8x128xf32> to vector<8x32xf32>
    %228 = arith.mulf %226, %208 : vector<8x32xf32>
    %229 = arith.mulf %225, %224 : vector<8x32xf32>
    %230 = arith.addf %228, %229 : vector<8x32xf32>
    %231 = math.tanh %230 : vector<8x32xf32>
    %232 = arith.mulf %227, %231 : vector<8x32xf32>
    %cst_42 = arith.constant 0.000000e+00 : f32
    %233 = vector.broadcast %cst_42 : f32 to vector<8x32xf32>
    %234 = arith.maximumf %232, %233 : vector<8x32xf32>
    %cst_43 = arith.constant dense<0.000000e+00> : vector<8x128xf32>
    %235 = tpu.matmul %234, %189, %cst_43 {dimension_numbers = #tpu.dot_dimension_numbers<[1], [0], [0], [1], [0, 0, 1, 1], [], []>} : vector<8x32xf32>, vector<32x128xf32>, vector<8x128xf32> -> vector<8x128xf32>
    %cst_44 = arith.constant dense<0.000000e+00> : vector<8x128xf32>
    %236 = tpu.matmul %232, %190, %cst_44 {dimension_numbers = #tpu.dot_dimension_numbers<[1], [0], [0], [1], [0, 0, 1, 1], [], []>} : vector<8x32xf32>, vector<32x128xf32>, vector<8x128xf32> -> vector<8x128xf32>
    %237 = arith.addf %235, %236 : vector<8x128xf32>
    %238 = vector.broadcast %191 : vector<1x128xf32> to vector<8x128xf32>
    %239 = arith.addf %237, %238 : vector<8x128xf32>
    %240 = arith.negf %239 : vector<8x128xf32>
    %241 = math.exp %240 : vector<8x128xf32>
    %cst_45 = arith.constant 1.000000e+00 : f32
    %242 = vector.broadcast %cst_45 : f32 to vector<8x128xf32>
    %243 = arith.addf %242, %241 : vector<8x128xf32>
    %244 = arith.divf %242, %243 : vector<8x128xf32>
    %245 = vector.extract_strided_slice %239 {offsets = [0, 64], sizes = [8, 32], strides = [1, 1]} : vector<8x128xf32> to vector<8x32xf32>
    %246 = math.tanh %245 : vector<8x32xf32>
    %247 = vector.extract_strided_slice %244 {offsets = [0, 0], sizes = [8, 32], strides = [1, 1]} : vector<8x128xf32> to vector<8x32xf32>
    %248 = vector.extract_strided_slice %244 {offsets = [0, 32], sizes = [8, 32], strides = [1, 1]} : vector<8x128xf32> to vector<8x32xf32>
    %249 = vector.extract_strided_slice %244 {offsets = [0, 96], sizes = [8, 32], strides = [1, 1]} : vector<8x128xf32> to vector<8x32xf32>
    %250 = arith.mulf %248, %230 : vector<8x32xf32>
    %251 = arith.mulf %247, %246 : vector<8x32xf32>
    %252 = arith.addf %250, %251 : vector<8x32xf32>
    %253 = math.tanh %252 : vector<8x32xf32>
    %254 = arith.mulf %249, %253 : vector<8x32xf32>
    %cst_46 = arith.constant 0.000000e+00 : f32
    %255 = vector.broadcast %cst_46 : f32 to vector<8x32xf32>
    %256 = arith.maximumf %254, %255 : vector<8x32xf32>
    %cst_47 = arith.constant dense<0.000000e+00> : vector<8x128xf32>
    %257 = tpu.matmul %256, %189, %cst_47 {dimension_numbers = #tpu.dot_dimension_numbers<[1], [0], [0], [1], [0, 0, 1, 1], [], []>} : vector<8x32xf32>, vector<32x128xf32>, vector<8x128xf32> -> vector<8x128xf32>
    %cst_48 = arith.constant dense<0.000000e+00> : vector<8x128xf32>
    %258 = tpu.matmul %254, %190, %cst_48 {dimension_numbers = #tpu.dot_dimension_numbers<[1], [0], [0], [1], [0, 0, 1, 1], [], []>} : vector<8x32xf32>, vector<32x128xf32>, vector<8x128xf32> -> vector<8x128xf32>
    %259 = arith.addf %257, %258 : vector<8x128xf32>
    %260 = vector.broadcast %191 : vector<1x128xf32> to vector<8x128xf32>
    %261 = arith.addf %259, %260 : vector<8x128xf32>
    %262 = arith.negf %261 : vector<8x128xf32>
    %263 = math.exp %262 : vector<8x128xf32>
    %cst_49 = arith.constant 1.000000e+00 : f32
    %264 = vector.broadcast %cst_49 : f32 to vector<8x128xf32>
    %265 = arith.addf %264, %263 : vector<8x128xf32>
    %266 = arith.divf %264, %265 : vector<8x128xf32>
    %267 = vector.extract_strided_slice %261 {offsets = [0, 64], sizes = [8, 32], strides = [1, 1]} : vector<8x128xf32> to vector<8x32xf32>
    %268 = math.tanh %267 : vector<8x32xf32>
    %269 = vector.extract_strided_slice %266 {offsets = [0, 0], sizes = [8, 32], strides = [1, 1]} : vector<8x128xf32> to vector<8x32xf32>
    %270 = vector.extract_strided_slice %266 {offsets = [0, 32], sizes = [8, 32], strides = [1, 1]} : vector<8x128xf32> to vector<8x32xf32>
    %271 = vector.extract_strided_slice %266 {offsets = [0, 96], sizes = [8, 32], strides = [1, 1]} : vector<8x128xf32> to vector<8x32xf32>
    %272 = arith.mulf %270, %252 : vector<8x32xf32>
    %273 = arith.mulf %269, %268 : vector<8x32xf32>
    %274 = arith.addf %272, %273 : vector<8x32xf32>
    %275 = math.tanh %274 : vector<8x32xf32>
    %276 = arith.mulf %271, %275 : vector<8x32xf32>
    %cst_50 = arith.constant 0.000000e+00 : f32
    %277 = vector.broadcast %cst_50 : f32 to vector<8x32xf32>
    %278 = arith.maximumf %276, %277 : vector<8x32xf32>
    %cst_51 = arith.constant dense<0.000000e+00> : vector<8x128xf32>
    %279 = tpu.matmul %278, %189, %cst_51 {dimension_numbers = #tpu.dot_dimension_numbers<[1], [0], [0], [1], [0, 0, 1, 1], [], []>} : vector<8x32xf32>, vector<32x128xf32>, vector<8x128xf32> -> vector<8x128xf32>
    %cst_52 = arith.constant dense<0.000000e+00> : vector<8x128xf32>
    %280 = tpu.matmul %276, %190, %cst_52 {dimension_numbers = #tpu.dot_dimension_numbers<[1], [0], [0], [1], [0, 0, 1, 1], [], []>} : vector<8x32xf32>, vector<32x128xf32>, vector<8x128xf32> -> vector<8x128xf32>
    %281 = arith.addf %279, %280 : vector<8x128xf32>
    %282 = vector.broadcast %191 : vector<1x128xf32> to vector<8x128xf32>
    %283 = arith.addf %281, %282 : vector<8x128xf32>
    %284 = arith.negf %283 : vector<8x128xf32>
    %285 = math.exp %284 : vector<8x128xf32>
    %cst_53 = arith.constant 1.000000e+00 : f32
    %286 = vector.broadcast %cst_53 : f32 to vector<8x128xf32>
    %287 = arith.addf %286, %285 : vector<8x128xf32>
    %288 = arith.divf %286, %287 : vector<8x128xf32>
    %289 = vector.extract_strided_slice %283 {offsets = [0, 64], sizes = [8, 32], strides = [1, 1]} : vector<8x128xf32> to vector<8x32xf32>
    %290 = math.tanh %289 : vector<8x32xf32>
    %291 = vector.extract_strided_slice %288 {offsets = [0, 0], sizes = [8, 32], strides = [1, 1]} : vector<8x128xf32> to vector<8x32xf32>
    %292 = vector.extract_strided_slice %288 {offsets = [0, 32], sizes = [8, 32], strides = [1, 1]} : vector<8x128xf32> to vector<8x32xf32>
    %293 = vector.extract_strided_slice %288 {offsets = [0, 96], sizes = [8, 32], strides = [1, 1]} : vector<8x128xf32> to vector<8x32xf32>
    %294 = arith.mulf %292, %274 : vector<8x32xf32>
    %295 = arith.mulf %291, %290 : vector<8x32xf32>
    %296 = arith.addf %294, %295 : vector<8x32xf32>
    %297 = math.tanh %296 : vector<8x32xf32>
    %298 = arith.mulf %293, %297 : vector<8x32xf32>
    %cst_54 = arith.constant 0.000000e+00 : f32
    %299 = vector.broadcast %cst_54 : f32 to vector<8x32xf32>
    %300 = arith.maximumf %298, %299 : vector<8x32xf32>
    %cst_55 = arith.constant dense<0.000000e+00> : vector<8x128xf32>
    %301 = tpu.matmul %300, %189, %cst_55 {dimension_numbers = #tpu.dot_dimension_numbers<[1], [0], [0], [1], [0, 0, 1, 1], [], []>} : vector<8x32xf32>, vector<32x128xf32>, vector<8x128xf32> -> vector<8x128xf32>
    %cst_56 = arith.constant dense<0.000000e+00> : vector<8x128xf32>
    %302 = tpu.matmul %298, %190, %cst_56 {dimension_numbers = #tpu.dot_dimension_numbers<[1], [0], [0], [1], [0, 0, 1, 1], [], []>} : vector<8x32xf32>, vector<32x128xf32>, vector<8x128xf32> -> vector<8x128xf32>
    %303 = arith.addf %301, %302 : vector<8x128xf32>
    %304 = vector.broadcast %191 : vector<1x128xf32> to vector<8x128xf32>
    %305 = arith.addf %303, %304 : vector<8x128xf32>
    %306 = arith.negf %305 : vector<8x128xf32>
    %307 = math.exp %306 : vector<8x128xf32>
    %cst_57 = arith.constant 1.000000e+00 : f32
    %308 = vector.broadcast %cst_57 : f32 to vector<8x128xf32>
    %309 = arith.addf %308, %307 : vector<8x128xf32>
    %310 = arith.divf %308, %309 : vector<8x128xf32>
    %311 = vector.extract_strided_slice %305 {offsets = [0, 64], sizes = [8, 32], strides = [1, 1]} : vector<8x128xf32> to vector<8x32xf32>
    %312 = math.tanh %311 : vector<8x32xf32>
    %313 = vector.extract_strided_slice %310 {offsets = [0, 0], sizes = [8, 32], strides = [1, 1]} : vector<8x128xf32> to vector<8x32xf32>
    %314 = vector.extract_strided_slice %310 {offsets = [0, 32], sizes = [8, 32], strides = [1, 1]} : vector<8x128xf32> to vector<8x32xf32>
    %315 = vector.extract_strided_slice %310 {offsets = [0, 96], sizes = [8, 32], strides = [1, 1]} : vector<8x128xf32> to vector<8x32xf32>
    %316 = arith.mulf %314, %296 : vector<8x32xf32>
    %317 = arith.mulf %313, %312 : vector<8x32xf32>
    %318 = arith.addf %316, %317 : vector<8x32xf32>
    %319 = math.tanh %318 : vector<8x32xf32>
    %320 = arith.mulf %315, %319 : vector<8x32xf32>
    %cst_58 = arith.constant 0.000000e+00 : f32
    %321 = vector.broadcast %cst_58 : f32 to vector<8x32xf32>
    %322 = arith.maximumf %320, %321 : vector<8x32xf32>
    %cst_59 = arith.constant dense<0.000000e+00> : vector<8x128xf32>
    %323 = tpu.matmul %322, %189, %cst_59 {dimension_numbers = #tpu.dot_dimension_numbers<[1], [0], [0], [1], [0, 0, 1, 1], [], []>} : vector<8x32xf32>, vector<32x128xf32>, vector<8x128xf32> -> vector<8x128xf32>
    %cst_60 = arith.constant dense<0.000000e+00> : vector<8x128xf32>
    %324 = tpu.matmul %320, %190, %cst_60 {dimension_numbers = #tpu.dot_dimension_numbers<[1], [0], [0], [1], [0, 0, 1, 1], [], []>} : vector<8x32xf32>, vector<32x128xf32>, vector<8x128xf32> -> vector<8x128xf32>
    %325 = arith.addf %323, %324 : vector<8x128xf32>
    %326 = vector.broadcast %191 : vector<1x128xf32> to vector<8x128xf32>
    %327 = arith.addf %325, %326 : vector<8x128xf32>
    %328 = arith.negf %327 : vector<8x128xf32>
    %329 = math.exp %328 : vector<8x128xf32>
    %cst_61 = arith.constant 1.000000e+00 : f32
    %330 = vector.broadcast %cst_61 : f32 to vector<8x128xf32>
    %331 = arith.addf %330, %329 : vector<8x128xf32>
    %332 = arith.divf %330, %331 : vector<8x128xf32>
    %333 = vector.extract_strided_slice %327 {offsets = [0, 64], sizes = [8, 32], strides = [1, 1]} : vector<8x128xf32> to vector<8x32xf32>
    %334 = math.tanh %333 : vector<8x32xf32>
    %335 = vector.extract_strided_slice %332 {offsets = [0, 0], sizes = [8, 32], strides = [1, 1]} : vector<8x128xf32> to vector<8x32xf32>
    %336 = vector.extract_strided_slice %332 {offsets = [0, 32], sizes = [8, 32], strides = [1, 1]} : vector<8x128xf32> to vector<8x32xf32>
    %337 = vector.extract_strided_slice %332 {offsets = [0, 96], sizes = [8, 32], strides = [1, 1]} : vector<8x128xf32> to vector<8x32xf32>
    %338 = arith.mulf %336, %318 : vector<8x32xf32>
    %339 = arith.mulf %335, %334 : vector<8x32xf32>
    %340 = arith.addf %338, %339 : vector<8x32xf32>
    %341 = math.tanh %340 : vector<8x32xf32>
    %342 = arith.mulf %337, %341 : vector<8x32xf32>
    %cst_62 = arith.constant 0.000000e+00 : f32
    %343 = vector.broadcast %cst_62 : f32 to vector<8x32xf32>
    %344 = arith.maximumf %342, %343 : vector<8x32xf32>
    %cst_63 = arith.constant dense<0.000000e+00> : vector<8x128xf32>
    %345 = tpu.matmul %344, %189, %cst_63 {dimension_numbers = #tpu.dot_dimension_numbers<[1], [0], [0], [1], [0, 0, 1, 1], [], []>} : vector<8x32xf32>, vector<32x128xf32>, vector<8x128xf32> -> vector<8x128xf32>
    %cst_64 = arith.constant dense<0.000000e+00> : vector<8x128xf32>
    %346 = tpu.matmul %342, %190, %cst_64 {dimension_numbers = #tpu.dot_dimension_numbers<[1], [0], [0], [1], [0, 0, 1, 1], [], []>} : vector<8x32xf32>, vector<32x128xf32>, vector<8x128xf32> -> vector<8x128xf32>
    %347 = arith.addf %345, %346 : vector<8x128xf32>
    %348 = vector.broadcast %191 : vector<1x128xf32> to vector<8x128xf32>
    %349 = arith.addf %347, %348 : vector<8x128xf32>
    %350 = arith.negf %349 : vector<8x128xf32>
    %351 = math.exp %350 : vector<8x128xf32>
    %cst_65 = arith.constant 1.000000e+00 : f32
    %352 = vector.broadcast %cst_65 : f32 to vector<8x128xf32>
    %353 = arith.addf %352, %351 : vector<8x128xf32>
    %354 = arith.divf %352, %353 : vector<8x128xf32>
    %355 = vector.extract_strided_slice %349 {offsets = [0, 64], sizes = [8, 32], strides = [1, 1]} : vector<8x128xf32> to vector<8x32xf32>
    %356 = math.tanh %355 : vector<8x32xf32>
    %357 = vector.extract_strided_slice %354 {offsets = [0, 0], sizes = [8, 32], strides = [1, 1]} : vector<8x128xf32> to vector<8x32xf32>
    %358 = vector.extract_strided_slice %354 {offsets = [0, 32], sizes = [8, 32], strides = [1, 1]} : vector<8x128xf32> to vector<8x32xf32>
    %359 = vector.extract_strided_slice %354 {offsets = [0, 96], sizes = [8, 32], strides = [1, 1]} : vector<8x128xf32> to vector<8x32xf32>
    %360 = arith.mulf %358, %340 : vector<8x32xf32>
    %361 = arith.mulf %357, %356 : vector<8x32xf32>
    %362 = arith.addf %360, %361 : vector<8x32xf32>
    %363 = math.tanh %362 : vector<8x32xf32>
    %364 = arith.mulf %359, %363 : vector<8x32xf32>
    %365 = tpu.concatenate %210, %232, %254, %276, %298, %320, %342, %364 in 1 : vector<8x32xf32>, vector<8x32xf32>, vector<8x32xf32>, vector<8x32xf32>, vector<8x32xf32>, vector<8x32xf32>, vector<8x32xf32>, vector<8x32xf32> -> vector<8x256xf32>
    %c208 = arith.constant 208 : index
    %c0_66 = arith.constant 0 : index
    %366 = vector.load %arg2[%c208, %c0_66] : memref<592x128xf32, #tpu.memory_space<vmem>>, vector<256x40xf32>
    %c464 = arith.constant 464 : index
    %c0_67 = arith.constant 0 : index
    %367 = vector.load %arg2[%c464, %c0_67] : memref<592x128xf32, #tpu.memory_space<vmem>>, vector<1x40xf32>
    %cst_68 = arith.constant dense<0.000000e+00> : vector<8x40xf32>
    %368 = tpu.matmul %365, %366, %cst_68 {dimension_numbers = #tpu.dot_dimension_numbers<[1], [0], [0], [1], [0, 0, 1, 1], [], []>} : vector<8x256xf32>, vector<256x40xf32>, vector<8x40xf32> -> vector<8x40xf32>
    %369 = vector.broadcast %367 : vector<1x40xf32> to vector<8x40xf32>
    %370 = arith.addf %368, %369 : vector<8x40xf32>
    %c472 = arith.constant 472 : index
    %c0_69 = arith.constant 0 : index
    %371 = vector.load %arg2[%c472, %c0_69] : memref<592x128xf32, #tpu.memory_space<vmem>>, vector<32x1xf32>
    %c504 = arith.constant 504 : index
    %c0_70 = arith.constant 0 : index
    %372 = vector.load %arg2[%c504, %c0_70] : memref<592x128xf32, #tpu.memory_space<vmem>>, vector<1x1xf32>
    %cst_71 = arith.constant dense<0.000000e+00> : vector<8x1xf32>
    %373 = tpu.matmul %187, %371, %cst_71 {dimension_numbers = #tpu.dot_dimension_numbers<[1], [0], [0], [1], [0, 0, 1, 1], [], []>} : vector<8x32xf32>, vector<32x1xf32>, vector<8x1xf32> -> vector<8x1xf32>
    %374 = vector.broadcast %372 : vector<1x1xf32> to vector<8x1xf32>
    %375 = arith.addf %373, %374 : vector<8x1xf32>
    %cst_72 = arith.constant 0.000000e+00 : f32
    %376 = vector.broadcast %cst_72 : f32 to vector<8x1xf32>
    %377 = arith.maximumf %375, %376 : vector<8x1xf32>
    %c512 = arith.constant 512 : index
    %c0_73 = arith.constant 0 : index
    %378 = vector.load %arg2[%c512, %c0_73] : memref<592x128xf32, #tpu.memory_space<vmem>>, vector<32x32xf32>
    %c544 = arith.constant 544 : index
    %c0_74 = arith.constant 0 : index
    %379 = vector.load %arg2[%c544, %c0_74] : memref<592x128xf32, #tpu.memory_space<vmem>>, vector<1x32xf32>
    %c552 = arith.constant 552 : index
    %c0_75 = arith.constant 0 : index
    %380 = vector.load %arg2[%c552, %c0_75] : memref<592x128xf32, #tpu.memory_space<vmem>>, vector<32x2xf32>
    %c584 = arith.constant 584 : index
    %c0_76 = arith.constant 0 : index
    %381 = vector.load %arg2[%c584, %c0_76] : memref<592x128xf32, #tpu.memory_space<vmem>>, vector<1x2xf32>
    %cst_77 = arith.constant dense<0.000000e+00> : vector<8x32xf32>
    %382 = tpu.matmul %188, %378, %cst_77 {dimension_numbers = #tpu.dot_dimension_numbers<[1], [0], [0], [1], [0, 0, 1, 1], [], []>} : vector<8x32xf32>, vector<32x32xf32>, vector<8x32xf32> -> vector<8x32xf32>
    %383 = vector.broadcast %379 : vector<1x32xf32> to vector<8x32xf32>
    %384 = arith.addf %382, %383 : vector<8x32xf32>
    %cst_78 = arith.constant 0.000000e+00 : f32
    %385 = vector.broadcast %cst_78 : f32 to vector<8x32xf32>
    %386 = arith.cmpf ogt, %384, %385 : vector<8x32xf32>
    %cst_79 = arith.constant 0.00999999977 : f32
    %387 = vector.broadcast %cst_79 : f32 to vector<8x32xf32>
    %388 = arith.mulf %387, %384 : vector<8x32xf32>
    %389 = arith.select %386, %384, %388 : vector<8x32xi1>, vector<8x32xf32>
    %cst_80 = arith.constant dense<0.000000e+00> : vector<8x2xf32>
    %390 = tpu.matmul %389, %380, %cst_80 {dimension_numbers = #tpu.dot_dimension_numbers<[1], [0], [0], [1], [0, 0, 1, 1], [], []>} : vector<8x32xf32>, vector<32x2xf32>, vector<8x2xf32> -> vector<8x2xf32>
    %391 = vector.broadcast %381 : vector<1x2xf32> to vector<8x2xf32>
    %392 = arith.addf %390, %391 : vector<8x2xf32>
    %cst_81 = arith.constant dense<0xFF800000> : vector<8xf32>
    %393 = vector.multi_reduction <maximumf>, %392, %cst_81 [1] : vector<8x2xf32> to vector<8xf32>
    %394 = vector.shape_cast %393 : vector<8xf32> to vector<8x1xf32>
    %395 = vector.broadcast %394 : vector<8x1xf32> to vector<8x2xf32>
    %396 = arith.subf %392, %395 : vector<8x2xf32>
    %397 = math.exp %396 : vector<8x2xf32>
    %cst_82 = arith.constant dense<0.000000e+00> : vector<8xf32>
    %398 = vector.multi_reduction <add>, %397, %cst_82 [1] : vector<8x2xf32> to vector<8xf32>
    %399 = vector.shape_cast %398 : vector<8xf32> to vector<8x1xf32>
    %400 = vector.broadcast %399 : vector<8x1xf32> to vector<8x2xf32>
    %401 = arith.divf %397, %400 : vector<8x2xf32>
    %cst_83 = arith.constant 0.000000e+00 : f32
    %402 = vector.broadcast %cst_83 : f32 to vector<8x77xf32>
    %403 = tpu.concatenate %370, %173, %174, %377, %401, %402 in 1 : vector<8x40xf32>, vector<8x4xf32>, vector<8x4xf32>, vector<8x1xf32>, vector<8x2xf32>, vector<8x77xf32> -> vector<8x128xf32>
    %c0_84 = arith.constant 0 : index
    %c0_85 = arith.constant 0 : index
    %404 = vector.load %arg3[%c0_84, %c0_85] : memref<8x128xf32, #tpu.memory_space<vmem>>, vector<8x128xf32>
    tpu.vector_store %arg3[%c0_84, %c0_85], %403 {strides = array<i32>} : memref<8x128xf32, #tpu.memory_space<vmem>>, vector<8x128xf32>,
    return
  }
}

</mosaic_0001>

<llo_original>
// kernel: tpu_custom_call.1
$region0: #{tpu_custom_call.1}
  #allocation0 [shape = 'u32[]', space=smem, size = 0x4, offset = 0x4, fixed_abs, tag = 'smem constant byte address 0x4 - core index']
  #allocation1 [shape = 'u32[144,128]{1,0:T(1,128)}', space=vmem, size = 0x12000, scoped, tag = 'internal scratch']
  %s0 = inlined_call_operand.hbm [shape: f32[8,40], index: 0, kind: input, shape index: {}]
  %s1 = inlined_call_operand.hbm [shape: f32[40,1024], index: 1, kind: input, shape index: {}]
  %s2 = inlined_call_operand.hbm [shape: f32[592,128], index: 2, kind: input, shape index: {}]
  %s3 = inlined_call_operand.hbm [shape: f32[8,128], index: 3, kind: output, shape index: {}]
  %s4 = sld [smem:[#allocation0]]
  $region34: #{tpu_custom_call.1} parent=0
    _
  %s6 = ssub.s32 1, %s4
  %s7 = scalar_select 0, %s6, %s4
  $region1: #{tpu_custom_call.1} parent=0
    #allocation2 [shape = 'u8[4096]{0}', space=vmem, size = 0x1000, scoped, tag = 'input window, operand 0, single buffered']
    #allocation3 [shape = 's32[1]{0}', space=sflag, size = 0x4, scoped, tag = 'scoped memory for tpu_custom_call.1']
    #allocation4 [shape = 's32[1]{0}', space=sflag, size = 0x4, scoped, tag = 'scoped memory for tpu_custom_call.1']
    #allocation5 [shape = 'u8[163840]{0}', space=vmem, size = 0x28000, scoped, tag = 'input window, operand 1, single buffered']
    #allocation6 [shape = 's32[1]{0}', space=sflag, size = 0x4, scoped, tag = 'scoped memory for tpu_custom_call.1']
    #allocation7 [shape = 'u8[303104]{0}', space=vmem, size = 0x4a000, scoped, tag = 'input window, operand 2, single buffered']
    #allocation8 [shape = 'u8[4096]{0}', space=vmem, size = 0x1000, scoped, tag = 'output window, operand 0, single buffered']
    %8 = vsyncpa [#allocation3], 0
    %9 = vsyncpa [#allocation6], 0
    %10 = vsyncpa [#allocation4], 0
    // Predicated region
    $region2: #{tpu_custom_call.1} parent=1 // pred_check
      _
    $region3: #{tpu_custom_call.1} parent=1 // pred_check_branch
      %12 = sbr.rel (0) target = $region5
    $region4: #{tpu_custom_call.1} parent=1 // pred_region
      %s14 = ssub.s32 128, 128
      %15 = vsyncadd [#allocation3], %s14
      %s17 = sshll.u32 [#allocation2], 4
      %s18 = int_to_ptr.vmem [resolvable:$true] %s17
      %20 = dma.hbm_to_vmem [thread:$0]  %s0, 128, %s18, [#allocation3]
    $region5: #{tpu_custom_call.1} parent=1 // pred_fallthru
      _
    // Predicated region
    $region6: #{tpu_custom_call.1} parent=1 // pred_check
      _
    $region7: #{tpu_custom_call.1} parent=1 // pred_check_branch
      %22 = sbr.rel (0) target = $region9
    $region8: #{tpu_custom_call.1} parent=1 // pred_region
      %s24 = ssub.s32 5120, 5120
      %25 = vsyncadd [#allocation6], %s24
      %s26 = sshll.u32 [#allocation5], 4
      %s27 = int_to_ptr.vmem [resolvable:$true] %s26
      %32 = dma.hbm_to_vmem [thread:$0]  %s1, 5120, %s27, [#allocation6], 1024, 1024, 64
    $region9: #{tpu_custom_call.1} parent=1 // pred_fallthru
      _
    // Predicated region
    $region10: #{tpu_custom_call.1} parent=1 // pred_check
      _
    $region11: #{tpu_custom_call.1} parent=1 // pred_check_branch
      %34 = sbr.rel (0) target = $region13
    $region12: #{tpu_custom_call.1} parent=1 // pred_region
      %s36 = ssub.s32 9472, 9472
      %37 = vsyncadd [#allocation6], %s36
      %s38 = sshll.u32 [#allocation7], 4
      %s39 = int_to_ptr.vmem [resolvable:$true] %s38
      %44 = dma.hbm_to_vmem [thread:$0]  %s2, 9472, %s39, [#allocation6], 128, 128, 8
    $region13: #{tpu_custom_call.1} parent=1 // pred_fallthru
      _
    // Predicated region
    $region14: #{tpu_custom_call.1} parent=1 // pred_check
      _
    $region15: #{tpu_custom_call.1} parent=1 // pred_check_branch
      %46 = sbr.rel (0) target = $region17
    $region16: #{tpu_custom_call.1} parent=1 // pred_region
      %47 = dma.done [#allocation3], 128
    $region17: #{tpu_custom_call.1} parent=1 // pred_fallthru
      _
    // Predicated region
    $region18: #{tpu_custom_call.1} parent=1 // pred_check
      _
    $region19: #{tpu_custom_call.1} parent=1 // pred_check_branch
      %49 = sbr.rel (0) target = $region21
    $region20: #{tpu_custom_call.1} parent=1 // pred_region
      %50 = dma.done [#allocation6], 5120
    $region21: #{tpu_custom_call.1} parent=1 // pred_fallthru
      _
    // Predicated region
    $region22: #{tpu_custom_call.1} parent=1 // pred_check
      _
    $region23: #{tpu_custom_call.1} parent=1 // pred_check_branch
      %52 = sbr.rel (0) target = $region25
    $region24: #{tpu_custom_call.1} parent=1 // pred_region
      %53 = dma.done [#allocation6], 9472
    $region25: #{tpu_custom_call.1} parent=1 // pred_fallthru
      _
    %v54 = vld [vmem:[#allocation2] sm:$0xff]
    %v55 = vld [vmem:[#allocation5] sm:$0xff]
    %v56 = vld [vmem:[#allocation5 + $0x8] sm:$0xff]
    %v57 = vld [vmem:[#allocation5 + $0x10] sm:$0xff]
    %v58 = vld [vmem:[#allocation5 + $0x18] sm:$0xff]
    %v59 = vld [vmem:[#allocation5 + $0x20] sm:$0xff]
    %v60 = vld [vmem:[#allocation5 + $0x28] sm:$0xff]
    %v61 = vld [vmem:[#allocation5 + $0x30] sm:$0xff]
    %v62 = vld [vmem:[#allocation5 + $0x38] sm:$0xff]
    %v63 = vld [vmem:[#allocation5 + $0x40] sm:$0xff]
    %v64 = vld [vmem:[#allocation5 + $0x48] sm:$0xff]
    %v65 = vld [vmem:[#allocation5 + $0x50] sm:$0xff]
    %v66 = vld [vmem:[#allocation5 + $0x58] sm:$0xff]
    %v67 = vld [vmem:[#allocation5 + $0x60] sm:$0xff]
    %v68 = vld [vmem:[#allocation5 + $0x68] sm:$0xff]
    %v69 = vld [vmem:[#allocation5 + $0x70] sm:$0xff]
    %v70 = vld [vmem:[#allocation5 + $0x78] sm:$0xff]
    %v71 = vld [vmem:[#allocation5 + $0x80] sm:$0xff]
    %v72 = vld [vmem:[#allocation5 + $0x88] sm:$0xff]
    %v73 = vld [vmem:[#allocation5 + $0x90] sm:$0xff]
    %v74 = vld [vmem:[#allocation5 + $0x98] sm:$0xff]
    %v75 = vld [vmem:[#allocation5 + $0xa0] sm:$0xff]
    %v76 = vld [vmem:[#allocation5 + $0xa8] sm:$0xff]
    %v77 = vld [vmem:[#allocation5 + $0xb0] sm:$0xff]
    %v78 = vld [vmem:[#allocation5 + $0xb8] sm:$0xff]
    %v79 = vld [vmem:[#allocation5 + $0xc0] sm:$0xff]
    %v80 = vld [vmem:[#allocation5 + $0xc8] sm:$0xff]
    %v81 = vld [vmem:[#allocation5 + $0xd0] sm:$0xff]
    %v82 = vld [vmem:[#allocation5 + $0xd8] sm:$0xff]
    %v83 = vld [vmem:[#allocation5 + $0xe0] sm:$0xff]
    %v84 = vld [vmem:[#allocation5 + $0xe8] sm:$0xff]
    %v85 = vld [vmem:[#allocation5 + $0xf0] sm:$0xff]
    %v86 = vld [vmem:[#allocation5 + $0xf8] sm:$0xff]
    %v87 = vld [vmem:[#allocation5 + $0x100] sm:$0xff]
    %v88 = vld [vmem:[#allocation5 + $0x108] sm:$0xff]
    %v89 = vld [vmem:[#allocation5 + $0x110] sm:$0xff]
    %v90 = vld [vmem:[#allocation5 + $0x118] sm:$0xff]
    %v91 = vld [vmem:[#allocation5 + $0x120] sm:$0xff]
    %v92 = vld [vmem:[#allocation5 + $0x128] sm:$0xff]
    %v93 = vld [vmem:[#allocation5 + $0x130] sm:$0xff]
    %v94 = vld [vmem:[#allocation5 + $0x138] sm:$0xff]
    %vm95 = vcmask 326656
    %v97 = vsel %vm95, %v54, 0
    %99 = vmatprep.subr.mxu0 %v56
    %100 = vmatpush1.msra.mxu0 %v55
    %101 = vmatprep.subr.mxu0 %v64
    %102 = vmatpush1.msra.mxu0 %v63
    %103 = vmatprep.subr.mxu0 %v72
    %104 = vmatpush1.msra.mxu0 %v71
    %105 = vmatprep.subr.mxu0 %v80
    %106 = vmatpush1.msra.mxu0 %v79
    %107 = vmatprep.subr.mxu0 %v88
    %108 = vmatpush1.msra.mxu0 %v87
    %109 = vmatprep.subr.mxu0 0.0
    %110 = vmatpush1.msra.mxu0 0.0
    %111 = vmatprep.subr.mxu0 0.0
    %112 = vmatpush1.msra.mxu0 0.0
    %113 = vmatprep.subr.mxu0 0.0
    %114 = vmatpush1.msra.mxu0 0.0
    %115 = vmatprep.subr.mxu0 0.0
    %116 = vmatpush1.msra.mxu0 0.0
    %117 = vmatprep.subr.mxu0 0.0
    %118 = vmatpush1.msra.mxu0 0.0
    %119 = vmatprep.subr.mxu0 0.0
    %120 = vmatpush1.msra.mxu0 0.0
    %121 = vmatprep.subr.mxu0 0.0
    %122 = vmatpush1.msra.mxu0 0.0
    %123 = vmatprep.subr.mxu0 0.0
    %124 = vmatpush1.msra.mxu0 0.0
    %125 = vmatprep.subr.mxu0 0.0
    %126 = vmatpush1.msra.mxu0 0.0
    %127 = vmatprep.subr.mxu0 0.0
    %128 = vmatpush1.msra.mxu0 0.0
    %129 = vmatprep.subr.mxu0 0.0
    %130 = vmatpush1.msra.mxu0 0.0
    %131 = vmatprep.subr.mxu0 0.0
    %132 = vmatpush1.msra.mxu0 0.0
    %133 = vmatprep.subr.mxu0 0.0
    %134 = vmatpush1.msra.mxu0 0.0
    %135 = vmatprep.subr.mxu0 0.0
    %136 = vmatpush1.msra.mxu0 0.0
    %137 = vmatprep.subr.mxu0 0.0
    %138 = vmatpush1.msra.mxu0 0.0
    %139 = vmatprep.subr.mxu0 0.0
    %140 = vmatpush1.msra.mxu0 0.0
    %141 = vmatprep.subr.mxu0 0.0
    %142 = vmatpush1.msra.mxu0 0.0
    %143 = vmatprep.subr.mxu0 0.0
    %144 = vmatpush1.msra.mxu0 0.0
    %145 = vmatprep.subr.mxu0 0.0
    %146 = vmatpush1.msra.mxu0 0.0
    %147 = vmatprep.subr.mxu0 0.0
    %148 = vmatpush1.msra.mxu0 0.0
    %149 = vmatprep.subr.mxu0 0.0
    %150 = vmatpush1.msra.mxu0 0.0
    %151 = vmatprep.subr.mxu0 0.0
    %152 = vmatpush1.msra.mxu0 0.0
    %153 = vmatprep.subr.mxu0 0.0
    %154 = vmatpush1.msra.mxu0 0.0
    %155 = vmatprep.subr.mxu0 0.0
    %156 = vmatpush1.msra.mxu0 0.0
    %157 = vmatprep.subr.mxu0 0.0
    %158 = vmatpush1.msra.mxu0 0.0
    %159 = vmatprep.subr.mxu0 0.0
    %160 = vmatpush1.msra.mxu0 0.0
    %161 = vmatprep.subr.mxu0 0.0
    %162 = vmatpush1.msra.mxu0 0.0
    %163 = vmatprep.mubr.f32.mxu0 0.0
    %164 = vmatmul.mubr.f32.gmra.mrb[0].mxu0 %v97
    %v165 = vpop.f32.mrb[0].mxu0
    %v166 = vadd.f32 0.0, %v165
    %v167 = vpop.f32.mrb[0].mxu0
    %v168 = vadd.f32 0.0, %v167
    %169 = vdwg.mxu0
    %170 = vmatprep.subr.mxu0 %v58
    %171 = vmatpush1.msra.mxu0 %v57
    %172 = vmatprep.subr.mxu0 %v66
    %173 = vmatpush1.msra.mxu0 %v65
    %174 = vmatprep.subr.mxu0 %v74
    %175 = vmatpush1.msra.mxu0 %v73
    %176 = vmatprep.subr.mxu0 %v82
    %177 = vmatpush1.msra.mxu0 %v81
    %178 = vmatprep.subr.mxu0 %v90
    %179 = vmatpush1.msra.mxu0 %v89
    %180 = vmatprep.subr.mxu0 0.0
    %181 = vmatpush1.msra.mxu0 0.0
    %182 = vmatprep.subr.mxu0 0.0
    %183 = vmatpush1.msra.mxu0 0.0
    %184 = vmatprep.subr.mxu0 0.0
    %185 = vmatpush1.msra.mxu0 0.0
    %186 = vmatprep.subr.mxu0 0.0
    %187 = vmatpush1.msra.mxu0 0.0
    %188 = vmatprep.subr.mxu0 0.0
    %189 = vmatpush1.msra.mxu0 0.0
    %190 = vmatprep.subr.mxu0 0.0
    %191 = vmatpush1.msra.mxu0 0.0
    %192 = vmatprep.subr.mxu0 0.0
    %193 = vmatpush1.msra.mxu0 0.0
    %194 = vmatprep.subr.mxu0 0.0
    %195 = vmatpush1.msra.mxu0 0.0
    %196 = vmatprep.subr.mxu0 0.0
    %197 = vmatpush1.msra.mxu0 0.0
    %198 = vmatprep.subr.mxu0 0.0
    %199 = vmatpush1.msra.mxu0 0.0
    %200 = vmatprep.subr.mxu0 0.0
    %201 = vmatpush1.msra.mxu0 0.0
    %202 = vmatprep.subr.mxu0 0.0
    %203 = vmatpush1.msra.mxu0 0.0
    %204 = vmatprep.subr.mxu0 0.0
    %205 = vmatpush1.msra.mxu0 0.0
    %206 = vmatprep.subr.mxu0 0.0
    %207 = vmatpush1.msra.mxu0 0.0
    %208 = vmatprep.subr.mxu0 0.0
    %209 = vmatpush1.msra.mxu0 0.0
    %210 = vmatprep.subr.mxu0 0.0
    %211 = vmatpush1.msra.mxu0 0.0
    %212 = vmatprep.subr.mxu0 0.0
    %213 = vmatpush1.msra.mxu0 0.0
    %214 = vmatprep.subr.mxu0 0.0
    %215 = vmatpush1.msra.mxu0 0.0
    %216 = vmatprep.subr.mxu0 0.0
    %217 = vmatpush1.msra.mxu0 0.0
    %218 = vmatprep.subr.mxu0 0.0
    %219 = vmatpush1.msra.mxu0 0.0
    %220 = vmatprep.subr.mxu0 0.0
    %221 = vmatpush1.msra.mxu0 0.0
    %222 = vmatprep.subr.mxu0 0.0
    %223 = vmatpush1.msra.mxu0 0.0
    %224 = vmatprep.subr.mxu0 0.0
    %225 = vmatpush1.msra.mxu0 0.0
    %226 = vmatprep.subr.mxu0 0.0
    %227 = vmatpush1.msra.mxu0 0.0
    %228 = vmatprep.subr.mxu0 0.0
    %229 = vmatpush1.msra.mxu0 0.0
    %230 = vmatprep.subr.mxu0 0.0
    %231 = vmatpush1.msra.mxu0 0.0
    %232 = vmatprep.subr.mxu0 0.0
    %233 = vmatpush1.msra.mxu0 0.0
    %234 = vmatprep.mubr.f32.mxu0 0.0
    %235 = vmatmul.mubr.f32.gmra.mrb[0].mxu0 %v97
    %v236 = vpop.f32.mrb[0].mxu0
    %v237 = vadd.f32 0.0, %v236
    %v238 = vpop.f32.mrb[0].mxu0
    %v239 = vadd.f32 0.0, %v238
    %240 = vdwg.mxu0
    %241 = vmatprep.subr.mxu0 %v60
    %242 = vmatpush1.msra.mxu0 %v59
    %243 = vmatprep.subr.mxu0 %v68
    %244 = vmatpush1.msra.mxu0 %v67
    %245 = vmatprep.subr.mxu0 %v76
    %246 = vmatpush1.msra.mxu0 %v75
    %247 = vmatprep.subr.mxu0 %v84
    %248 = vmatpush1.msra.mxu0 %v83
    %249 = vmatprep.subr.mxu0 %v92
    %250 = vmatpush1.msra.mxu0 %v91
    %251 = vmatprep.subr.mxu0 0.0
    %252 = vmatpush1.msra.mxu0 0.0
    %253 = vmatprep.subr.mxu0 0.0
    %254 = vmatpush1.msra.mxu0 0.0
    %255 = vmatprep.subr.mxu0 0.0
    %256 = vmatpush1.msra.mxu0 0.0
    %257 = vmatprep.subr.mxu0 0.0
    %258 = vmatpush1.msra.mxu0 0.0
    %259 = vmatprep.subr.mxu0 0.0
    %260 = vmatpush1.msra.mxu0 0.0
    %261 = vmatprep.subr.mxu0 0.0
    %262 = vmatpush1.msra.mxu0 0.0
    %263 = vmatprep.subr.mxu0 0.0
    %264 = vmatpush1.msra.mxu0 0.0
    %265 = vmatprep.subr.mxu0 0.0
    %266 = vmatpush1.msra.mxu0 0.0
    %267 = vmatprep.subr.mxu0 0.0
    %268 = vmatpush1.msra.mxu0 0.0
    %269 = vmatprep.subr.mxu0 0.0
    %270 = vmatpush1.msra.mxu0 0.0
    %271 = vmatprep.subr.mxu0 0.0
    %272 = vmatpush1.msra.mxu0 0.0
    %273 = vmatprep.subr.mxu0 0.0
    %274 = vmatpush1.msra.mxu0 0.0
    %275 = vmatprep.subr.mxu0 0.0
    %276 = vmatpush1.msra.mxu0 0.0
    %277 = vmatprep.subr.mxu0 0.0
    %278 = vmatpush1.msra.mxu0 0.0
    %279 = vmatprep.subr.mxu0 0.0
    %280 = vmatpush1.msra.mxu0 0.0
    %281 = vmatprep.subr.mxu0 0.0
    %282 = vmatpush1.msra.mxu0 0.0
    %283 = vmatprep.subr.mxu0 0.0
    %284 = vmatpush1.msra.mxu0 0.0
    %285 = vmatprep.subr.mxu0 0.0
    %286 = vmatpush1.msra.mxu0 0.0
    %287 = vmatprep.subr.mxu0 0.0
    %288 = vmatpush1.msra.mxu0 0.0
    %289 = vmatprep.subr.mxu0 0.0
    %290 = vmatpush1.msra.mxu0 0.0
    %291 = vmatprep.subr.mxu0 0.0
    %292 = vmatpush1.msra.mxu0 0.0
    %293 = vmatprep.subr.mxu0 0.0
    %294 = vmatpush1.msra.mxu0 0.0
    %295 = vmatprep.subr.mxu0 0.0
    %296 = vmatpush1.msra.mxu0 0.0
    %297 = vmatprep.subr.mxu0 0.0
    %298 = vmatpush1.msra.mxu0 0.0
    %299 = vmatprep.subr.mxu0 0.0
    %300 = vmatpush1.msra.mxu0 0.0
    %301 = vmatprep.subr.mxu0 0.0
    %302 = vmatpush1.msra.mxu0 0.0
    %303 = vmatprep.subr.mxu0 0.0
    %304 = vmatpush1.msra.mxu0 0.0
    %305 = vmatprep.mubr.f32.mxu0 0.0
    %306 = vmatmul.mubr.f32.gmra.mrb[0].mxu0 %v97
    %v307 = vpop.f32.mrb[0].mxu0
    %v308 = vadd.f32 0.0, %v307
    %v309 = vpop.f32.mrb[0].mxu0
    %v310 = vadd.f32 0.0, %v309
    %311 = vdwg.mxu0
    %312 = vmatprep.subr.mxu0 %v62
    %313 = vmatpush1.msra.mxu0 %v61
    %314 = vmatprep.subr.mxu0 %v70
    %315 = vmatpush1.msra.mxu0 %v69
    %316 = vmatprep.subr.mxu0 %v78
    %317 = vmatpush1.msra.mxu0 %v77
    %318 = vmatprep.subr.mxu0 %v86
    %319 = vmatpush1.msra.mxu0 %v85
    %320 = vmatprep.subr.mxu0 %v94
    %321 = vmatpush1.msra.mxu0 %v93
    %322 = vmatprep.subr.mxu0 0.0
    %323 = vmatpush1.msra.mxu0 0.0
    %324 = vmatprep.subr.mxu0 0.0
    %325 = vmatpush1.msra.mxu0 0.0
    %326 = vmatprep.subr.mxu0 0.0
    %327 = vmatpush1.msra.mxu0 0.0
    %328 = vmatprep.subr.mxu0 0.0
    %329 = vmatpush1.msra.mxu0 0.0
    %330 = vmatprep.subr.mxu0 0.0
    %331 = vmatpush1.msra.mxu0 0.0
    %332 = vmatprep.subr.mxu0 0.0
    %333 = vmatpush1.msra.mxu0 0.0
    %334 = vmatprep.subr.mxu0 0.0
    %335 = vmatpush1.msra.mxu0 0.0
    %336 = vmatprep.subr.mxu0 0.0
    %337 = vmatpush1.msra.mxu0 0.0
    %338 = vmatprep.subr.mxu0 0.0
    %339 = vmatpush1.msra.mxu0 0.0
    %340 = vmatprep.subr.mxu0 0.0
    %341 = vmatpush1.msra.mxu0 0.0
    %342 = vmatprep.subr.mxu0 0.0
    %343 = vmatpush1.msra.mxu0 0.0
    %344 = vmatprep.subr.mxu0 0.0
    %345 = vmatpush1.msra.mxu0 0.0
    %346 = vmatprep.subr.mxu0 0.0
    %347 = vmatpush1.msra.mxu0 0.0
    %348 = vmatprep.subr.mxu0 0.0
    %349 = vmatpush1.msra.mxu0 0.0
    %350 = vmatprep.subr.mxu0 0.0
    %351 = vmatpush1.msra.mxu0 0.0
    %352 = vmatprep.subr.mxu0 0.0
    %353 = vmatpush1.msra.mxu0 0.0
    %354 = vmatprep.subr.mxu0 0.0
    %355 = vmatpush1.msra.mxu0 0.0
    %356 = vmatprep.subr.mxu0 0.0
    %357 = vmatpush1.msra.mxu0 0.0
    %358 = vmatprep.subr.mxu0 0.0
    %359 = vmatpush1.msra.mxu0 0.0
    %360 = vmatprep.subr.mxu0 0.0
    %361 = vmatpush1.msra.mxu0 0.0
    %362 = vmatprep.subr.mxu0 0.0
    %363 = vmatpush1.msra.mxu0 0.0
    %364 = vmatprep.subr.mxu0 0.0
    %365 = vmatpush1.msra.mxu0 0.0
    %366 = vmatprep.subr.mxu0 0.0
    %367 = vmatpush1.msra.mxu0 0.0
    %368 = vmatprep.subr.mxu0 0.0
    %369 = vmatpush1.msra.mxu0 0.0
    %370 = vmatprep.subr.mxu0 0.0
    %371 = vmatpush1.msra.mxu0 0.0
    %372 = vmatprep.subr.mxu0 0.0
    %373 = vmatpush1.msra.mxu0 0.0
    %374 = vmatprep.subr.mxu0 0.0
    %375 = vmatpush1.msra.mxu0 0.0
    %376 = vmatprep.mubr.f32.mxu0 0.0
    %377 = vmatmul.mubr.f32.gmra.mrb[0].mxu0 %v97
    %v378 = vpop.f32.mrb[0].mxu0
    %v379 = vadd.f32 0.0, %v378
    %v380 = vpop.f32.mrb[0].mxu0
    %v381 = vadd.f32 0.0, %v380
    %382 = vdwg.mxu0
    %v383 = vld [vmem:[#allocation7] sm:$0xff]
    %v384 = vld [vmem:[#allocation7 + $0x8] sm:$0xff]
    %v385 = vld [vmem:[#allocation7 + $0x10] sm:$0xff]
    %v386 = vld [vmem:[#allocation7 + $0x18] sm:$0xff]
    %v387 = vld [vmem:[#allocation7 + $0x20] sm:$0x1]
    %v388 = vlaneseq
    %v389 = vshrl.u32 %v388, 7
    %v390 = vsub.s32 0, %v389
    %v391 = vrot.slane %v387, %v390
    %v392 = vadd.f32 %v166, %v391
    %vm393 = vcmask 261120
    %v395 = vsel %vm393, 0.0, 0
    %397 = vmatprep.subr.mxu0 0.0
    %398 = vmatpush1.msra.mxu0 %v383
    %399 = vmatprep.subr.mxu0 0.0
    %400 = vmatpush1.msra.mxu0 %v384
    %401 = vmatprep.subr.mxu0 0.0
    %402 = vmatpush1.msra.mxu0 %v385
    %403 = vmatprep.subr.mxu0 0.0
    %404 = vmatpush1.msra.mxu0 %v386
    %405 = vmatprep.subr.mxu0 0.0
    %406 = vmatpush1.msra.mxu0 0.0
    %407 = vmatprep.subr.mxu0 0.0
    %408 = vmatpush1.msra.mxu0 0.0
    %409 = vmatprep.subr.mxu0 0.0
    %410 = vmatpush1.msra.mxu0 0.0
    %411 = vmatprep.subr.mxu0 0.0
    %412 = vmatpush1.msra.mxu0 0.0
    %413 = vmatprep.subr.mxu0 0.0
    %414 = vmatpush1.msra.mxu0 0.0
    %415 = vmatprep.subr.mxu0 0.0
    %416 = vmatpush1.msra.mxu0 0.0
    %417 = vmatprep.subr.mxu0 0.0
    %418 = vmatpush1.msra.mxu0 0.0
    %419 = vmatprep.subr.mxu0 0.0
    %420 = vmatpush1.msra.mxu0 0.0
    %421 = vmatprep.subr.mxu0 0.0
    %422 = vmatpush1.msra.mxu0 0.0
    %423 = vmatprep.subr.mxu0 0.0
    %424 = vmatpush1.msra.mxu0 0.0
    %425 = vmatprep.subr.mxu0 0.0
    %426 = vmatpush1.msra.mxu0 0.0
    %427 = vmatprep.subr.mxu0 0.0
    %428 = vmatpush1.msra.mxu0 0.0
    %429 = vmatprep.subr.mxu0 0.0
    %430 = vmatpush1.msra.mxu0 0.0
    %431 = vmatprep.subr.mxu0 0.0
    %432 = vmatpush1.msra.mxu0 0.0
    %433 = vmatprep.subr.mxu0 0.0
    %434 = vmatpush1.msra.mxu0 0.0
    %435 = vmatprep.subr.mxu0 0.0
    %436 = vmatpush1.msra.mxu0 0.0
    %437 = vmatprep.subr.mxu0 0.0
    %438 = vmatpush1.msra.mxu0 0.0
    %439 = vmatprep.subr.mxu0 0.0
    %440 = vmatpush1.msra.mxu0 0.0
    %441 = vmatprep.subr.mxu0 0.0
    %442 = vmatpush1.msra.mxu0 0.0
    %443 = vmatprep.subr.mxu0 0.0
    %444 = vmatpush1.msra.mxu0 0.0
    %445 = vmatprep.subr.mxu0 0.0
    %446 = vmatpush1.msra.mxu0 0.0
    %447 = vmatprep.subr.mxu0 0.0
    %448 = vmatpush1.msra.mxu0 0.0
    %449 = vmatprep.subr.mxu0 0.0
    %450 = vmatpush1.msra.mxu0 0.0
    %451 = vmatprep.subr.mxu0 0.0
    %452 = vmatpush1.msra.mxu0 0.0
    %453 = vmatprep.subr.mxu0 0.0
    %454 = vmatpush1.msra.mxu0 0.0
    %455 = vmatprep.subr.mxu0 0.0
    %456 = vmatpush1.msra.mxu0 0.0
    %457 = vmatprep.subr.mxu0 0.0
    %458 = vmatpush1.msra.mxu0 0.0
    %459 = vmatprep.subr.mxu0 0.0
    %460 = vmatpush1.msra.mxu0 0.0
    %461 = vmatprep.mubr.f32.mxu0 0.0
    %462 = vmatmul.mubr.f32.gmra.mrb[0].mxu0 %v395
    %v463 = vpop.f32.mrb[0].mxu0
    %v464 = vadd.f32 0.0, %v463
    %v465 = vpop.f32.mrb[0].mxu0
    %466 = vdwg.mxu0
    %v467 = vadd.f32 %v392, %v464
    %v468 = vxor.u32 %v467, 2147483648
    %v469 = vmul.f32 %v468, 1.442695
    %v470 = vpow.pop %v469
    %v471 = vadd.f32 %v470, 1.0
    %v472 = vrcp.pop %v471
    %v473 = vmul.f32 1.0, %v472
    %v474 = vtanh.pop %v467
    %v475 = vmul.f32 %v473, 0.0
    %477 = vrot.lane.b32.xlu0 %v474, 64
    %v478 = vpop.permute.xlu0 %477
    %v480 = vmul.f32 %v473, %v478
    %482 = vrot.lane.b32.xlu0 %v480, 32
    %v483 = vpop.permute.xlu0 %482
    %v485 = vadd.f32 %v475, %v483
    %v486 = vtanh.pop %v485
    %488 = vrot.lane.b32.xlu0 %v486, 64
    %v489 = vpop.permute.xlu0 %488
    %v491 = vmul.f32 %v473, %v489
    %v492 = vadd.f32 %v168, %v391
    %494 = vrot.lane.b32.xlu0 %v491, 32
    %v495 = vpop.permute.xlu0 %494
    %v496 = vsel %vm393, %v495, 0
    %498 = vmatprep.subr.mxu0 0.0
    %499 = vmatpush1.msra.mxu0 %v383
    %500 = vmatprep.subr.mxu0 0.0
    %501 = vmatpush1.msra.mxu0 %v384
    %502 = vmatprep.subr.mxu0 0.0
    %503 = vmatpush1.msra.mxu0 %v385
    %504 = vmatprep.subr.mxu0 0.0
    %505 = vmatpush1.msra.mxu0 %v386
    %506 = vmatprep.subr.mxu0 0.0
    %507 = vmatpush1.msra.mxu0 0.0
    %508 = vmatprep.subr.mxu0 0.0
    %509 = vmatpush1.msra.mxu0 0.0
    %510 = vmatprep.subr.mxu0 0.0
    %511 = vmatpush1.msra.mxu0 0.0
    %512 = vmatprep.subr.mxu0 0.0
    %513 = vmatpush1.msra.mxu0 0.0
    %514 = vmatprep.subr.mxu0 0.0
    %515 = vmatpush1.msra.mxu0 0.0
    %516 = vmatprep.subr.mxu0 0.0
    %517 = vmatpush1.msra.mxu0 0.0
    %518 = vmatprep.subr.mxu0 0.0
    %519 = vmatpush1.msra.mxu0 0.0
    %520 = vmatprep.subr.mxu0 0.0
    %521 = vmatpush1.msra.mxu0 0.0
    %522 = vmatprep.subr.mxu0 0.0
    %523 = vmatpush1.msra.mxu0 0.0
    %524 = vmatprep.subr.mxu0 0.0
    %525 = vmatpush1.msra.mxu0 0.0
    %526 = vmatprep.subr.mxu0 0.0
    %527 = vmatpush1.msra.mxu0 0.0
    %528 = vmatprep.subr.mxu0 0.0
    %529 = vmatpush1.msra.mxu0 0.0
    %530 = vmatprep.subr.mxu0 0.0
    %531 = vmatpush1.msra.mxu0 0.0
    %532 = vmatprep.subr.mxu0 0.0
    %533 = vmatpush1.msra.mxu0 0.0
    %534 = vmatprep.subr.mxu0 0.0
    %535 = vmatpush1.msra.mxu0 0.0
    %536 = vmatprep.subr.mxu0 0.0
    %537 = vmatpush1.msra.mxu0 0.0
    %538 = vmatprep.subr.mxu0 0.0
    %539 = vmatpush1.msra.mxu0 0.0
    %540 = vmatprep.subr.mxu0 0.0
    %541 = vmatpush1.msra.mxu0 0.0
    %542 = vmatprep.subr.mxu0 0.0
    %543 = vmatpush1.msra.mxu0 0.0
    %544 = vmatprep.subr.mxu0 0.0
    %545 = vmatpush1.msra.mxu0 0.0
    %546 = vmatprep.subr.mxu0 0.0
    %547 = vmatpush1.msra.mxu0 0.0
    %548 = vmatprep.subr.mxu0 0.0
    %549 = vmatpush1.msra.mxu0 0.0
    %550 = vmatprep.subr.mxu0 0.0
    %551 = vmatpush1.msra.mxu0 0.0
    %552 = vmatprep.subr.mxu0 0.0
    %553 = vmatpush1.msra.mxu0 0.0
    %554 = vmatprep.subr.mxu0 0.0
    %555 = vmatpush1.msra.mxu0 0.0
    %556 = vmatprep.subr.mxu0 0.0
    %557 = vmatpush1.msra.mxu0 0.0
    %558 = vmatprep.subr.mxu0 0.0
    %559 = vmatpush1.msra.mxu0 0.0
    %560 = vmatprep.subr.mxu0 0.0
    %561 = vmatpush1.msra.mxu0 0.0
    %562 = vmatprep.mubr.f32.mxu0 0.0
    %563 = vmatmul.mubr.f32.gmra.mrb[0].mxu0 %v496
    %v564 = vpop.f32.mrb[0].mxu0
    %v565 = vadd.f32 0.0, %v564
    %v566 = vpop.f32.mrb[0].mxu0
    %567 = vdwg.mxu0
    %v568 = vadd.f32 %v492, %v565
    %v569 = vxor.u32 %v568, 2147483648
    %v570 = vmul.f32 %v569, 1.442695
    %v571 = vpow.pop %v570
    %v572 = vadd.f32 %v571, 1.0
    %v573 = vrcp.pop %v572
    %v574 = vmul.f32 1.0, %v573
    %v575 = vtanh.pop %v568
    %v576 = vmul.f32 %v574, %v485
    %578 = vrot.lane.b32.xlu0 %v575, 64
    %v579 = vpop.permute.xlu0 %578
    %v581 = vmul.f32 %v574, %v579
    %583 = vrot.lane.b32.xlu0 %v581, 32
    %v584 = vpop.permute.xlu0 %583
    %v586 = vadd.f32 %v576, %v584
    %v587 = vtanh.pop %v586
    %589 = vrot.lane.b32.xlu0 %v587, 64
    %v590 = vpop.permute.xlu0 %589
    %v592 = vmul.f32 %v574, %v590
    %v593 = vadd.f32 %v237, %v391
    %595 = vrot.lane.b32.xlu0 %v592, 32
    %v596 = vpop.permute.xlu0 %595
    %v597 = vsel %vm393, %v596, 0
    %599 = vmatprep.subr.mxu0 0.0
    %600 = vmatpush1.msra.mxu0 %v383
    %601 = vmatprep.subr.mxu0 0.0
    %602 = vmatpush1.msra.mxu0 %v384
    %603 = vmatprep.subr.mxu0 0.0
    %604 = vmatpush1.msra.mxu0 %v385
    %605 = vmatprep.subr.mxu0 0.0
    %606 = vmatpush1.msra.mxu0 %v386
    %607 = vmatprep.subr.mxu0 0.0
    %608 = vmatpush1.msra.mxu0 0.0
    %609 = vmatprep.subr.mxu0 0.0
    %610 = vmatpush1.msra.mxu0 0.0
    %611 = vmatprep.subr.mxu0 0.0
    %612 = vmatpush1.msra.mxu0 0.0
    %613 = vmatprep.subr.mxu0 0.0
    %614 = vmatpush1.msra.mxu0 0.0
    %615 = vmatprep.subr.mxu0 0.0
    %616 = vmatpush1.msra.mxu0 0.0
    %617 = vmatprep.subr.mxu0 0.0
    %618 = vmatpush1.msra.mxu0 0.0
    %619 = vmatprep.subr.mxu0 0.0
    %620 = vmatpush1.msra.mxu0 0.0
    %621 = vmatprep.subr.mxu0 0.0
    %622 = vmatpush1.msra.mxu0 0.0
    %623 = vmatprep.subr.mxu0 0.0
    %624 = vmatpush1.msra.mxu0 0.0
    %625 = vmatprep.subr.mxu0 0.0
    %626 = vmatpush1.msra.mxu0 0.0
    %627 = vmatprep.subr.mxu0 0.0
    %628 = vmatpush1.msra.mxu0 0.0
    %629 = vmatprep.subr.mxu0 0.0
    %630 = vmatpush1.msra.mxu0 0.0
    %631 = vmatprep.subr.mxu0 0.0
    %632 = vmatpush1.msra.mxu0 0.0
    %633 = vmatprep.subr.mxu0 0.0
    %634 = vmatpush1.msra.mxu0 0.0
    %635 = vmatprep.subr.mxu0 0.0
    %636 = vmatpush1.msra.mxu0 0.0
    %637 = vmatprep.subr.mxu0 0.0
    %638 = vmatpush1.msra.mxu0 0.0
    %639 = vmatprep.subr.mxu0 0.0
    %640 = vmatpush1.msra.mxu0 0.0
    %641 = vmatprep.subr.mxu0 0.0
    %642 = vmatpush1.msra.mxu0 0.0
    %643 = vmatprep.subr.mxu0 0.0
    %644 = vmatpush1.msra.mxu0 0.0
    %645 = vmatprep.subr.mxu0 0.0
    %646 = vmatpush1.msra.mxu0 0.0
    %647 = vmatprep.subr.mxu0 0.0
    %648 = vmatpush1.msra.mxu0 0.0
    %649 = vmatprep.subr.mxu0 0.0
    %650 = vmatpush1.msra.mxu0 0.0
    %651 = vmatprep.subr.mxu0 0.0
    %652 = vmatpush1.msra.mxu0 0.0
    %653 = vmatprep.subr.mxu0 0.0
    %654 = vmatpush1.msra.mxu0 0.0
    %655 = vmatprep.subr.mxu0 0.0
    %656 = vmatpush1.msra.mxu0 0.0
    %657 = vmatprep.subr.mxu0 0.0
    %658 = vmatpush1.msra.mxu0 0.0
    %659 = vmatprep.subr.mxu0 0.0
    %660 = vmatpush1.msra.mxu0 0.0
    %661 = vmatprep.subr.mxu0 0.0
    %662 = vmatpush1.msra.mxu0 0.0
    %663 = vmatprep.mubr.f32.mxu0 0.0
    %664 = vmatmul.mubr.f32.gmra.mrb[0].mxu0 %v597
    %v665 = vpop.f32.mrb[0].mxu0
    %v666 = vadd.f32 0.0, %v665
    %v667 = vpop.f32.mrb[0].mxu0
    %668 = vdwg.mxu0
    %v669 = vadd.f32 %v593, %v666
    %v670 = vxor.u32 %v669, 2147483648
    %v671 = vmul.f32 %v670, 1.442695
    %v672 = vpow.pop %v671
    %v673 = vadd.f32 %v672, 1.0
    %v674 = vrcp.pop %v673
    %v675 = vmul.f32 1.0, %v674
    %v676 = vtanh.pop %v669
    %v677 = vmul.f32 %v675, %v586
    %679 = vrot.lane.b32.xlu0 %v676, 64
    %v680 = vpop.permute.xlu0 %679
    %v682 = vmul.f32 %v675, %v680
    %684 = vrot.lane.b32.xlu0 %v682, 32
    %v685 = vpop.permute.xlu0 %684
    %v687 = vadd.f32 %v677, %v685
    %v688 = vtanh.pop %v687
    %690 = vrot.lane.b32.xlu0 %v688, 64
    %v691 = vpop.permute.xlu0 %690
    %v693 = vmul.f32 %v675, %v691
    %v694 = vadd.f32 %v239, %v391
    %696 = vrot.lane.b32.xlu0 %v693, 32
    %v697 = vpop.permute.xlu0 %696
    %v698 = vsel %vm393, %v697, 0
    %700 = vmatprep.subr.mxu0 0.0
    %701 = vmatpush1.msra.mxu0 %v383
    %702 = vmatprep.subr.mxu0 0.0
    %703 = vmatpush1.msra.mxu0 %v384
    %704 = vmatprep.subr.mxu0 0.0
    %705 = vmatpush1.msra.mxu0 %v385
    %706 = vmatprep.subr.mxu0 0.0
    %707 = vmatpush1.msra.mxu0 %v386
    %708 = vmatprep.subr.mxu0 0.0
    %709 = vmatpush1.msra.mxu0 0.0
    %710 = vmatprep.subr.mxu0 0.0
    %711 = vmatpush1.msra.mxu0 0.0
    %712 = vmatprep.subr.mxu0 0.0
    %713 = vmatpush1.msra.mxu0 0.0
    %714 = vmatprep.subr.mxu0 0.0
    %715 = vmatpush1.msra.mxu0 0.0
    %716 = vmatprep.subr.mxu0 0.0
    %717 = vmatpush1.msra.mxu0 0.0
    %718 = vmatprep.subr.mxu0 0.0
    %719 = vmatpush1.msra.mxu0 0.0
    %720 = vmatprep.subr.mxu0 0.0
    %721 = vmatpush1.msra.mxu0 0.0
    %722 = vmatprep.subr.mxu0 0.0
    %723 = vmatpush1.msra.mxu0 0.0
    %724 = vmatprep.subr.mxu0 0.0
    %725 = vmatpush1.msra.mxu0 0.0
    %726 = vmatprep.subr.mxu0 0.0
    %727 = vmatpush1.msra.mxu0 0.0
    %728 = vmatprep.subr.mxu0 0.0
    %729 = vmatpush1.msra.mxu0 0.0
    %730 = vmatprep.subr.mxu0 0.0
    %731 = vmatpush1.msra.mxu0 0.0
    %732 = vmatprep.subr.mxu0 0.0
    %733 = vmatpush1.msra.mxu0 0.0
    %734 = vmatprep.subr.mxu0 0.0
    %735 = vmatpush1.msra.mxu0 0.0
    %736 = vmatprep.subr.mxu0 0.0
    %737 = vmatpush1.msra.mxu0 0.0
    %738 = vmatprep.subr.mxu0 0.0
    %739 = vmatpush1.msra.mxu0 0.0
    %740 = vmatprep.subr.mxu0 0.0
    %741 = vmatpush1.msra.mxu0 0.0
    %742 = vmatprep.subr.mxu0 0.0
    %743 = vmatpush1.msra.mxu0 0.0
    %744 = vmatprep.subr.mxu0 0.0
    %745 = vmatpush1.msra.mxu0 0.0
    %746 = vmatprep.subr.mxu0 0.0
    %747 = vmatpush1.msra.mxu0 0.0
    %748 = vmatprep.subr.mxu0 0.0
    %749 = vmatpush1.msra.mxu0 0.0
    %750 = vmatprep.subr.mxu0 0.0
    %751 = vmatpush1.msra.mxu0 0.0
    %752 = vmatprep.subr.mxu0 0.0
    %753 = vmatpush1.msra.mxu0 0.0
    %754 = vmatprep.subr.mxu0 0.0
    %755 = vmatpush1.msra.mxu0 0.0
    %756 = vmatprep.subr.mxu0 0.0
    %757 = vmatpush1.msra.mxu0 0.0
    %758 = vmatprep.subr.mxu0 0.0
    %759 = vmatpush1.msra.mxu0 0.0
    %760 = vmatprep.subr.mxu0 0.0
    %761 = vmatpush1.msra.mxu0 0.0
    %762 = vmatprep.subr.mxu0 0.0
    %763 = vmatpush1.msra.mxu0 0.0
    %764 = vmatprep.mubr.f32.mxu0 0.0
    %765 = vmatmul.mubr.f32.gmra.mrb[0].mxu0 %v698
    %v766 = vpop.f32.mrb[0].mxu0
    %v767 = vadd.f32 0.0, %v766
    %v768 = vpop.f32.mrb[0].mxu0
    %769 = vdwg.mxu0
    %v770 = vadd.f32 %v694, %v767
    %v771 = vxor.u32 %v770, 2147483648
    %v772 = vmul.f32 %v771, 1.442695
    %v773 = vpow.pop %v772
    %v774 = vadd.f32 %v773, 1.0
    %v775 = vrcp.pop %v774
    %v776 = vmul.f32 1.0, %v775
    %v777 = vtanh.pop %v770
    %v778 = vmul.f32 %v776, %v687
    %780 = vrot.lane.b32.xlu0 %v777, 64
    %v781 = vpop.permute.xlu0 %780
    %v783 = vmul.f32 %v776, %v781
    %785 = vrot.lane.b32.xlu0 %v783, 32
    %v786 = vpop.permute.xlu0 %785
    %v788 = vadd.f32 %v778, %v786
    %v789 = vtanh.pop %v788
    %791 = vrot.lane.b32.xlu0 %v789, 64
    %v792 = vpop.permute.xlu0 %791
    %v794 = vmul.f32 %v776, %v792
    %v795 = vadd.f32 %v308, %v391
    %797 = vrot.lane.b32.xlu0 %v794, 32
    %v798 = vpop.permute.xlu0 %797
    %v799 = vsel %vm393, %v798, 0
    %801 = vmatprep.subr.mxu0 0.0
    %802 = vmatpush1.msra.mxu0 %v383
    %803 = vmatprep.subr.mxu0 0.0
    %804 = vmatpush1.msra.mxu0 %v384
    %805 = vmatprep.subr.mxu0 0.0
    %806 = vmatpush1.msra.mxu0 %v385
    %807 = vmatprep.subr.mxu0 0.0
    %808 = vmatpush1.msra.mxu0 %v386
    %809 = vmatprep.subr.mxu0 0.0
    %810 = vmatpush1.msra.mxu0 0.0
    %811 = vmatprep.subr.mxu0 0.0
    %812 = vmatpush1.msra.mxu0 0.0
    %813 = vmatprep.subr.mxu0 0.0
    %814 = vmatpush1.msra.mxu0 0.0
    %815 = vmatprep.subr.mxu0 0.0
    %816 = vmatpush1.msra.mxu0 0.0
    %817 = vmatprep.subr.mxu0 0.0
    %818 = vmatpush1.msra.mxu0 0.0
    %819 = vmatprep.subr.mxu0 0.0
    %820 = vmatpush1.msra.mxu0 0.0
    %821 = vmatprep.subr.mxu0 0.0
    %822 = vmatpush1.msra.mxu0 0.0
    %823 = vmatprep.subr.mxu0 0.0
    %824 = vmatpush1.msra.mxu0 0.0
    %825 = vmatprep.subr.mxu0 0.0
    %826 = vmatpush1.msra.mxu0 0.0
    %827 = vmatprep.subr.mxu0 0.0
    %828 = vmatpush1.msra.mxu0 0.0
    %829 = vmatprep.subr.mxu0 0.0
    %830 = vmatpush1.msra.mxu0 0.0
    %831 = vmatprep.subr.mxu0 0.0
    %832 = vmatpush1.msra.mxu0 0.0
    %833 = vmatprep.subr.mxu0 0.0
    %834 = vmatpush1.msra.mxu0 0.0
    %835 = vmatprep.subr.mxu0 0.0
    %836 = vmatpush1.msra.mxu0 0.0
    %837 = vmatprep.subr.mxu0 0.0
    %838 = vmatpush1.msra.mxu0 0.0
    %839 = vmatprep.subr.mxu0 0.0
    %840 = vmatpush1.msra.mxu0 0.0
    %841 = vmatprep.subr.mxu0 0.0
    %842 = vmatpush1.msra.mxu0 0.0
    %843 = vmatprep.subr.mxu0 0.0
    %844 = vmatpush1.msra.mxu0 0.0
    %845 = vmatprep.subr.mxu0 0.0
    %846 = vmatpush1.msra.mxu0 0.0
    %847 = vmatprep.subr.mxu0 0.0
    %848 = vmatpush1.msra.mxu0 0.0
    %849 = vmatprep.subr.mxu0 0.0
    %850 = vmatpush1.msra.mxu0 0.0
    %851 = vmatprep.subr.mxu0 0.0
    %852 = vmatpush1.msra.mxu0 0.0
    %853 = vmatprep.subr.mxu0 0.0
    %854 = vmatpush1.msra.mxu0 0.0
    %855 = vmatprep.subr.mxu0 0.0
    %856 = vmatpush1.msra.mxu0 0.0
    %857 = vmatprep.subr.mxu0 0.0
    %858 = vmatpush1.msra.mxu0 0.0
    %859 = vmatprep.subr.mxu0 0.0
    %860 = vmatpush1.msra.mxu0 0.0
    %861 = vmatprep.subr.mxu0 0.0
    %862 = vmatpush1.msra.mxu0 0.0
    %863 = vmatprep.subr.mxu0 0.0
    %864 = vmatpush1.msra.mxu0 0.0
    %865 = vmatprep.mubr.f32.mxu0 0.0
    %866 = vmatmul.mubr.f32.gmra.mrb[0].mxu0 %v799
    %v867 = vpop.f32.mrb[0].mxu0
    %v868 = vadd.f32 0.0, %v867
    %v869 = vpop.f32.mrb[0].mxu0
    %870 = vdwg.mxu0
    %v871 = vadd.f32 %v795, %v868
    %v872 = vxor.u32 %v871, 2147483648
    %v873 = vmul.f32 %v872, 1.442695
    %v874 = vpow.pop %v873
    %v875 = vadd.f32 %v874, 1.0
    %v876 = vrcp.pop %v875
    %v877 = vmul.f32 1.0, %v876
    %v878 = vtanh.pop %v871
    %v879 = vmul.f32 %v877, %v788
    %881 = vrot.lane.b32.xlu0 %v878, 64
    %v882 = vpop.permute.xlu0 %881
    %v884 = vmul.f32 %v877, %v882
    %886 = vrot.lane.b32.xlu0 %v884, 32
    %v887 = vpop.permute.xlu0 %886
    %v889 = vadd.f32 %v879, %v887
    %v890 = vtanh.pop %v889
    %892 = vrot.lane.b32.xlu0 %v890, 64
    %v893 = vpop.permute.xlu0 %892
    %v895 = vmul.f32 %v877, %v893
    %v896 = vadd.f32 %v310, %v391
    %898 = vrot.lane.b32.xlu0 %v895, 32
    %v899 = vpop.permute.xlu0 %898
    %v900 = vsel %vm393, %v899, 0
    %902 = vmatprep.subr.mxu0 0.0
    %903 = vmatpush1.msra.mxu0 %v383
    %904 = vmatprep.subr.mxu0 0.0
    %905 = vmatpush1.msra.mxu0 %v384
    %906 = vmatprep.subr.mxu0 0.0
    %907 = vmatpush1.msra.mxu0 %v385
    %908 = vmatprep.subr.mxu0 0.0
    %909 = vmatpush1.msra.mxu0 %v386
    %910 = vmatprep.subr.mxu0 0.0
    %911 = vmatpush1.msra.mxu0 0.0
    %912 = vmatprep.subr.mxu0 0.0
    %913 = vmatpush1.msra.mxu0 0.0
    %914 = vmatprep.subr.mxu0 0.0
    %915 = vmatpush1.msra.mxu0 0.0
    %916 = vmatprep.subr.mxu0 0.0
    %917 = vmatpush1.msra.mxu0 0.0
    %918 = vmatprep.subr.mxu0 0.0
    %919 = vmatpush1.msra.mxu0 0.0
    %920 = vmatprep.subr.mxu0 0.0
    %921 = vmatpush1.msra.mxu0 0.0
    %922 = vmatprep.subr.mxu0 0.0
    %923 = vmatpush1.msra.mxu0 0.0
    %924 = vmatprep.subr.mxu0 0.0
    %925 = vmatpush1.msra.mxu0 0.0
    %926 = vmatprep.subr.mxu0 0.0
    %927 = vmatpush1.msra.mxu0 0.0
    %928 = vmatprep.subr.mxu0 0.0
    %929 = vmatpush1.msra.mxu0 0.0
    %930 = vmatprep.subr.mxu0 0.0
    %931 = vmatpush1.msra.mxu0 0.0
    %932 = vmatprep.subr.mxu0 0.0
    %933 = vmatpush1.msra.mxu0 0.0
    %934 = vmatprep.subr.mxu0 0.0
    %935 = vmatpush1.msra.mxu0 0.0
    %936 = vmatprep.subr.mxu0 0.0
    %937 = vmatpush1.msra.mxu0 0.0
    %938 = vmatprep.subr.mxu0 0.0
    %939 = vmatpush1.msra.mxu0 0.0
    %940 = vmatprep.subr.mxu0 0.0
    %941 = vmatpush1.msra.mxu0 0.0
    %942 = vmatprep.subr.mxu0 0.0
    %943 = vmatpush1.msra.mxu0 0.0
    %944 = vmatprep.subr.mxu0 0.0
    %945 = vmatpush1.msra.mxu0 0.0
    %946 = vmatprep.subr.mxu0 0.0
    %947 = vmatpush1.msra.mxu0 0.0
    %948 = vmatprep.subr.mxu0 0.0
    %949 = vmatpush1.msra.mxu0 0.0
    %950 = vmatprep.subr.mxu0 0.0
    %951 = vmatpush1.msra.mxu0 0.0
    %952 = vmatprep.subr.mxu0 0.0
    %953 = vmatpush1.msra.mxu0 0.0
    %954 = vmatprep.subr.mxu0 0.0
    %955 = vmatpush1.msra.mxu0 0.0
    %956 = vmatprep.subr.mxu0 0.0
    %957 = vmatpush1.msra.mxu0 0.0
    %958 = vmatprep.subr.mxu0 0.0
    %959 = vmatpush1.msra.mxu0 0.0
    %960 = vmatprep.subr.mxu0 0.0
    %961 = vmatpush1.msra.mxu0 0.0
    %962 = vmatprep.subr.mxu0 0.0
    %963 = vmatpush1.msra.mxu0 0.0
    %964 = vmatprep.subr.mxu0 0.0
    %965 = vmatpush1.msra.mxu0 0.0
    %966 = vmatprep.mubr.f32.mxu0 0.0
    %967 = vmatmul.mubr.f32.gmra.mrb[0].mxu0 %v900
    %v968 = vpop.f32.mrb[0].mxu0
    %v969 = vadd.f32 0.0, %v968
    %v970 = vpop.f32.mrb[0].mxu0
    %971 = vdwg.mxu0
    %v972 = vadd.f32 %v896, %v969
    %v973 = vxor.u32 %v972, 2147483648
    %v974 = vmul.f32 %v973, 1.442695
    %v975 = vpow.pop %v974
    %v976 = vadd.f32 %v975, 1.0
    %v977 = vrcp.pop %v976
    %v978 = vmul.f32 1.0, %v977
    %v979 = vtanh.pop %v972
    %v980 = vmul.f32 %v978, %v889
    %982 = vrot.lane.b32.xlu0 %v979, 64
    %v983 = vpop.permute.xlu0 %982
    %v985 = vmul.f32 %v978, %v983
    %987 = vrot.lane.b32.xlu0 %v985, 32
    %v988 = vpop.permute.xlu0 %987
    %v990 = vadd.f32 %v980, %v988
    %v991 = vtanh.pop %v990
    %993 = vrot.lane.b32.xlu0 %v991, 64
    %v994 = vpop.permute.xlu0 %993
    %v996 = vmul.f32 %v978, %v994
    %v997 = vadd.f32 %v379, %v391
    %999 = vrot.lane.b32.xlu0 %v996, 32
    %v1000 = vpop.permute.xlu0 %999
    %v1001 = vsel %vm393, %v1000, 0
    %1003 = vmatprep.subr.mxu0 0.0
    %1004 = vmatpush1.msra.mxu0 %v383
    %1005 = vmatprep.subr.mxu0 0.0
    %1006 = vmatpush1.msra.mxu0 %v384
    %1007 = vmatprep.subr.mxu0 0.0
    %1008 = vmatpush1.msra.mxu0 %v385
    %1009 = vmatprep.subr.mxu0 0.0
    %1010 = vmatpush1.msra.mxu0 %v386
    %1011 = vmatprep.subr.mxu0 0.0
    %1012 = vmatpush1.msra.mxu0 0.0
    %1013 = vmatprep.subr.mxu0 0.0
    %1014 = vmatpush1.msra.mxu0 0.0
    %1015 = vmatprep.subr.mxu0 0.0
    %1016 = vmatpush1.msra.mxu0 0.0
    %1017 = vmatprep.subr.mxu0 0.0
    %1018 = vmatpush1.msra.mxu0 0.0
    %1019 = vmatprep.subr.mxu0 0.0
    %1020 = vmatpush1.msra.mxu0 0.0
    %1021 = vmatprep.subr.mxu0 0.0
    %1022 = vmatpush1.msra.mxu0 0.0
    %1023 = vmatprep.subr.mxu0 0.0
    %1024 = vmatpush1.msra.mxu0 0.0
    %1025 = vmatprep.subr.mxu0 0.0
    %1026 = vmatpush1.msra.mxu0 0.0
    %1027 = vmatprep.subr.mxu0 0.0
    %1028 = vmatpush1.msra.mxu0 0.0
    %1029 = vmatprep.subr.mxu0 0.0
    %1030 = vmatpush1.msra.mxu0 0.0
    %1031 = vmatprep.subr.mxu0 0.0
    %1032 = vmatpush1.msra.mxu0 0.0
    %1033 = vmatprep.subr.mxu0 0.0
    %1034 = vmatpush1.msra.mxu0 0.0
    %1035 = vmatprep.subr.mxu0 0.0
    %1036 = vmatpush1.msra.mxu0 0.0
    %1037 = vmatprep.subr.mxu0 0.0
    %1038 = vmatpush1.msra.mxu0 0.0
    %1039 = vmatprep.subr.mxu0 0.0
    %1040 = vmatpush1.msra.mxu0 0.0
    %1041 = vmatprep.subr.mxu0 0.0
    %1042 = vmatpush1.msra.mxu0 0.0
    %1043 = vmatprep.subr.mxu0 0.0
    %1044 = vmatpush1.msra.mxu0 0.0
    %1045 = vmatprep.subr.mxu0 0.0
    %1046 = vmatpush1.msra.mxu0 0.0
    %1047 = vmatprep.subr.mxu0 0.0
    %1048 = vmatpush1.msra.mxu0 0.0
    %1049 = vmatprep.subr.mxu0 0.0
    %1050 = vmatpush1.msra.mxu0 0.0
    %1051 = vmatprep.subr.mxu0 0.0
    %1052 = vmatpush1.msra.mxu0 0.0
    %1053 = vmatprep.subr.mxu0 0.0
    %1054 = vmatpush1.msra.mxu0 0.0
    %1055 = vmatprep.subr.mxu0 0.0
    %1056 = vmatpush1.msra.mxu0 0.0
    %1057 = vmatprep.subr.mxu0 0.0
    %1058 = vmatpush1.msra.mxu0 0.0
    %1059 = vmatprep.subr.mxu0 0.0
    %1060 = vmatpush1.msra.mxu0 0.0
    %1061 = vmatprep.subr.mxu0 0.0
    %1062 = vmatpush1.msra.mxu0 0.0
    %1063 = vmatprep.subr.mxu0 0.0
    %1064 = vmatpush1.msra.mxu0 0.0
    %1065 = vmatprep.subr.mxu0 0.0
    %1066 = vmatpush1.msra.mxu0 0.0
    %1067 = vmatprep.mubr.f32.mxu0 0.0
    %1068 = vmatmul.mubr.f32.gmra.mrb[0].mxu0 %v1001
    %v1069 = vpop.f32.mrb[0].mxu0
    %v1070 = vadd.f32 0.0, %v1069
    %v1071 = vpop.f32.mrb[0].mxu0
    %1072 = vdwg.mxu0
    %v1073 = vadd.f32 %v997, %v1070
    %v1074 = vxor.u32 %v1073, 2147483648
    %v1075 = vmul.f32 %v1074, 1.442695
    %v1076 = vpow.pop %v1075
    %v1077 = vadd.f32 %v1076, 1.0
    %v1078 = vrcp.pop %v1077
    %v1079 = vmul.f32 1.0, %v1078
    %v1080 = vtanh.pop %v1073
    %v1081 = vmul.f32 %v1079, %v990
    %1083 = vrot.lane.b32.xlu0 %v1080, 64
    %v1084 = vpop.permute.xlu0 %1083
    %v1086 = vmul.f32 %v1079, %v1084
    %1088 = vrot.lane.b32.xlu0 %v1086, 32
    %v1089 = vpop.permute.xlu0 %1088
    %v1091 = vadd.f32 %v1081, %v1089
    %v1092 = vtanh.pop %v1091
    %1094 = vrot.lane.b32.xlu0 %v1092, 64
    %v1095 = vpop.permute.xlu0 %1094
    %v1097 = vmul.f32 %v1079, %v1095
    %v1098 = vadd.f32 %v381, %v391
    %1100 = vrot.lane.b32.xlu0 %v1097, 32
    %v1101 = vpop.permute.xlu0 %1100
    %v1102 = vsel %vm393, %v1101, 0
    %1104 = vmatprep.subr.mxu0 0.0
    %1105 = vmatpush1.msra.mxu0 %v383
    %1106 = vmatprep.subr.mxu0 0.0
    %1107 = vmatpush1.msra.mxu0 %v384
    %1108 = vmatprep.subr.mxu0 0.0
    %1109 = vmatpush1.msra.mxu0 %v385
    %1110 = vmatprep.subr.mxu0 0.0
    %1111 = vmatpush1.msra.mxu0 %v386
    %1112 = vmatprep.subr.mxu0 0.0
    %1113 = vmatpush1.msra.mxu0 0.0
    %1114 = vmatprep.subr.mxu0 0.0
    %1115 = vmatpush1.msra.mxu0 0.0
    %1116 = vmatprep.subr.mxu0 0.0
    %1117 = vmatpush1.msra.mxu0 0.0
    %1118 = vmatprep.subr.mxu0 0.0
    %1119 = vmatpush1.msra.mxu0 0.0
    %1120 = vmatprep.subr.mxu0 0.0
    %1121 = vmatpush1.msra.mxu0 0.0
    %1122 = vmatprep.subr.mxu0 0.0
    %1123 = vmatpush1.msra.mxu0 0.0
    %1124 = vmatprep.subr.mxu0 0.0
    %1125 = vmatpush1.msra.mxu0 0.0
    %1126 = vmatprep.subr.mxu0 0.0
    %1127 = vmatpush1.msra.mxu0 0.0
    %1128 = vmatprep.subr.mxu0 0.0
    %1129 = vmatpush1.msra.mxu0 0.0
    %1130 = vmatprep.subr.mxu0 0.0
    %1131 = vmatpush1.msra.mxu0 0.0
    %1132 = vmatprep.subr.mxu0 0.0
    %1133 = vmatpush1.msra.mxu0 0.0
    %1134 = vmatprep.subr.mxu0 0.0
    %1135 = vmatpush1.msra.mxu0 0.0
    %1136 = vmatprep.subr.mxu0 0.0
    %1137 = vmatpush1.msra.mxu0 0.0
    %1138 = vmatprep.subr.mxu0 0.0
    %1139 = vmatpush1.msra.mxu0 0.0
    %1140 = vmatprep.subr.mxu0 0.0
    %1141 = vmatpush1.msra.mxu0 0.0
    %1142 = vmatprep.subr.mxu0 0.0
    %1143 = vmatpush1.msra.mxu0 0.0
    %1144 = vmatprep.subr.mxu0 0.0
    %1145 = vmatpush1.msra.mxu0 0.0
    %1146 = vmatprep.subr.mxu0 0.0
    %1147 = vmatpush1.msra.mxu0 0.0
    %1148 = vmatprep.subr.mxu0 0.0
    %1149 = vmatpush1.msra.mxu0 0.0
    %1150 = vmatprep.subr.mxu0 0.0
    %1151 = vmatpush1.msra.mxu0 0.0
    %1152 = vmatprep.subr.mxu0 0.0
    %1153 = vmatpush1.msra.mxu0 0.0
    %1154 = vmatprep.subr.mxu0 0.0
    %1155 = vmatpush1.msra.mxu0 0.0
    %1156 = vmatprep.subr.mxu0 0.0
    %1157 = vmatpush1.msra.mxu0 0.0
    %1158 = vmatprep.subr.mxu0 0.0
    %1159 = vmatpush1.msra.mxu0 0.0
    %1160 = vmatprep.subr.mxu0 0.0
    %1161 = vmatpush1.msra.mxu0 0.0
    %1162 = vmatprep.subr.mxu0 0.0
    %1163 = vmatpush1.msra.mxu0 0.0
    %1164 = vmatprep.subr.mxu0 0.0
    %1165 = vmatpush1.msra.mxu0 0.0
    %1166 = vmatprep.subr.mxu0 0.0
    %1167 = vmatpush1.msra.mxu0 0.0
    %1168 = vmatprep.mubr.f32.mxu0 0.0
    %1169 = vmatmul.mubr.f32.gmra.mrb[0].mxu0 %v1102
    %v1170 = vpop.f32.mrb[0].mxu0
    %v1171 = vadd.f32 0.0, %v1170
    %v1172 = vpop.f32.mrb[0].mxu0
    %1173 = vdwg.mxu0
    %v1174 = vadd.f32 %v1098, %v1171
    %v1175 = vxor.u32 %v1174, 2147483648
    %v1176 = vmul.f32 %v1175, 1.442695
    %v1177 = vpow.pop %v1176
    %v1178 = vadd.f32 %v1177, 1.0
    %v1179 = vrcp.pop %v1178
    %v1180 = vmul.f32 1.0, %v1179
    %v1181 = vtanh.pop %v1174
    %v1182 = vmul.f32 %v1180, %v1091
    %1184 = vrot.lane.b32.xlu0 %v1181, 64
    %v1185 = vpop.permute.xlu0 %1184
    %v1187 = vmul.f32 %v1180, %v1185
    %1189 = vrot.lane.b32.xlu0 %v1187, 32
    %v1190 = vpop.permute.xlu0 %1189
    %v1192 = vadd.f32 %v1182, %v1190
    %v1193 = vtanh.pop %v1192
    %1195 = vrot.lane.b32.xlu0 %v1193, 64
    %v1196 = vpop.permute.xlu0 %1195
    %v1198 = vmul.f32 %v1180, %v1196
    %1200 = vrot.lane.b32.xlu0 %v1198, 32
    %v1201 = vpop.permute.xlu0 %1200
    %v1203 = vsel %vm393, %v1201, %v1192
    %v1204 = vld [vmem:[#allocation7 + $0x28] sm:$0xff]
    %v1205 = vld [vmem:[#allocation7 + $0x30] sm:$0xff]
    %v1206 = vld [vmem:[#allocation7 + $0x38] sm:$0xff]
    %v1207 = vld [vmem:[#allocation7 + $0x40] sm:$0xff]
    %v1208 = vld [vmem:[#allocation7 + $0x48] sm:$0xff]
    %v1209 = vld [vmem:[#allocation7 + $0x50] sm:$0xff]
    %v1210 = vld [vmem:[#allocation7 + $0x58] sm:$0xff]
    %v1211 = vld [vmem:[#allocation7 + $0x60] sm:$0xff]
    %v1212 = vld [vmem:[#allocation7 + $0x68] sm:$0x1]
    %v1213 = vlaneseq
    %v1214 = vshrl.u32 %v1213, 7
    %v1215 = vsub.s32 0, %v1214
    %v1216 = vrot.slane %v1212, %v1215
    %vm1217 = vcmask 523264
    %v1219 = vsel %vm1217, %v1203, 0
    %1221 = vmatprep.subr.mxu0 0.0
    %1222 = vmatpush1.msra.mxu0 %v1204
    %1223 = vmatprep.subr.mxu0 0.0
    %1224 = vmatpush1.msra.mxu0 %v1205
    %1225 = vmatprep.subr.mxu0 0.0
    %1226 = vmatpush1.msra.mxu0 %v1206
    %1227 = vmatprep.subr.mxu0 0.0
    %1228 = vmatpush1.msra.mxu0 %v1207
    %1229 = vmatprep.subr.mxu0 0.0
    %1230 = vmatpush1.msra.mxu0 %v1208
    %1231 = vmatprep.subr.mxu0 0.0
    %1232 = vmatpush1.msra.mxu0 %v1209
    %1233 = vmatprep.subr.mxu0 0.0
    %1234 = vmatpush1.msra.mxu0 %v1210
    %1235 = vmatprep.subr.mxu0 0.0
    %1236 = vmatpush1.msra.mxu0 %v1211
    %1237 = vmatprep.subr.mxu0 0.0
    %1238 = vmatpush1.msra.mxu0 0.0
    %1239 = vmatprep.subr.mxu0 0.0
    %1240 = vmatpush1.msra.mxu0 0.0
    %1241 = vmatprep.subr.mxu0 0.0
    %1242 = vmatpush1.msra.mxu0 0.0
    %1243 = vmatprep.subr.mxu0 0.0
    %1244 = vmatpush1.msra.mxu0 0.0
    %1245 = vmatprep.subr.mxu0 0.0
    %1246 = vmatpush1.msra.mxu0 0.0
    %1247 = vmatprep.subr.mxu0 0.0
    %1248 = vmatpush1.msra.mxu0 0.0
    %1249 = vmatprep.subr.mxu0 0.0
    %1250 = vmatpush1.msra.mxu0 0.0
    %1251 = vmatprep.subr.mxu0 0.0
    %1252 = vmatpush1.msra.mxu0 0.0
    %1253 = vmatprep.subr.mxu0 0.0
    %1254 = vmatpush1.msra.mxu0 0.0
    %1255 = vmatprep.subr.mxu0 0.0
    %1256 = vmatpush1.msra.mxu0 0.0
    %1257 = vmatprep.subr.mxu0 0.0
    %1258 = vmatpush1.msra.mxu0 0.0
    %1259 = vmatprep.subr.mxu0 0.0
    %1260 = vmatpush1.msra.mxu0 0.0
    %1261 = vmatprep.subr.mxu0 0.0
    %1262 = vmatpush1.msra.mxu0 0.0
    %1263 = vmatprep.subr.mxu0 0.0
    %1264 = vmatpush1.msra.mxu0 0.0
    %1265 = vmatprep.subr.mxu0 0.0
    %1266 = vmatpush1.msra.mxu0 0.0
    %1267 = vmatprep.subr.mxu0 0.0
    %1268 = vmatpush1.msra.mxu0 0.0
    %1269 = vmatprep.subr.mxu0 0.0
    %1270 = vmatpush1.msra.mxu0 0.0
    %1271 = vmatprep.subr.mxu0 0.0
    %1272 = vmatpush1.msra.mxu0 0.0
    %1273 = vmatprep.subr.mxu0 0.0
    %1274 = vmatpush1.msra.mxu0 0.0
    %1275 = vmatprep.subr.mxu0 0.0
    %1276 = vmatpush1.msra.mxu0 0.0
    %1277 = vmatprep.subr.mxu0 0.0
    %1278 = vmatpush1.msra.mxu0 0.0
    %1279 = vmatprep.subr.mxu0 0.0
    %1280 = vmatpush1.msra.mxu0 0.0
    %1281 = vmatprep.subr.mxu0 0.0
    %1282 = vmatpush1.msra.mxu0 0.0
    %1283 = vmatprep.subr.mxu0 0.0
    %1284 = vmatpush1.msra.mxu0 0.0
    %1285 = vmatprep.mubr.f32.mxu0 0.0
    %1286 = vmatmul.mubr.f32.gmra.mrb[0].mxu0 %v1219
    %v1287 = vpop.f32.mrb[0].mxu0
    %v1288 = vadd.f32 %v1216, %v1287
    %v1289 = vpop.f32.mrb[0].mxu0
    %1290 = vdwg.mxu0
    %v1291 = vld [vmem:[#allocation7 + $0x70] sm:$0xf]
    %v1292 = vld [vmem:[#allocation7 + $0x78] sm:$0x1]
    %v1293 = vlaneseq
    %v1294 = vshrl.u32 %v1293, 7
    %v1295 = vsub.s32 0, %v1294
    %v1296 = vrot.slane %v1292, %v1295
    %vm1297 = vcmask 31744
    %v1299 = vsel %vm1297, %v1288, 0
    %vm1301 = vcmask 1043456
    %v1303 = vsel %vm1301, %v1291, 0
    %1305 = vmatprep.subr.mxu0 0.0
    %1306 = vmatpush1.msra.mxu0 %v1303
    %1307 = vmatprep.subr.mxu0 0.0
    %1308 = vmatpush1.msra.mxu0 0.0
    %1309 = vmatprep.subr.mxu0 0.0
    %1310 = vmatpush1.msra.mxu0 0.0
    %1311 = vmatprep.subr.mxu0 0.0
    %1312 = vmatpush1.msra.mxu0 0.0
    %1313 = vmatprep.subr.mxu0 0.0
    %1314 = vmatpush1.msra.mxu0 0.0
    %1315 = vmatprep.subr.mxu0 0.0
    %1316 = vmatpush1.msra.mxu0 0.0
    %1317 = vmatprep.subr.mxu0 0.0
    %1318 = vmatpush1.msra.mxu0 0.0
    %1319 = vmatprep.subr.mxu0 0.0
    %1320 = vmatpush1.msra.mxu0 0.0
    %1321 = vmatprep.subr.mxu0 0.0
    %1322 = vmatpush1.msra.mxu0 0.0
    %1323 = vmatprep.subr.mxu0 0.0
    %1324 = vmatpush1.msra.mxu0 0.0
    %1325 = vmatprep.subr.mxu0 0.0
    %1326 = vmatpush1.msra.mxu0 0.0
    %1327 = vmatprep.subr.mxu0 0.0
    %1328 = vmatpush1.msra.mxu0 0.0
    %1329 = vmatprep.subr.mxu0 0.0
    %1330 = vmatpush1.msra.mxu0 0.0
    %1331 = vmatprep.subr.mxu0 0.0
    %1332 = vmatpush1.msra.mxu0 0.0
    %1333 = vmatprep.subr.mxu0 0.0
    %1334 = vmatpush1.msra.mxu0 0.0
    %1335 = vmatprep.subr.mxu0 0.0
    %1336 = vmatpush1.msra.mxu0 0.0
    %1337 = vmatprep.subr.mxu0 0.0
    %1338 = vmatpush1.msra.mxu0 0.0
    %1339 = vmatprep.subr.mxu0 0.0
    %1340 = vmatpush1.msra.mxu0 0.0
    %1341 = vmatprep.subr.mxu0 0.0
    %1342 = vmatpush1.msra.mxu0 0.0
    %1343 = vmatprep.subr.mxu0 0.0
    %1344 = vmatpush1.msra.mxu0 0.0
    %1345 = vmatprep.subr.mxu0 0.0
    %1346 = vmatpush1.msra.mxu0 0.0
    %1347 = vmatprep.subr.mxu0 0.0
    %1348 = vmatpush1.msra.mxu0 0.0
    %1349 = vmatprep.subr.mxu0 0.0
    %1350 = vmatpush1.msra.mxu0 0.0
    %1351 = vmatprep.subr.mxu0 0.0
    %1352 = vmatpush1.msra.mxu0 0.0
    %1353 = vmatprep.subr.mxu0 0.0
    %1354 = vmatpush1.msra.mxu0 0.0
    %1355 = vmatprep.subr.mxu0 0.0
    %1356 = vmatpush1.msra.mxu0 0.0
    %1357 = vmatprep.subr.mxu0 0.0
    %1358 = vmatpush1.msra.mxu0 0.0
    %1359 = vmatprep.subr.mxu0 0.0
    %1360 = vmatpush1.msra.mxu0 0.0
    %1361 = vmatprep.subr.mxu0 0.0
    %1362 = vmatpush1.msra.mxu0 0.0
    %1363 = vmatprep.subr.mxu0 0.0
    %1364 = vmatpush1.msra.mxu0 0.0
    %1365 = vmatprep.subr.mxu0 0.0
    %1366 = vmatpush1.msra.mxu0 0.0
    %1367 = vmatprep.subr.mxu0 0.0
    %1368 = vmatpush1.msra.mxu0 0.0
    %1369 = vmatprep.mubr.f32.mxu0 0.0
    %1370 = vmatmul.mubr.f32.gmra.mrb[0].mxu0 %v1299
    %v1371 = vpop.f32.mrb[0].mxu0
    %v1372 = vadd.f32 %v1296, %v1371
    %v1373 = vpop.f32.mrb[0].mxu0
    %1374 = vdwg.mxu0
    %vm1375 = vcmp.gt.f32.partialorder %v1372, 0.0
    %v1376 = vmul.f32 %v1372, 0.01
    %v1377 = vsel %vm1375, %v1372, %v1376
    %v1378 = vld [vmem:[#allocation7 + $0x80] sm:$0xff]
    %v1379 = vld [vmem:[#allocation7 + $0x88] sm:$0xff]
    %v1380 = vld [vmem:[#allocation7 + $0x90] sm:$0xff]
    %v1381 = vld [vmem:[#allocation7 + $0x98] sm:$0xff]
    %v1382 = vld [vmem:[#allocation7 + $0xa0] sm:$0xff]
    %v1383 = vld [vmem:[#allocation7 + $0xa8] sm:$0xff]
    %v1384 = vld [vmem:[#allocation7 + $0xb0] sm:$0xff]
    %v1385 = vld [vmem:[#allocation7 + $0xb8] sm:$0xff]
    %v1386 = vld [vmem:[#allocation7 + $0xc0] sm:$0x1]
    %v1387 = vld [vmem:[#allocation7 + $0xc8] sm:$0x1]
    %v1389 = vsel %vm393, %v1377, 0
    %1391 = vmatprep.subr.mxu0 0.0
    %1392 = vmatpush1.msra.mxu0 %v1382
    %1393 = vmatprep.subr.mxu0 0.0
    %1394 = vmatpush1.msra.mxu0 %v1383
    %1395 = vmatprep.subr.mxu0 0.0
    %1396 = vmatpush1.msra.mxu0 %v1384
    %1397 = vmatprep.subr.mxu0 0.0
    %1398 = vmatpush1.msra.mxu0 %v1385
    %1399 = vmatprep.subr.mxu0 0.0
    %1400 = vmatpush1.msra.mxu0 0.0
    %1401 = vmatprep.subr.mxu0 0.0
    %1402 = vmatpush1.msra.mxu0 0.0
    %1403 = vmatprep.subr.mxu0 0.0
    %1404 = vmatpush1.msra.mxu0 0.0
    %1405 = vmatprep.subr.mxu0 0.0
    %1406 = vmatpush1.msra.mxu0 0.0
    %1407 = vmatprep.subr.mxu0 0.0
    %1408 = vmatpush1.msra.mxu0 0.0
    %1409 = vmatprep.subr.mxu0 0.0
    %1410 = vmatpush1.msra.mxu0 0.0
    %1411 = vmatprep.subr.mxu0 0.0
    %1412 = vmatpush1.msra.mxu0 0.0
    %1413 = vmatprep.subr.mxu0 0.0
    %1414 = vmatpush1.msra.mxu0 0.0
    %1415 = vmatprep.subr.mxu0 0.0
    %1416 = vmatpush1.msra.mxu0 0.0
    %1417 = vmatprep.subr.mxu0 0.0
    %1418 = vmatpush1.msra.mxu0 0.0
    %1419 = vmatprep.subr.mxu0 0.0
    %1420 = vmatpush1.msra.mxu0 0.0
    %1421 = vmatprep.subr.mxu0 0.0
    %1422 = vmatpush1.msra.mxu0 0.0
    %1423 = vmatprep.subr.mxu0 0.0
    %1424 = vmatpush1.msra.mxu0 0.0
    %1425 = vmatprep.subr.mxu0 0.0
    %1426 = vmatpush1.msra.mxu0 0.0
    %1427 = vmatprep.subr.mxu0 0.0
    %1428 = vmatpush1.msra.mxu0 0.0
    %1429 = vmatprep.subr.mxu0 0.0
    %1430 = vmatpush1.msra.mxu0 0.0
    %1431 = vmatprep.subr.mxu0 0.0
    %1432 = vmatpush1.msra.mxu0 0.0
    %1433 = vmatprep.subr.mxu0 0.0
    %1434 = vmatpush1.msra.mxu0 0.0
    %1435 = vmatprep.subr.mxu0 0.0
    %1436 = vmatpush1.msra.mxu0 0.0
    %1437 = vmatprep.subr.mxu0 0.0
    %1438 = vmatpush1.msra.mxu0 0.0
    %1439 = vmatprep.subr.mxu0 0.0
    %1440 = vmatpush1.msra.mxu0 0.0
    %1441 = vmatprep.subr.mxu0 0.0
    %1442 = vmatpush1.msra.mxu0 0.0
    %1443 = vmatprep.subr.mxu0 0.0
    %1444 = vmatpush1.msra.mxu0 0.0
    %1445 = vmatprep.subr.mxu0 0.0
    %1446 = vmatpush1.msra.mxu0 0.0
    %1447 = vmatprep.subr.mxu0 0.0
    %1448 = vmatpush1.msra.mxu0 0.0
    %1449 = vmatprep.subr.mxu0 0.0
    %1450 = vmatpush1.msra.mxu0 0.0
    %1451 = vmatprep.subr.mxu0 0.0
    %1452 = vmatpush1.msra.mxu0 0.0
    %1453 = vmatprep.subr.mxu0 0.0
    %1454 = vmatpush1.msra.mxu0 0.0
    %1455 = vmatprep.mubr.f32.mxu0 0.0
    %1456 = vmatmul.mubr.f32.gmra.mrb[0].mxu0 %v1389
    %v1457 = vpop.f32.mrb[0].mxu0
    %v1458 = vadd.f32 0.0, %v1457
    %v1459 = vpop.f32.mrb[0].mxu0
    %1460 = vdwg.mxu0
    %v1461 = vlaneseq
    %v1462 = vshrl.u32 %v1461, 7
    %v1463 = vsub.s32 0, %v1462
    %v1464 = vrot.slane %v1387, %v1463
    %v1465 = vadd.f32 %v1464, %v1458
    %v1466 = vxor.u32 %v1465, 2147483648
    %v1467 = vmul.f32 %v1466, 1.442695
    %v1468 = vpow.pop %v1467
    %v1469 = vadd.f32 %v1468, 1.0
    %v1470 = vrcp.pop %v1469
    %v1471 = vmul.f32 1.0, %v1470
    %v1472 = vtanh.pop %v1465
    %v1473 = vmul.f32 %v1471, %v1377
    %1475 = vrot.lane.b32.xlu0 %v1472, 64
    %v1476 = vpop.permute.xlu0 %1475
    %v1478 = vmul.f32 %v1471, %v1476
    %1480 = vrot.lane.b32.xlu0 %v1478, 32
    %v1481 = vpop.permute.xlu0 %1480
    %v1483 = vadd.f32 %v1473, %v1481
    %v1484 = vtanh.pop %v1483
    %1486 = vrot.lane.b32.xlu0 %v1484, 64
    %v1487 = vpop.permute.xlu0 %1486
    %v1489 = vmul.f32 %v1471, %v1487
    %v1490 = vmax.f32 %v1489, 0.0
    %1492 = vrot.lane.b32.xlu0 %v1489, 32
    %v1493 = vpop.permute.xlu0 %1492
    %v1494 = vsel %vm393, %v1493, 0
    %1496 = vmatprep.subr.mxu0 0.0
    %1497 = vmatpush1.msra.mxu0 %v1382
    %1498 = vmatprep.subr.mxu0 0.0
    %1499 = vmatpush1.msra.mxu0 %v1383
    %1500 = vmatprep.subr.mxu0 0.0
    %1501 = vmatpush1.msra.mxu0 %v1384
    %1502 = vmatprep.subr.mxu0 0.0
    %1503 = vmatpush1.msra.mxu0 %v1385
    %1504 = vmatprep.subr.mxu0 0.0
    %1505 = vmatpush1.msra.mxu0 0.0
    %1506 = vmatprep.subr.mxu0 0.0
    %1507 = vmatpush1.msra.mxu0 0.0
    %1508 = vmatprep.subr.mxu0 0.0
    %1509 = vmatpush1.msra.mxu0 0.0
    %1510 = vmatprep.subr.mxu0 0.0
    %1511 = vmatpush1.msra.mxu0 0.0
    %1512 = vmatprep.subr.mxu0 0.0
    %1513 = vmatpush1.msra.mxu0 0.0
    %1514 = vmatprep.subr.mxu0 0.0
    %1515 = vmatpush1.msra.mxu0 0.0
    %1516 = vmatprep.subr.mxu0 0.0
    %1517 = vmatpush1.msra.mxu0 0.0
    %1518 = vmatprep.subr.mxu0 0.0
    %1519 = vmatpush1.msra.mxu0 0.0
    %1520 = vmatprep.subr.mxu0 0.0
    %1521 = vmatpush1.msra.mxu0 0.0
    %1522 = vmatprep.subr.mxu0 0.0
    %1523 = vmatpush1.msra.mxu0 0.0
    %1524 = vmatprep.subr.mxu0 0.0
    %1525 = vmatpush1.msra.mxu0 0.0
    %1526 = vmatprep.subr.mxu0 0.0
    %1527 = vmatpush1.msra.mxu0 0.0
    %1528 = vmatprep.subr.mxu0 0.0
    %1529 = vmatpush1.msra.mxu0 0.0
    %1530 = vmatprep.subr.mxu0 0.0
    %1531 = vmatpush1.msra.mxu0 0.0
    %1532 = vmatprep.subr.mxu0 0.0
    %1533 = vmatpush1.msra.mxu0 0.0
    %1534 = vmatprep.subr.mxu0 0.0
    %1535 = vmatpush1.msra.mxu0 0.0
    %1536 = vmatprep.subr.mxu0 0.0
    %1537 = vmatpush1.msra.mxu0 0.0
    %1538 = vmatprep.subr.mxu0 0.0
    %1539 = vmatpush1.msra.mxu0 0.0
    %1540 = vmatprep.subr.mxu0 0.0
    %1541 = vmatpush1.msra.mxu0 0.0
    %1542 = vmatprep.subr.mxu0 0.0
    %1543 = vmatpush1.msra.mxu0 0.0
    %1544 = vmatprep.subr.mxu0 0.0
    %1545 = vmatpush1.msra.mxu0 0.0
    %1546 = vmatprep.subr.mxu0 0.0
    %1547 = vmatpush1.msra.mxu0 0.0
    %1548 = vmatprep.subr.mxu0 0.0
    %1549 = vmatpush1.msra.mxu0 0.0
    %1550 = vmatprep.subr.mxu0 0.0
    %1551 = vmatpush1.msra.mxu0 0.0
    %1552 = vmatprep.subr.mxu0 0.0
    %1553 = vmatpush1.msra.mxu0 0.0
    %1554 = vmatprep.subr.mxu0 0.0
    %1555 = vmatpush1.msra.mxu0 0.0
    %1556 = vmatprep.subr.mxu0 0.0
    %1557 = vmatpush1.msra.mxu0 0.0
    %1558 = vmatprep.subr.mxu0 0.0
    %1559 = vmatpush1.msra.mxu0 0.0
    %1560 = vmatprep.mubr.f32.mxu0 0.0
    %1561 = vmatmul.mubr.f32.gmra.mrb[0].mxu0 %v1494
    %v1562 = vpop.f32.mrb[0].mxu0
    %v1563 = vadd.f32 0.0, %v1562
    %v1564 = vpop.f32.mrb[0].mxu0
    %1565 = vdwg.mxu0
    %1567 = vrot.lane.b32.xlu0 %v1490, 32
    %v1568 = vpop.permute.xlu0 %1567
    %v1569 = vsel %vm393, %v1568, 0
    %1571 = vmatprep.subr.mxu0 0.0
    %1572 = vmatpush1.msra.mxu0 %v1378
    %1573 = vmatprep.subr.mxu0 0.0
    %1574 = vmatpush1.msra.mxu0 %v1379
    %1575 = vmatprep.subr.mxu0 0.0
    %1576 = vmatpush1.msra.mxu0 %v1380
    %1577 = vmatprep.subr.mxu0 0.0
    %1578 = vmatpush1.msra.mxu0 %v1381
    %1579 = vmatprep.subr.mxu0 0.0
    %1580 = vmatpush1.msra.mxu0 0.0
    %1581 = vmatprep.subr.mxu0 0.0
    %1582 = vmatpush1.msra.mxu0 0.0
    %1583 = vmatprep.subr.mxu0 0.0
    %1584 = vmatpush1.msra.mxu0 0.0
    %1585 = vmatprep.subr.mxu0 0.0
    %1586 = vmatpush1.msra.mxu0 0.0
    %1587 = vmatprep.subr.mxu0 0.0
    %1588 = vmatpush1.msra.mxu0 0.0
    %1589 = vmatprep.subr.mxu0 0.0
    %1590 = vmatpush1.msra.mxu0 0.0
    %1591 = vmatprep.subr.mxu0 0.0
    %1592 = vmatpush1.msra.mxu0 0.0
    %1593 = vmatprep.subr.mxu0 0.0
    %1594 = vmatpush1.msra.mxu0 0.0
    %1595 = vmatprep.subr.mxu0 0.0
    %1596 = vmatpush1.msra.mxu0 0.0
    %1597 = vmatprep.subr.mxu0 0.0
    %1598 = vmatpush1.msra.mxu0 0.0
    %1599 = vmatprep.subr.mxu0 0.0
    %1600 = vmatpush1.msra.mxu0 0.0
    %1601 = vmatprep.subr.mxu0 0.0
    %1602 = vmatpush1.msra.mxu0 0.0
    %1603 = vmatprep.subr.mxu0 0.0
    %1604 = vmatpush1.msra.mxu0 0.0
    %1605 = vmatprep.subr.mxu0 0.0
    %1606 = vmatpush1.msra.mxu0 0.0
    %1607 = vmatprep.subr.mxu0 0.0
    %1608 = vmatpush1.msra.mxu0 0.0
    %1609 = vmatprep.subr.mxu0 0.0
    %1610 = vmatpush1.msra.mxu0 0.0
    %1611 = vmatprep.subr.mxu0 0.0
    %1612 = vmatpush1.msra.mxu0 0.0
    %1613 = vmatprep.subr.mxu0 0.0
    %1614 = vmatpush1.msra.mxu0 0.0
    %1615 = vmatprep.subr.mxu0 0.0
    %1616 = vmatpush1.msra.mxu0 0.0
    %1617 = vmatprep.subr.mxu0 0.0
    %1618 = vmatpush1.msra.mxu0 0.0
    %1619 = vmatprep.subr.mxu0 0.0
    %1620 = vmatpush1.msra.mxu0 0.0
    %1621 = vmatprep.subr.mxu0 0.0
    %1622 = vmatpush1.msra.mxu0 0.0
    %1623 = vmatprep.subr.mxu0 0.0
    %1624 = vmatpush1.msra.mxu0 0.0
    %1625 = vmatprep.subr.mxu0 0.0
    %1626 = vmatpush1.msra.mxu0 0.0
    %1627 = vmatprep.subr.mxu0 0.0
    %1628 = vmatpush1.msra.mxu0 0.0
    %1629 = vmatprep.subr.mxu0 0.0
    %1630 = vmatpush1.msra.mxu0 0.0
    %1631 = vmatprep.subr.mxu0 0.0
    %1632 = vmatpush1.msra.mxu0 0.0
    %1633 = vmatprep.subr.mxu0 0.0
    %1634 = vmatpush1.msra.mxu0 0.0
    %1635 = vmatprep.mubr.f32.mxu0 0.0
    %1636 = vmatmul.mubr.f32.gmra.mrb[0].mxu0 %v1569
    %v1637 = vpop.f32.mrb[0].mxu0
    %v1638 = vadd.f32 %v1563, %v1637
    %v1639 = vpop.f32.mrb[0].mxu0
    %1640 = vdwg.mxu0
    %v1641 = vlaneseq
    %v1642 = vshrl.u32 %v1641, 7
    %v1643 = vsub.s32 0, %v1642
    %v1644 = vrot.slane %v1386, %v1643
    %v1645 = vadd.f32 %v1638, %v1644
    %v1646 = vxor.u32 %v1645, 2147483648
    %v1647 = vmul.f32 %v1646, 1.442695
    %v1648 = vpow.pop %v1647
    %v1649 = vadd.f32 %v1648, 1.0
    %v1650 = vrcp.pop %v1649
    %v1651 = vmul.f32 1.0, %v1650
    %v1652 = vtanh.pop %v1645
    %v1653 = vmul.f32 %v1651, %v1483
    %1655 = vrot.lane.b32.xlu0 %v1652, 64
    %v1656 = vpop.permute.xlu0 %1655
    %v1658 = vmul.f32 %v1651, %v1656
    %1660 = vrot.lane.b32.xlu0 %v1658, 32
    %v1661 = vpop.permute.xlu0 %1660
    %v1663 = vadd.f32 %v1653, %v1661
    %v1664 = vtanh.pop %v1663
    %1666 = vrot.lane.b32.xlu0 %v1664, 64
    %v1667 = vpop.permute.xlu0 %1666
    %v1669 = vmul.f32 %v1651, %v1667
    %v1670 = vmax.f32 %v1669, 0.0
    %1672 = vrot.lane.b32.xlu0 %v1669, 32
    %v1673 = vpop.permute.xlu0 %1672
    %v1674 = vsel %vm393, %v1673, 0
    %1676 = vmatprep.subr.mxu0 0.0
    %1677 = vmatpush1.msra.mxu0 %v1382
    %1678 = vmatprep.subr.mxu0 0.0
    %1679 = vmatpush1.msra.mxu0 %v1383
    %1680 = vmatprep.subr.mxu0 0.0
    %1681 = vmatpush1.msra.mxu0 %v1384
    %1682 = vmatprep.subr.mxu0 0.0
    %1683 = vmatpush1.msra.mxu0 %v1385
    %1684 = vmatprep.subr.mxu0 0.0
    %1685 = vmatpush1.msra.mxu0 0.0
    %1686 = vmatprep.subr.mxu0 0.0
    %1687 = vmatpush1.msra.mxu0 0.0
    %1688 = vmatprep.subr.mxu0 0.0
    %1689 = vmatpush1.msra.mxu0 0.0
    %1690 = vmatprep.subr.mxu0 0.0
    %1691 = vmatpush1.msra.mxu0 0.0
    %1692 = vmatprep.subr.mxu0 0.0
    %1693 = vmatpush1.msra.mxu0 0.0
    %1694 = vmatprep.subr.mxu0 0.0
    %1695 = vmatpush1.msra.mxu0 0.0
    %1696 = vmatprep.subr.mxu0 0.0
    %1697 = vmatpush1.msra.mxu0 0.0
    %1698 = vmatprep.subr.mxu0 0.0
    %1699 = vmatpush1.msra.mxu0 0.0
    %1700 = vmatprep.subr.mxu0 0.0
    %1701 = vmatpush1.msra.mxu0 0.0
    %1702 = vmatprep.subr.mxu0 0.0
    %1703 = vmatpush1.msra.mxu0 0.0
    %1704 = vmatprep.subr.mxu0 0.0
    %1705 = vmatpush1.msra.mxu0 0.0
    %1706 = vmatprep.subr.mxu0 0.0
    %1707 = vmatpush1.msra.mxu0 0.0
    %1708 = vmatprep.subr.mxu0 0.0
    %1709 = vmatpush1.msra.mxu0 0.0
    %1710 = vmatprep.subr.mxu0 0.0
    %1711 = vmatpush1.msra.mxu0 0.0
    %1712 = vmatprep.subr.mxu0 0.0
    %1713 = vmatpush1.msra.mxu0 0.0
    %1714 = vmatprep.subr.mxu0 0.0
    %1715 = vmatpush1.msra.mxu0 0.0
    %1716 = vmatprep.subr.mxu0 0.0
    %1717 = vmatpush1.msra.mxu0 0.0
    %1718 = vmatprep.subr.mxu0 0.0
    %1719 = vmatpush1.msra.mxu0 0.0
    %1720 = vmatprep.subr.mxu0 0.0
    %1721 = vmatpush1.msra.mxu0 0.0
    %1722 = vmatprep.subr.mxu0 0.0
    %1723 = vmatpush1.msra.mxu0 0.0
    %1724 = vmatprep.subr.mxu0 0.0
    %1725 = vmatpush1.msra.mxu0 0.0
    %1726 = vmatprep.subr.mxu0 0.0
    %1727 = vmatpush1.msra.mxu0 0.0
    %1728 = vmatprep.subr.mxu0 0.0
    %1729 = vmatpush1.msra.mxu0 0.0
    %1730 = vmatprep.subr.mxu0 0.0
    %1731 = vmatpush1.msra.mxu0 0.0
    %1732 = vmatprep.subr.mxu0 0.0
    %1733 = vmatpush1.msra.mxu0 0.0
    %1734 = vmatprep.subr.mxu0 0.0
    %1735 = vmatpush1.msra.mxu0 0.0
    %1736 = vmatprep.subr.mxu0 0.0
    %1737 = vmatpush1.msra.mxu0 0.0
    %1738 = vmatprep.subr.mxu0 0.0
    %1739 = vmatpush1.msra.mxu0 0.0
    %1740 = vmatprep.mubr.f32.mxu0 0.0
    %1741 = vmatmul.mubr.f32.gmra.mrb[0].mxu0 %v1674
    %v1742 = vpop.f32.mrb[0].mxu0
    %v1743 = vadd.f32 0.0, %v1742
    %v1744 = vpop.f32.mrb[0].mxu0
    %1745 = vdwg.mxu0
    %1747 = vrot.lane.b32.xlu0 %v1670, 32
    %v1748 = vpop.permute.xlu0 %1747
    %v1749 = vsel %vm393, %v1748, 0
    %1751 = vmatprep.subr.mxu0 0.0
    %1752 = vmatpush1.msra.mxu0 %v1378
    %1753 = vmatprep.subr.mxu0 0.0
    %1754 = vmatpush1.msra.mxu0 %v1379
    %1755 = vmatprep.subr.mxu0 0.0
    %1756 = vmatpush1.msra.mxu0 %v1380
    %1757 = vmatprep.subr.mxu0 0.0
    %1758 = vmatpush1.msra.mxu0 %v1381
    %1759 = vmatprep.subr.mxu0 0.0
    %1760 = vmatpush1.msra.mxu0 0.0
    %1761 = vmatprep.subr.mxu0 0.0
    %1762 = vmatpush1.msra.mxu0 0.0
    %1763 = vmatprep.subr.mxu0 0.0
    %1764 = vmatpush1.msra.mxu0 0.0
    %1765 = vmatprep.subr.mxu0 0.0
    %1766 = vmatpush1.msra.mxu0 0.0
    %1767 = vmatprep.subr.mxu0 0.0
    %1768 = vmatpush1.msra.mxu0 0.0
    %1769 = vmatprep.subr.mxu0 0.0
    %1770 = vmatpush1.msra.mxu0 0.0
    %1771 = vmatprep.subr.mxu0 0.0
    %1772 = vmatpush1.msra.mxu0 0.0
    %1773 = vmatprep.subr.mxu0 0.0
    %1774 = vmatpush1.msra.mxu0 0.0
    %1775 = vmatprep.subr.mxu0 0.0
    %1776 = vmatpush1.msra.mxu0 0.0
    %1777 = vmatprep.subr.mxu0 0.0
    %1778 = vmatpush1.msra.mxu0 0.0
    %1779 = vmatprep.subr.mxu0 0.0
    %1780 = vmatpush1.msra.mxu0 0.0
    %1781 = vmatprep.subr.mxu0 0.0
    %1782 = vmatpush1.msra.mxu0 0.0
    %1783 = vmatprep.subr.mxu0 0.0
    %1784 = vmatpush1.msra.mxu0 0.0
    %1785 = vmatprep.subr.mxu0 0.0
    %1786 = vmatpush1.msra.mxu0 0.0
    %1787 = vmatprep.subr.mxu0 0.0
    %1788 = vmatpush1.msra.mxu0 0.0
    %1789 = vmatprep.subr.mxu0 0.0
    %1790 = vmatpush1.msra.mxu0 0.0
    %1791 = vmatprep.subr.mxu0 0.0
    %1792 = vmatpush1.msra.mxu0 0.0
    %1793 = vmatprep.subr.mxu0 0.0
    %1794 = vmatpush1.msra.mxu0 0.0
    %1795 = vmatprep.subr.mxu0 0.0
    %1796 = vmatpush1.msra.mxu0 0.0
    %1797 = vmatprep.subr.mxu0 0.0
    %1798 = vmatpush1.msra.mxu0 0.0
    %1799 = vmatprep.subr.mxu0 0.0
    %1800 = vmatpush1.msra.mxu0 0.0
    %1801 = vmatprep.subr.mxu0 0.0
    %1802 = vmatpush1.msra.mxu0 0.0
    %1803 = vmatprep.subr.mxu0 0.0
    %1804 = vmatpush1.msra.mxu0 0.0
    %1805 = vmatprep.subr.mxu0 0.0
    %1806 = vmatpush1.msra.mxu0 0.0
    %1807 = vmatprep.subr.mxu0 0.0
    %1808 = vmatpush1.msra.mxu0 0.0
    %1809 = vmatprep.subr.mxu0 0.0
    %1810 = vmatpush1.msra.mxu0 0.0
    %1811 = vmatprep.subr.mxu0 0.0
    %1812 = vmatpush1.msra.mxu0 0.0
    %1813 = vmatprep.subr.mxu0 0.0
    %1814 = vmatpush1.msra.mxu0 0.0
    %1815 = vmatprep.mubr.f32.mxu0 0.0
    %1816 = vmatmul.mubr.f32.gmra.mrb[0].mxu0 %v1749
    %v1817 = vpop.f32.mrb[0].mxu0
    %v1818 = vadd.f32 %v1743, %v1817
    %v1819 = vpop.f32.mrb[0].mxu0
    %1820 = vdwg.mxu0
    %v1821 = vadd.f32 %v1818, %v1644
    %v1822 = vxor.u32 %v1821, 2147483648
    %v1823 = vmul.f32 %v1822, 1.442695
    %v1824 = vpow.pop %v1823
    %v1825 = vadd.f32 %v1824, 1.0
    %v1826 = vrcp.pop %v1825
    %v1827 = vmul.f32 1.0, %v1826
    %v1828 = vtanh.pop %v1821
    %v1829 = vmul.f32 %v1827, %v1663
    %1831 = vrot.lane.b32.xlu0 %v1828, 64
    %v1832 = vpop.permute.xlu0 %1831
    %v1834 = vmul.f32 %v1827, %v1832
    %1836 = vrot.lane.b32.xlu0 %v1834, 32
    %v1837 = vpop.permute.xlu0 %1836
    %v1839 = vadd.f32 %v1829, %v1837
    %v1840 = vtanh.pop %v1839
    %1842 = vrot.lane.b32.xlu0 %v1840, 64
    %v1843 = vpop.permute.xlu0 %1842
    %v1845 = vmul.f32 %v1827, %v1843
    %v1846 = vmax.f32 %v1845, 0.0
    %1848 = vrot.lane.b32.xlu0 %v1845, 32
    %v1849 = vpop.permute.xlu0 %1848
    %v1850 = vsel %vm393, %v1849, 0
    %1852 = vmatprep.subr.mxu0 0.0
    %1853 = vmatpush1.msra.mxu0 %v1382
    %1854 = vmatprep.subr.mxu0 0.0
    %1855 = vmatpush1.msra.mxu0 %v1383
    %1856 = vmatprep.subr.mxu0 0.0
    %1857 = vmatpush1.msra.mxu0 %v1384
    %1858 = vmatprep.subr.mxu0 0.0
    %1859 = vmatpush1.msra.mxu0 %v1385
    %1860 = vmatprep.subr.mxu0 0.0
    %1861 = vmatpush1.msra.mxu0 0.0
    %1862 = vmatprep.subr.mxu0 0.0
    %1863 = vmatpush1.msra.mxu0 0.0
    %1864 = vmatprep.subr.mxu0 0.0
    %1865 = vmatpush1.msra.mxu0 0.0
    %1866 = vmatprep.subr.mxu0 0.0
    %1867 = vmatpush1.msra.mxu0 0.0
    %1868 = vmatprep.subr.mxu0 0.0
    %1869 = vmatpush1.msra.mxu0 0.0
    %1870 = vmatprep.subr.mxu0 0.0
    %1871 = vmatpush1.msra.mxu0 0.0
    %1872 = vmatprep.subr.mxu0 0.0
    %1873 = vmatpush1.msra.mxu0 0.0
    %1874 = vmatprep.subr.mxu0 0.0
    %1875 = vmatpush1.msra.mxu0 0.0
    %1876 = vmatprep.subr.mxu0 0.0
    %1877 = vmatpush1.msra.mxu0 0.0
    %1878 = vmatprep.subr.mxu0 0.0
    %1879 = vmatpush1.msra.mxu0 0.0
    %1880 = vmatprep.subr.mxu0 0.0
    %1881 = vmatpush1.msra.mxu0 0.0
    %1882 = vmatprep.subr.mxu0 0.0
    %1883 = vmatpush1.msra.mxu0 0.0
    %1884 = vmatprep.subr.mxu0 0.0
    %1885 = vmatpush1.msra.mxu0 0.0
    %1886 = vmatprep.subr.mxu0 0.0
    %1887 = vmatpush1.msra.mxu0 0.0
    %1888 = vmatprep.subr.mxu0 0.0
    %1889 = vmatpush1.msra.mxu0 0.0
    %1890 = vmatprep.subr.mxu0 0.0
    %1891 = vmatpush1.msra.mxu0 0.0
    %1892 = vmatprep.subr.mxu0 0.0
    %1893 = vmatpush1.msra.mxu0 0.0
    %1894 = vmatprep.subr.mxu0 0.0
    %1895 = vmatpush1.msra.mxu0 0.0
    %1896 = vmatprep.subr.mxu0 0.0
    %1897 = vmatpush1.msra.mxu0 0.0
    %1898 = vmatprep.subr.mxu0 0.0
    %1899 = vmatpush1.msra.mxu0 0.0
    %1900 = vmatprep.subr.mxu0 0.0
    %1901 = vmatpush1.msra.mxu0 0.0
    %1902 = vmatprep.subr.mxu0 0.0
    %1903 = vmatpush1.msra.mxu0 0.0
    %1904 = vmatprep.subr.mxu0 0.0
    %1905 = vmatpush1.msra.mxu0 0.0
    %1906 = vmatprep.subr.mxu0 0.0
    %1907 = vmatpush1.msra.mxu0 0.0
    %1908 = vmatprep.subr.mxu0 0.0
    %1909 = vmatpush1.msra.mxu0 0.0
    %1910 = vmatprep.subr.mxu0 0.0
    %1911 = vmatpush1.msra.mxu0 0.0
    %1912 = vmatprep.subr.mxu0 0.0
    %1913 = vmatpush1.msra.mxu0 0.0
    %1914 = vmatprep.subr.mxu0 0.0
    %1915 = vmatpush1.msra.mxu0 0.0
    %1916 = vmatprep.mubr.f32.mxu0 0.0
    %1917 = vmatmul.mubr.f32.gmra.mrb[0].mxu0 %v1850
    %v1918 = vpop.f32.mrb[0].mxu0
    %v1919 = vadd.f32 0.0, %v1918
    %v1920 = vpop.f32.mrb[0].mxu0
    %1921 = vdwg.mxu0
    %1923 = vrot.lane.b32.xlu0 %v1846, 32
    %v1924 = vpop.permute.xlu0 %1923
    %v1925 = vsel %vm393, %v1924, 0
    %1927 = vmatprep.subr.mxu0 0.0
    %1928 = vmatpush1.msra.mxu0 %v1378
    %1929 = vmatprep.subr.mxu0 0.0
    %1930 = vmatpush1.msra.mxu0 %v1379
    %1931 = vmatprep.subr.mxu0 0.0
    %1932 = vmatpush1.msra.mxu0 %v1380
    %1933 = vmatprep.subr.mxu0 0.0
    %1934 = vmatpush1.msra.mxu0 %v1381
    %1935 = vmatprep.subr.mxu0 0.0
    %1936 = vmatpush1.msra.mxu0 0.0
    %1937 = vmatprep.subr.mxu0 0.0
    %1938 = vmatpush1.msra.mxu0 0.0
    %1939 = vmatprep.subr.mxu0 0.0
    %1940 = vmatpush1.msra.mxu0 0.0
    %1941 = vmatprep.subr.mxu0 0.0
    %1942 = vmatpush1.msra.mxu0 0.0
    %1943 = vmatprep.subr.mxu0 0.0
    %1944 = vmatpush1.msra.mxu0 0.0
    %1945 = vmatprep.subr.mxu0 0.0
    %1946 = vmatpush1.msra.mxu0 0.0
    %1947 = vmatprep.subr.mxu0 0.0
    %1948 = vmatpush1.msra.mxu0 0.0
    %1949 = vmatprep.subr.mxu0 0.0
    %1950 = vmatpush1.msra.mxu0 0.0
    %1951 = vmatprep.subr.mxu0 0.0
    %1952 = vmatpush1.msra.mxu0 0.0
    %1953 = vmatprep.subr.mxu0 0.0
    %1954 = vmatpush1.msra.mxu0 0.0
    %1955 = vmatprep.subr.mxu0 0.0
    %1956 = vmatpush1.msra.mxu0 0.0
    %1957 = vmatprep.subr.mxu0 0.0
    %1958 = vmatpush1.msra.mxu0 0.0
    %1959 = vmatprep.subr.mxu0 0.0
    %1960 = vmatpush1.msra.mxu0 0.0
    %1961 = vmatprep.subr.mxu0 0.0
    %1962 = vmatpush1.msra.mxu0 0.0
    %1963 = vmatprep.subr.mxu0 0.0
    %1964 = vmatpush1.msra.mxu0 0.0
    %1965 = vmatprep.subr.mxu0 0.0
    %1966 = vmatpush1.msra.mxu0 0.0
    %1967 = vmatprep.subr.mxu0 0.0
    %1968 = vmatpush1.msra.mxu0 0.0
    %1969 = vmatprep.subr.mxu0 0.0
    %1970 = vmatpush1.msra.mxu0 0.0
    %1971 = vmatprep.subr.mxu0 0.0
    %1972 = vmatpush1.msra.mxu0 0.0
    %1973 = vmatprep.subr.mxu0 0.0
    %1974 = vmatpush1.msra.mxu0 0.0
    %1975 = vmatprep.subr.mxu0 0.0
    %1976 = vmatpush1.msra.mxu0 0.0
    %1977 = vmatprep.subr.mxu0 0.0
    %1978 = vmatpush1.msra.mxu0 0.0
    %1979 = vmatprep.subr.mxu0 0.0
    %1980 = vmatpush1.msra.mxu0 0.0
    %1981 = vmatprep.subr.mxu0 0.0
    %1982 = vmatpush1.msra.mxu0 0.0
    %1983 = vmatprep.subr.mxu0 0.0
    %1984 = vmatpush1.msra.mxu0 0.0
    %1985 = vmatprep.subr.mxu0 0.0
    %1986 = vmatpush1.msra.mxu0 0.0
    %1987 = vmatprep.subr.mxu0 0.0
    %1988 = vmatpush1.msra.mxu0 0.0
    %1989 = vmatprep.subr.mxu0 0.0
    %1990 = vmatpush1.msra.mxu0 0.0
    %1991 = vmatprep.mubr.f32.mxu0 0.0
    %1992 = vmatmul.mubr.f32.gmra.mrb[0].mxu0 %v1925
    %v1993 = vpop.f32.mrb[0].mxu0
    %v1994 = vadd.f32 %v1919, %v1993
    %v1995 = vpop.f32.mrb[0].mxu0
    %1996 = vdwg.mxu0
    %v1997 = vadd.f32 %v1994, %v1644
    %v1998 = vxor.u32 %v1997, 2147483648
    %v1999 = vmul.f32 %v1998, 1.442695
    %v2000 = vpow.pop %v1999
    %v2001 = vadd.f32 %v2000, 1.0
    %v2002 = vrcp.pop %v2001
    %v2003 = vmul.f32 1.0, %v2002
    %v2004 = vtanh.pop %v1997
    %v2005 = vmul.f32 %v2003, %v1839
    %2007 = vrot.lane.b32.xlu0 %v2004, 64
    %v2008 = vpop.permute.xlu0 %2007
    %v2010 = vmul.f32 %v2003, %v2008
    %2012 = vrot.lane.b32.xlu0 %v2010, 32
    %v2013 = vpop.permute.xlu0 %2012
    %v2015 = vadd.f32 %v2005, %v2013
    %v2016 = vtanh.pop %v2015
    %2018 = vrot.lane.b32.xlu0 %v2016, 64
    %v2019 = vpop.permute.xlu0 %2018
    %v2021 = vmul.f32 %v2003, %v2019
    %v2022 = vmax.f32 %v2021, 0.0
    %2024 = vrot.lane.b32.xlu0 %v2021, 32
    %v2025 = vpop.permute.xlu0 %2024
    %v2026 = vsel %vm393, %v2025, 0
    %2028 = vmatprep.subr.mxu0 0.0
    %2029 = vmatpush1.msra.mxu0 %v1382
    %2030 = vmatprep.subr.mxu0 0.0
    %2031 = vmatpush1.msra.mxu0 %v1383
    %2032 = vmatprep.subr.mxu0 0.0
    %2033 = vmatpush1.msra.mxu0 %v1384
    %2034 = vmatprep.subr.mxu0 0.0
    %2035 = vmatpush1.msra.mxu0 %v1385
    %2036 = vmatprep.subr.mxu0 0.0
    %2037 = vmatpush1.msra.mxu0 0.0
    %2038 = vmatprep.subr.mxu0 0.0
    %2039 = vmatpush1.msra.mxu0 0.0
    %2040 = vmatprep.subr.mxu0 0.0
    %2041 = vmatpush1.msra.mxu0 0.0
    %2042 = vmatprep.subr.mxu0 0.0
    %2043 = vmatpush1.msra.mxu0 0.0
    %2044 = vmatprep.subr.mxu0 0.0
    %2045 = vmatpush1.msra.mxu0 0.0
    %2046 = vmatprep.subr.mxu0 0.0
    %2047 = vmatpush1.msra.mxu0 0.0
    %2048 = vmatprep.subr.mxu0 0.0
    %2049 = vmatpush1.msra.mxu0 0.0
    %2050 = vmatprep.subr.mxu0 0.0
    %2051 = vmatpush1.msra.mxu0 0.0
    %2052 = vmatprep.subr.mxu0 0.0
    %2053 = vmatpush1.msra.mxu0 0.0
    %2054 = vmatprep.subr.mxu0 0.0
    %2055 = vmatpush1.msra.mxu0 0.0
    %2056 = vmatprep.subr.mxu0 0.0
    %2057 = vmatpush1.msra.mxu0 0.0
    %2058 = vmatprep.subr.mxu0 0.0
    %2059 = vmatpush1.msra.mxu0 0.0
    %2060 = vmatprep.subr.mxu0 0.0
    %2061 = vmatpush1.msra.mxu0 0.0
    %2062 = vmatprep.subr.mxu0 0.0
    %2063 = vmatpush1.msra.mxu0 0.0
    %2064 = vmatprep.subr.mxu0 0.0
    %2065 = vmatpush1.msra.mxu0 0.0
    %2066 = vmatprep.subr.mxu0 0.0
    %2067 = vmatpush1.msra.mxu0 0.0
    %2068 = vmatprep.subr.mxu0 0.0
    %2069 = vmatpush1.msra.mxu0 0.0
    %2070 = vmatprep.subr.mxu0 0.0
    %2071 = vmatpush1.msra.mxu0 0.0
    %2072 = vmatprep.subr.mxu0 0.0
    %2073 = vmatpush1.msra.mxu0 0.0
    %2074 = vmatprep.subr.mxu0 0.0
    %2075 = vmatpush1.msra.mxu0 0.0
    %2076 = vmatprep.subr.mxu0 0.0
    %2077 = vmatpush1.msra.mxu0 0.0
    %2078 = vmatprep.subr.mxu0 0.0
    %2079 = vmatpush1.msra.mxu0 0.0
    %2080 = vmatprep.subr.mxu0 0.0
    %2081 = vmatpush1.msra.mxu0 0.0
    %2082 = vmatprep.subr.mxu0 0.0
    %2083 = vmatpush1.msra.mxu0 0.0
    %2084 = vmatprep.subr.mxu0 0.0
    %2085 = vmatpush1.msra.mxu0 0.0
    %2086 = vmatprep.subr.mxu0 0.0
    %2087 = vmatpush1.msra.mxu0 0.0
    %2088 = vmatprep.subr.mxu0 0.0
    %2089 = vmatpush1.msra.mxu0 0.0
    %2090 = vmatprep.subr.mxu0 0.0
    %2091 = vmatpush1.msra.mxu0 0.0
    %2092 = vmatprep.mubr.f32.mxu0 0.0
    %2093 = vmatmul.mubr.f32.gmra.mrb[0].mxu0 %v2026
    %v2094 = vpop.f32.mrb[0].mxu0
    %v2095 = vadd.f32 0.0, %v2094
    %v2096 = vpop.f32.mrb[0].mxu0
    %2097 = vdwg.mxu0
    %2099 = vrot.lane.b32.xlu0 %v2022, 32
    %v2100 = vpop.permute.xlu0 %2099
    %v2101 = vsel %vm393, %v2100, 0
    %2103 = vmatprep.subr.mxu0 0.0
    %2104 = vmatpush1.msra.mxu0 %v1378
    %2105 = vmatprep.subr.mxu0 0.0
    %2106 = vmatpush1.msra.mxu0 %v1379
    %2107 = vmatprep.subr.mxu0 0.0
    %2108 = vmatpush1.msra.mxu0 %v1380
    %2109 = vmatprep.subr.mxu0 0.0
    %2110 = vmatpush1.msra.mxu0 %v1381
    %2111 = vmatprep.subr.mxu0 0.0
    %2112 = vmatpush1.msra.mxu0 0.0
    %2113 = vmatprep.subr.mxu0 0.0
    %2114 = vmatpush1.msra.mxu0 0.0
    %2115 = vmatprep.subr.mxu0 0.0
    %2116 = vmatpush1.msra.mxu0 0.0
    %2117 = vmatprep.subr.mxu0 0.0
    %2118 = vmatpush1.msra.mxu0 0.0
    %2119 = vmatprep.subr.mxu0 0.0
    %2120 = vmatpush1.msra.mxu0 0.0
    %2121 = vmatprep.subr.mxu0 0.0
    %2122 = vmatpush1.msra.mxu0 0.0
    %2123 = vmatprep.subr.mxu0 0.0
    %2124 = vmatpush1.msra.mxu0 0.0
    %2125 = vmatprep.subr.mxu0 0.0
    %2126 = vmatpush1.msra.mxu0 0.0
    %2127 = vmatprep.subr.mxu0 0.0
    %2128 = vmatpush1.msra.mxu0 0.0
    %2129 = vmatprep.subr.mxu0 0.0
    %2130 = vmatpush1.msra.mxu0 0.0
    %2131 = vmatprep.subr.mxu0 0.0
    %2132 = vmatpush1.msra.mxu0 0.0
    %2133 = vmatprep.subr.mxu0 0.0
    %2134 = vmatpush1.msra.mxu0 0.0
    %2135 = vmatprep.subr.mxu0 0.0
    %2136 = vmatpush1.msra.mxu0 0.0
    %2137 = vmatprep.subr.mxu0 0.0
    %2138 = vmatpush1.msra.mxu0 0.0
    %2139 = vmatprep.subr.mxu0 0.0
    %2140 = vmatpush1.msra.mxu0 0.0
    %2141 = vmatprep.subr.mxu0 0.0
    %2142 = vmatpush1.msra.mxu0 0.0
    %2143 = vmatprep.subr.mxu0 0.0
    %2144 = vmatpush1.msra.mxu0 0.0
    %2145 = vmatprep.subr.mxu0 0.0
    %2146 = vmatpush1.msra.mxu0 0.0
    %2147 = vmatprep.subr.mxu0 0.0
    %2148 = vmatpush1.msra.mxu0 0.0
    %2149 = vmatprep.subr.mxu0 0.0
    %2150 = vmatpush1.msra.mxu0 0.0
    %2151 = vmatprep.subr.mxu0 0.0
    %2152 = vmatpush1.msra.mxu0 0.0
    %2153 = vmatprep.subr.mxu0 0.0
    %2154 = vmatpush1.msra.mxu0 0.0
    %2155 = vmatprep.subr.mxu0 0.0
    %2156 = vmatpush1.msra.mxu0 0.0
    %2157 = vmatprep.subr.mxu0 0.0
    %2158 = vmatpush1.msra.mxu0 0.0
    %2159 = vmatprep.subr.mxu0 0.0
    %2160 = vmatpush1.msra.mxu0 0.0
    %2161 = vmatprep.subr.mxu0 0.0
    %2162 = vmatpush1.msra.mxu0 0.0
    %2163 = vmatprep.subr.mxu0 0.0
    %2164 = vmatpush1.msra.mxu0 0.0
    %2165 = vmatprep.subr.mxu0 0.0
    %2166 = vmatpush1.msra.mxu0 0.0
    %2167 = vmatprep.mubr.f32.mxu0 0.0
    %2168 = vmatmul.mubr.f32.gmra.mrb[0].mxu0 %v2101
    %v2169 = vpop.f32.mrb[0].mxu0
    %v2170 = vadd.f32 %v2095, %v2169
    %v2171 = vpop.f32.mrb[0].mxu0
    %2172 = vdwg.mxu0
    %v2173 = vadd.f32 %v2170, %v1644
    %v2174 = vxor.u32 %v2173, 2147483648
    %v2175 = vmul.f32 %v2174, 1.442695
    %v2176 = vpow.pop %v2175
    %v2177 = vadd.f32 %v2176, 1.0
    %v2178 = vrcp.pop %v2177
    %v2179 = vmul.f32 1.0, %v2178
    %v2180 = vtanh.pop %v2173
    %v2181 = vmul.f32 %v2179, %v2015
    %2183 = vrot.lane.b32.xlu0 %v2180, 64
    %v2184 = vpop.permute.xlu0 %2183
    %v2186 = vmul.f32 %v2179, %v2184
    %2188 = vrot.lane.b32.xlu0 %v2186, 32
    %v2189 = vpop.permute.xlu0 %2188
    %v2191 = vadd.f32 %v2181, %v2189
    %v2192 = vtanh.pop %v2191
    %2194 = vrot.lane.b32.xlu0 %v2192, 64
    %v2195 = vpop.permute.xlu0 %2194
    %v2197 = vmul.f32 %v2179, %v2195
    %v2198 = vmax.f32 %v2197, 0.0
    %2200 = vrot.lane.b32.xlu0 %v2197, 32
    %v2201 = vpop.permute.xlu0 %2200
    %v2202 = vsel %vm393, %v2201, 0
    %2204 = vmatprep.subr.mxu0 0.0
    %2205 = vmatpush1.msra.mxu0 %v1382
    %2206 = vmatprep.subr.mxu0 0.0
    %2207 = vmatpush1.msra.mxu0 %v1383
    %2208 = vmatprep.subr.mxu0 0.0
    %2209 = vmatpush1.msra.mxu0 %v1384
    %2210 = vmatprep.subr.mxu0 0.0
    %2211 = vmatpush1.msra.mxu0 %v1385
    %2212 = vmatprep.subr.mxu0 0.0
    %2213 = vmatpush1.msra.mxu0 0.0
    %2214 = vmatprep.subr.mxu0 0.0
    %2215 = vmatpush1.msra.mxu0 0.0
    %2216 = vmatprep.subr.mxu0 0.0
    %2217 = vmatpush1.msra.mxu0 0.0
    %2218 = vmatprep.subr.mxu0 0.0
    %2219 = vmatpush1.msra.mxu0 0.0
    %2220 = vmatprep.subr.mxu0 0.0
    %2221 = vmatpush1.msra.mxu0 0.0
    %2222 = vmatprep.subr.mxu0 0.0
    %2223 = vmatpush1.msra.mxu0 0.0
    %2224 = vmatprep.subr.mxu0 0.0
    %2225 = vmatpush1.msra.mxu0 0.0
    %2226 = vmatprep.subr.mxu0 0.0
    %2227 = vmatpush1.msra.mxu0 0.0
    %2228 = vmatprep.subr.mxu0 0.0
    %2229 = vmatpush1.msra.mxu0 0.0
    %2230 = vmatprep.subr.mxu0 0.0
    %2231 = vmatpush1.msra.mxu0 0.0
    %2232 = vmatprep.subr.mxu0 0.0
    %2233 = vmatpush1.msra.mxu0 0.0
    %2234 = vmatprep.subr.mxu0 0.0
    %2235 = vmatpush1.msra.mxu0 0.0
    %2236 = vmatprep.subr.mxu0 0.0
    %2237 = vmatpush1.msra.mxu0 0.0
    %2238 = vmatprep.subr.mxu0 0.0
    %2239 = vmatpush1.msra.mxu0 0.0
    %2240 = vmatprep.subr.mxu0 0.0
    %2241 = vmatpush1.msra.mxu0 0.0
    %2242 = vmatprep.subr.mxu0 0.0
    %2243 = vmatpush1.msra.mxu0 0.0
    %2244 = vmatprep.subr.mxu0 0.0
    %2245 = vmatpush1.msra.mxu0 0.0
    %2246 = vmatprep.subr.mxu0 0.0
    %2247 = vmatpush1.msra.mxu0 0.0
    %2248 = vmatprep.subr.mxu0 0.0
    %2249 = vmatpush1.msra.mxu0 0.0
    %2250 = vmatprep.subr.mxu0 0.0
    %2251 = vmatpush1.msra.mxu0 0.0
    %2252 = vmatprep.subr.mxu0 0.0
    %2253 = vmatpush1.msra.mxu0 0.0
    %2254 = vmatprep.subr.mxu0 0.0
    %2255 = vmatpush1.msra.mxu0 0.0
    %2256 = vmatprep.subr.mxu0 0.0
    %2257 = vmatpush1.msra.mxu0 0.0
    %2258 = vmatprep.subr.mxu0 0.0
    %2259 = vmatpush1.msra.mxu0 0.0
    %2260 = vmatprep.subr.mxu0 0.0
    %2261 = vmatpush1.msra.mxu0 0.0
    %2262 = vmatprep.subr.mxu0 0.0
    %2263 = vmatpush1.msra.mxu0 0.0
    %2264 = vmatprep.subr.mxu0 0.0
    %2265 = vmatpush1.msra.mxu0 0.0
    %2266 = vmatprep.subr.mxu0 0.0
    %2267 = vmatpush1.msra.mxu0 0.0
    %2268 = vmatprep.mubr.f32.mxu0 0.0
    %2269 = vmatmul.mubr.f32.gmra.mrb[0].mxu0 %v2202
    %v2270 = vpop.f32.mrb[0].mxu0
    %v2271 = vadd.f32 0.0, %v2270
    %v2272 = vpop.f32.mrb[0].mxu0
    %2273 = vdwg.mxu0
    %2275 = vrot.lane.b32.xlu0 %v2198, 32
    %v2276 = vpop.permute.xlu0 %2275
    %v2277 = vsel %vm393, %v2276, 0
    %2279 = vmatprep.subr.mxu0 0.0
    %2280 = vmatpush1.msra.mxu0 %v1378
    %2281 = vmatprep.subr.mxu0 0.0
    %2282 = vmatpush1.msra.mxu0 %v1379
    %2283 = vmatprep.subr.mxu0 0.0
    %2284 = vmatpush1.msra.mxu0 %v1380
    %2285 = vmatprep.subr.mxu0 0.0
    %2286 = vmatpush1.msra.mxu0 %v1381
    %2287 = vmatprep.subr.mxu0 0.0
    %2288 = vmatpush1.msra.mxu0 0.0
    %2289 = vmatprep.subr.mxu0 0.0
    %2290 = vmatpush1.msra.mxu0 0.0
    %2291 = vmatprep.subr.mxu0 0.0
    %2292 = vmatpush1.msra.mxu0 0.0
    %2293 = vmatprep.subr.mxu0 0.0
    %2294 = vmatpush1.msra.mxu0 0.0
    %2295 = vmatprep.subr.mxu0 0.0
    %2296 = vmatpush1.msra.mxu0 0.0
    %2297 = vmatprep.subr.mxu0 0.0
    %2298 = vmatpush1.msra.mxu0 0.0
    %2299 = vmatprep.subr.mxu0 0.0
    %2300 = vmatpush1.msra.mxu0 0.0
    %2301 = vmatprep.subr.mxu0 0.0
    %2302 = vmatpush1.msra.mxu0 0.0
    %2303 = vmatprep.subr.mxu0 0.0
    %2304 = vmatpush1.msra.mxu0 0.0
    %2305 = vmatprep.subr.mxu0 0.0
    %2306 = vmatpush1.msra.mxu0 0.0
    %2307 = vmatprep.subr.mxu0 0.0
    %2308 = vmatpush1.msra.mxu0 0.0
    %2309 = vmatprep.subr.mxu0 0.0
    %2310 = vmatpush1.msra.mxu0 0.0
    %2311 = vmatprep.subr.mxu0 0.0
    %2312 = vmatpush1.msra.mxu0 0.0
    %2313 = vmatprep.subr.mxu0 0.0
    %2314 = vmatpush1.msra.mxu0 0.0
    %2315 = vmatprep.subr.mxu0 0.0
    %2316 = vmatpush1.msra.mxu0 0.0
    %2317 = vmatprep.subr.mxu0 0.0
    %2318 = vmatpush1.msra.mxu0 0.0
    %2319 = vmatprep.subr.mxu0 0.0
    %2320 = vmatpush1.msra.mxu0 0.0
    %2321 = vmatprep.subr.mxu0 0.0
    %2322 = vmatpush1.msra.mxu0 0.0
    %2323 = vmatprep.subr.mxu0 0.0
    %2324 = vmatpush1.msra.mxu0 0.0
    %2325 = vmatprep.subr.mxu0 0.0
    %2326 = vmatpush1.msra.mxu0 0.0
    %2327 = vmatprep.subr.mxu0 0.0
    %2328 = vmatpush1.msra.mxu0 0.0
    %2329 = vmatprep.subr.mxu0 0.0
    %2330 = vmatpush1.msra.mxu0 0.0
    %2331 = vmatprep.subr.mxu0 0.0
    %2332 = vmatpush1.msra.mxu0 0.0
    %2333 = vmatprep.subr.mxu0 0.0
    %2334 = vmatpush1.msra.mxu0 0.0
    %2335 = vmatprep.subr.mxu0 0.0
    %2336 = vmatpush1.msra.mxu0 0.0
    %2337 = vmatprep.subr.mxu0 0.0
    %2338 = vmatpush1.msra.mxu0 0.0
    %2339 = vmatprep.subr.mxu0 0.0
    %2340 = vmatpush1.msra.mxu0 0.0
    %2341 = vmatprep.subr.mxu0 0.0
    %2342 = vmatpush1.msra.mxu0 0.0
    %2343 = vmatprep.mubr.f32.mxu0 0.0
    %2344 = vmatmul.mubr.f32.gmra.mrb[0].mxu0 %v2277
    %v2345 = vpop.f32.mrb[0].mxu0
    %v2346 = vadd.f32 %v2271, %v2345
    %v2347 = vpop.f32.mrb[0].mxu0
    %2348 = vdwg.mxu0
    %v2349 = vadd.f32 %v2346, %v1644
    %v2350 = vxor.u32 %v2349, 2147483648
    %v2351 = vmul.f32 %v2350, 1.442695
    %v2352 = vpow.pop %v2351
    %v2353 = vadd.f32 %v2352, 1.0
    %v2354 = vrcp.pop %v2353
    %v2355 = vmul.f32 1.0, %v2354
    %v2356 = vtanh.pop %v2349
    %v2357 = vmul.f32 %v2355, %v2191
    %2359 = vrot.lane.b32.xlu0 %v2356, 64
    %v2360 = vpop.permute.xlu0 %2359
    %v2362 = vmul.f32 %v2355, %v2360
    %2364 = vrot.lane.b32.xlu0 %v2362, 32
    %v2365 = vpop.permute.xlu0 %2364
    %v2367 = vadd.f32 %v2357, %v2365
    %v2368 = vtanh.pop %v2367
    %2370 = vrot.lane.b32.xlu0 %v2368, 64
    %v2371 = vpop.permute.xlu0 %2370
    %v2373 = vmul.f32 %v2355, %v2371
    %v2374 = vmax.f32 %v2373, 0.0
    %2376 = vrot.lane.b32.xlu0 %v2373, 32
    %v2377 = vpop.permute.xlu0 %2376
    %v2378 = vsel %vm393, %v2377, 0
    %2380 = vmatprep.subr.mxu0 0.0
    %2381 = vmatpush1.msra.mxu0 %v1382
    %2382 = vmatprep.subr.mxu0 0.0
    %2383 = vmatpush1.msra.mxu0 %v1383
    %2384 = vmatprep.subr.mxu0 0.0
    %2385 = vmatpush1.msra.mxu0 %v1384
    %2386 = vmatprep.subr.mxu0 0.0
    %2387 = vmatpush1.msra.mxu0 %v1385
    %2388 = vmatprep.subr.mxu0 0.0
    %2389 = vmatpush1.msra.mxu0 0.0
    %2390 = vmatprep.subr.mxu0 0.0
    %2391 = vmatpush1.msra.mxu0 0.0
    %2392 = vmatprep.subr.mxu0 0.0
    %2393 = vmatpush1.msra.mxu0 0.0
    %2394 = vmatprep.subr.mxu0 0.0
    %2395 = vmatpush1.msra.mxu0 0.0
    %2396 = vmatprep.subr.mxu0 0.0
    %2397 = vmatpush1.msra.mxu0 0.0
    %2398 = vmatprep.subr.mxu0 0.0
    %2399 = vmatpush1.msra.mxu0 0.0
    %2400 = vmatprep.subr.mxu0 0.0
    %2401 = vmatpush1.msra.mxu0 0.0
    %2402 = vmatprep.subr.mxu0 0.0
    %2403 = vmatpush1.msra.mxu0 0.0
    %2404 = vmatprep.subr.mxu0 0.0
    %2405 = vmatpush1.msra.mxu0 0.0
    %2406 = vmatprep.subr.mxu0 0.0
    %2407 = vmatpush1.msra.mxu0 0.0
    %2408 = vmatprep.subr.mxu0 0.0
    %2409 = vmatpush1.msra.mxu0 0.0
    %2410 = vmatprep.subr.mxu0 0.0
    %2411 = vmatpush1.msra.mxu0 0.0
    %2412 = vmatprep.subr.mxu0 0.0
    %2413 = vmatpush1.msra.mxu0 0.0
    %2414 = vmatprep.subr.mxu0 0.0
    %2415 = vmatpush1.msra.mxu0 0.0
    %2416 = vmatprep.subr.mxu0 0.0
    %2417 = vmatpush1.msra.mxu0 0.0
    %2418 = vmatprep.subr.mxu0 0.0
    %2419 = vmatpush1.msra.mxu0 0.0
    %2420 = vmatprep.subr.mxu0 0.0
    %2421 = vmatpush1.msra.mxu0 0.0
    %2422 = vmatprep.subr.mxu0 0.0
    %2423 = vmatpush1.msra.mxu0 0.0
    %2424 = vmatprep.subr.mxu0 0.0
    %2425 = vmatpush1.msra.mxu0 0.0
    %2426 = vmatprep.subr.mxu0 0.0
    %2427 = vmatpush1.msra.mxu0 0.0
    %2428 = vmatprep.subr.mxu0 0.0
    %2429 = vmatpush1.msra.mxu0 0.0
    %2430 = vmatprep.subr.mxu0 0.0
    %2431 = vmatpush1.msra.mxu0 0.0
    %2432 = vmatprep.subr.mxu0 0.0
    %2433 = vmatpush1.msra.mxu0 0.0
    %2434 = vmatprep.subr.mxu0 0.0
    %2435 = vmatpush1.msra.mxu0 0.0
    %2436 = vmatprep.subr.mxu0 0.0
    %2437 = vmatpush1.msra.mxu0 0.0
    %2438 = vmatprep.subr.mxu0 0.0
    %2439 = vmatpush1.msra.mxu0 0.0
    %2440 = vmatprep.subr.mxu0 0.0
    %2441 = vmatpush1.msra.mxu0 0.0
    %2442 = vmatprep.subr.mxu0 0.0
    %2443 = vmatpush1.msra.mxu0 0.0
    %2444 = vmatprep.mubr.f32.mxu0 0.0
    %2445 = vmatmul.mubr.f32.gmra.mrb[0].mxu0 %v2378
    %v2446 = vpop.f32.mrb[0].mxu0
    %v2447 = vadd.f32 0.0, %v2446
    %v2448 = vpop.f32.mrb[0].mxu0
    %2449 = vdwg.mxu0
    %2451 = vrot.lane.b32.xlu0 %v2374, 32
    %v2452 = vpop.permute.xlu0 %2451
    %v2453 = vsel %vm393, %v2452, 0
    %2455 = vmatprep.subr.mxu0 0.0
    %2456 = vmatpush1.msra.mxu0 %v1378
    %2457 = vmatprep.subr.mxu0 0.0
    %2458 = vmatpush1.msra.mxu0 %v1379
    %2459 = vmatprep.subr.mxu0 0.0
    %2460 = vmatpush1.msra.mxu0 %v1380
    %2461 = vmatprep.subr.mxu0 0.0
    %2462 = vmatpush1.msra.mxu0 %v1381
    %2463 = vmatprep.subr.mxu0 0.0
    %2464 = vmatpush1.msra.mxu0 0.0
    %2465 = vmatprep.subr.mxu0 0.0
    %2466 = vmatpush1.msra.mxu0 0.0
    %2467 = vmatprep.subr.mxu0 0.0
    %2468 = vmatpush1.msra.mxu0 0.0
    %2469 = vmatprep.subr.mxu0 0.0
    %2470 = vmatpush1.msra.mxu0 0.0
    %2471 = vmatprep.subr.mxu0 0.0
    %2472 = vmatpush1.msra.mxu0 0.0
    %2473 = vmatprep.subr.mxu0 0.0
    %2474 = vmatpush1.msra.mxu0 0.0
    %2475 = vmatprep.subr.mxu0 0.0
    %2476 = vmatpush1.msra.mxu0 0.0
    %2477 = vmatprep.subr.mxu0 0.0
    %2478 = vmatpush1.msra.mxu0 0.0
    %2479 = vmatprep.subr.mxu0 0.0
    %2480 = vmatpush1.msra.mxu0 0.0
    %2481 = vmatprep.subr.mxu0 0.0
    %2482 = vmatpush1.msra.mxu0 0.0
    %2483 = vmatprep.subr.mxu0 0.0
    %2484 = vmatpush1.msra.mxu0 0.0
    %2485 = vmatprep.subr.mxu0 0.0
    %2486 = vmatpush1.msra.mxu0 0.0
    %2487 = vmatprep.subr.mxu0 0.0
    %2488 = vmatpush1.msra.mxu0 0.0
    %2489 = vmatprep.subr.mxu0 0.0
    %2490 = vmatpush1.msra.mxu0 0.0
    %2491 = vmatprep.subr.mxu0 0.0
    %2492 = vmatpush1.msra.mxu0 0.0
    %2493 = vmatprep.subr.mxu0 0.0
    %2494 = vmatpush1.msra.mxu0 0.0
    %2495 = vmatprep.subr.mxu0 0.0
    %2496 = vmatpush1.msra.mxu0 0.0
    %2497 = vmatprep.subr.mxu0 0.0
    %2498 = vmatpush1.msra.mxu0 0.0
    %2499 = vmatprep.subr.mxu0 0.0
    %2500 = vmatpush1.msra.mxu0 0.0
    %2501 = vmatprep.subr.mxu0 0.0
    %2502 = vmatpush1.msra.mxu0 0.0
    %2503 = vmatprep.subr.mxu0 0.0
    %2504 = vmatpush1.msra.mxu0 0.0
    %2505 = vmatprep.subr.mxu0 0.0
    %2506 = vmatpush1.msra.mxu0 0.0
    %2507 = vmatprep.subr.mxu0 0.0
    %2508 = vmatpush1.msra.mxu0 0.0
    %2509 = vmatprep.subr.mxu0 0.0
    %2510 = vmatpush1.msra.mxu0 0.0
    %2511 = vmatprep.subr.mxu0 0.0
    %2512 = vmatpush1.msra.mxu0 0.0
    %2513 = vmatprep.subr.mxu0 0.0
    %2514 = vmatpush1.msra.mxu0 0.0
    %2515 = vmatprep.subr.mxu0 0.0
    %2516 = vmatpush1.msra.mxu0 0.0
    %2517 = vmatprep.subr.mxu0 0.0
    %2518 = vmatpush1.msra.mxu0 0.0
    %2519 = vmatprep.mubr.f32.mxu0 0.0
    %2520 = vmatmul.mubr.f32.gmra.mrb[0].mxu0 %v2453
    %v2521 = vpop.f32.mrb[0].mxu0
    %v2522 = vadd.f32 %v2447, %v2521
    %v2523 = vpop.f32.mrb[0].mxu0
    %2524 = vdwg.mxu0
    %v2525 = vadd.f32 %v2522, %v1644
    %v2526 = vxor.u32 %v2525, 2147483648
    %v2527 = vmul.f32 %v2526, 1.442695
    %v2528 = vpow.pop %v2527
    %v2529 = vadd.f32 %v2528, 1.0
    %v2530 = vrcp.pop %v2529
    %v2531 = vmul.f32 1.0, %v2530
    %v2532 = vtanh.pop %v2525
    %v2533 = vmul.f32 %v2531, %v2367
    %2535 = vrot.lane.b32.xlu0 %v2532, 64
    %v2536 = vpop.permute.xlu0 %2535
    %v2538 = vmul.f32 %v2531, %v2536
    %2540 = vrot.lane.b32.xlu0 %v2538, 32
    %v2541 = vpop.permute.xlu0 %2540
    %v2543 = vadd.f32 %v2533, %v2541
    %v2544 = vtanh.pop %v2543
    %2546 = vrot.lane.b32.xlu0 %v2544, 64
    %v2547 = vpop.permute.xlu0 %2546
    %v2549 = vmul.f32 %v2531, %v2547
    %v2550 = vmax.f32 %v2549, 0.0
    %2552 = vrot.lane.b32.xlu0 %v2549, 32
    %v2553 = vpop.permute.xlu0 %2552
    %v2554 = vsel %vm393, %v2553, 0
    %2556 = vmatprep.subr.mxu0 0.0
    %2557 = vmatpush1.msra.mxu0 %v1382
    %2558 = vmatprep.subr.mxu0 0.0
    %2559 = vmatpush1.msra.mxu0 %v1383
    %2560 = vmatprep.subr.mxu0 0.0
    %2561 = vmatpush1.msra.mxu0 %v1384
    %2562 = vmatprep.subr.mxu0 0.0
    %2563 = vmatpush1.msra.mxu0 %v1385
    %2564 = vmatprep.subr.mxu0 0.0
    %2565 = vmatpush1.msra.mxu0 0.0
    %2566 = vmatprep.subr.mxu0 0.0
    %2567 = vmatpush1.msra.mxu0 0.0
    %2568 = vmatprep.subr.mxu0 0.0
    %2569 = vmatpush1.msra.mxu0 0.0
    %2570 = vmatprep.subr.mxu0 0.0
    %2571 = vmatpush1.msra.mxu0 0.0
    %2572 = vmatprep.subr.mxu0 0.0
    %2573 = vmatpush1.msra.mxu0 0.0
    %2574 = vmatprep.subr.mxu0 0.0
    %2575 = vmatpush1.msra.mxu0 0.0
    %2576 = vmatprep.subr.mxu0 0.0
    %2577 = vmatpush1.msra.mxu0 0.0
    %2578 = vmatprep.subr.mxu0 0.0
    %2579 = vmatpush1.msra.mxu0 0.0
    %2580 = vmatprep.subr.mxu0 0.0
    %2581 = vmatpush1.msra.mxu0 0.0
    %2582 = vmatprep.subr.mxu0 0.0
    %2583 = vmatpush1.msra.mxu0 0.0
    %2584 = vmatprep.subr.mxu0 0.0
    %2585 = vmatpush1.msra.mxu0 0.0
    %2586 = vmatprep.subr.mxu0 0.0
    %2587 = vmatpush1.msra.mxu0 0.0
    %2588 = vmatprep.subr.mxu0 0.0
    %2589 = vmatpush1.msra.mxu0 0.0
    %2590 = vmatprep.subr.mxu0 0.0
    %2591 = vmatpush1.msra.mxu0 0.0
    %2592 = vmatprep.subr.mxu0 0.0
    %2593 = vmatpush1.msra.mxu0 0.0
    %2594 = vmatprep.subr.mxu0 0.0
    %2595 = vmatpush1.msra.mxu0 0.0
    %2596 = vmatprep.subr.mxu0 0.0
    %2597 = vmatpush1.msra.mxu0 0.0
    %2598 = vmatprep.subr.mxu0 0.0
    %2599 = vmatpush1.msra.mxu0 0.0
    %2600 = vmatprep.subr.mxu0 0.0
    %2601 = vmatpush1.msra.mxu0 0.0
    %2602 = vmatprep.subr.mxu0 0.0
    %2603 = vmatpush1.msra.mxu0 0.0
    %2604 = vmatprep.subr.mxu0 0.0
    %2605 = vmatpush1.msra.mxu0 0.0
    %2606 = vmatprep.subr.mxu0 0.0
    %2607 = vmatpush1.msra.mxu0 0.0
    %2608 = vmatprep.subr.mxu0 0.0
    %2609 = vmatpush1.msra.mxu0 0.0
    %2610 = vmatprep.subr.mxu0 0.0
    %2611 = vmatpush1.msra.mxu0 0.0
    %2612 = vmatprep.subr.mxu0 0.0
    %2613 = vmatpush1.msra.mxu0 0.0
    %2614 = vmatprep.subr.mxu0 0.0
    %2615 = vmatpush1.msra.mxu0 0.0
    %2616 = vmatprep.subr.mxu0 0.0
    %2617 = vmatpush1.msra.mxu0 0.0
    %2618 = vmatprep.subr.mxu0 0.0
    %2619 = vmatpush1.msra.mxu0 0.0
    %2620 = vmatprep.mubr.f32.mxu0 0.0
    %2621 = vmatmul.mubr.f32.gmra.mrb[0].mxu0 %v2554
    %v2622 = vpop.f32.mrb[0].mxu0
    %v2623 = vadd.f32 0.0, %v2622
    %v2624 = vpop.f32.mrb[0].mxu0
    %2625 = vdwg.mxu0
    %2627 = vrot.lane.b32.xlu0 %v2550, 32
    %v2628 = vpop.permute.xlu0 %2627
    %v2629 = vsel %vm393, %v2628, 0
    %2631 = vmatprep.subr.mxu0 0.0
    %2632 = vmatpush1.msra.mxu0 %v1378
    %2633 = vmatprep.subr.mxu0 0.0
    %2634 = vmatpush1.msra.mxu0 %v1379
    %2635 = vmatprep.subr.mxu0 0.0
    %2636 = vmatpush1.msra.mxu0 %v1380
    %2637 = vmatprep.subr.mxu0 0.0
    %2638 = vmatpush1.msra.mxu0 %v1381
    %2639 = vmatprep.subr.mxu0 0.0
    %2640 = vmatpush1.msra.mxu0 0.0
    %2641 = vmatprep.subr.mxu0 0.0
    %2642 = vmatpush1.msra.mxu0 0.0
    %2643 = vmatprep.subr.mxu0 0.0
    %2644 = vmatpush1.msra.mxu0 0.0
    %2645 = vmatprep.subr.mxu0 0.0
    %2646 = vmatpush1.msra.mxu0 0.0
    %2647 = vmatprep.subr.mxu0 0.0
    %2648 = vmatpush1.msra.mxu0 0.0
    %2649 = vmatprep.subr.mxu0 0.0
    %2650 = vmatpush1.msra.mxu0 0.0
    %2651 = vmatprep.subr.mxu0 0.0
    %2652 = vmatpush1.msra.mxu0 0.0
    %2653 = vmatprep.subr.mxu0 0.0
    %2654 = vmatpush1.msra.mxu0 0.0
    %2655 = vmatprep.subr.mxu0 0.0
    %2656 = vmatpush1.msra.mxu0 0.0
    %2657 = vmatprep.subr.mxu0 0.0
    %2658 = vmatpush1.msra.mxu0 0.0
    %2659 = vmatprep.subr.mxu0 0.0
    %2660 = vmatpush1.msra.mxu0 0.0
    %2661 = vmatprep.subr.mxu0 0.0
    %2662 = vmatpush1.msra.mxu0 0.0
    %2663 = vmatprep.subr.mxu0 0.0
    %2664 = vmatpush1.msra.mxu0 0.0
    %2665 = vmatprep.subr.mxu0 0.0
    %2666 = vmatpush1.msra.mxu0 0.0
    %2667 = vmatprep.subr.mxu0 0.0
    %2668 = vmatpush1.msra.mxu0 0.0
    %2669 = vmatprep.subr.mxu0 0.0
    %2670 = vmatpush1.msra.mxu0 0.0
    %2671 = vmatprep.subr.mxu0 0.0
    %2672 = vmatpush1.msra.mxu0 0.0
    %2673 = vmatprep.subr.mxu0 0.0
    %2674 = vmatpush1.msra.mxu0 0.0
    %2675 = vmatprep.subr.mxu0 0.0
    %2676 = vmatpush1.msra.mxu0 0.0
    %2677 = vmatprep.subr.mxu0 0.0
    %2678 = vmatpush1.msra.mxu0 0.0
    %2679 = vmatprep.subr.mxu0 0.0
    %2680 = vmatpush1.msra.mxu0 0.0
    %2681 = vmatprep.subr.mxu0 0.0
    %2682 = vmatpush1.msra.mxu0 0.0
    %2683 = vmatprep.subr.mxu0 0.0
    %2684 = vmatpush1.msra.mxu0 0.0
    %2685 = vmatprep.subr.mxu0 0.0
    %2686 = vmatpush1.msra.mxu0 0.0
    %2687 = vmatprep.subr.mxu0 0.0
    %2688 = vmatpush1.msra.mxu0 0.0
    %2689 = vmatprep.subr.mxu0 0.0
    %2690 = vmatpush1.msra.mxu0 0.0
    %2691 = vmatprep.subr.mxu0 0.0
    %2692 = vmatpush1.msra.mxu0 0.0
    %2693 = vmatprep.subr.mxu0 0.0
    %2694 = vmatpush1.msra.mxu0 0.0
    %2695 = vmatprep.mubr.f32.mxu0 0.0
    %2696 = vmatmul.mubr.f32.gmra.mrb[0].mxu0 %v2629
    %v2697 = vpop.f32.mrb[0].mxu0
    %v2698 = vadd.f32 %v2623, %v2697
    %v2699 = vpop.f32.mrb[0].mxu0
    %2700 = vdwg.mxu0
    %v2701 = vadd.f32 %v2698, %v1644
    %v2702 = vxor.u32 %v2701, 2147483648
    %v2703 = vmul.f32 %v2702, 1.442695
    %v2704 = vpow.pop %v2703
    %v2705 = vadd.f32 %v2704, 1.0
    %v2706 = vrcp.pop %v2705
    %v2707 = vmul.f32 1.0, %v2706
    %v2708 = vtanh.pop %v2701
    %v2709 = vmul.f32 %v2707, %v2543
    %2711 = vrot.lane.b32.xlu0 %v2708, 64
    %v2712 = vpop.permute.xlu0 %2711
    %v2714 = vmul.f32 %v2707, %v2712
    %2716 = vrot.lane.b32.xlu0 %v2714, 32
    %v2717 = vpop.permute.xlu0 %2716
    %v2719 = vadd.f32 %v2709, %v2717
    %v2720 = vtanh.pop %v2719
    %2722 = vrot.lane.b32.xlu0 %v2720, 64
    %v2723 = vpop.permute.xlu0 %2722
    %v2725 = vmul.f32 %v2707, %v2723
    %2727 = vrot.lane.b32.xlu0 %v1669, 64
    %v2728 = vpop.permute.xlu0 %2727
    %2730 = vrot.lane.b32.xlu0 %v1845, 96
    %v2731 = vpop.permute.xlu0 %2730
    %2734 = vrot.lane.b32.xlu0 %v2373, 64
    %v2735 = vpop.permute.xlu0 %2734
    %2737 = vrot.lane.b32.xlu0 %v2549, 96
    %v2738 = vpop.permute.xlu0 %2737
    %v2740 = vsel %vm393, %v1493, %v2728
    %v2741 = vsel %vm1217, %v2740, %v2731
    %vm2742 = vcmask 785408
    %v2743 = vsel %vm2742, %v2741, %v2021
    %v2744 = vsel %vm393, %v2201, %v2735
    %v2745 = vsel %vm1217, %v2744, %v2738
    %v2746 = vsel %vm2742, %v2745, %v2725
    %v2747 = vld [vmem:[#allocation7 + $0xd0] sm:$0xff]
    %v2748 = vld [vmem:[#allocation7 + $0xd8] sm:$0xff]
    %v2749 = vld [vmem:[#allocation7 + $0xe0] sm:$0xff]
    %v2750 = vld [vmem:[#allocation7 + $0xe8] sm:$0xff]
    %v2751 = vld [vmem:[#allocation7 + $0xf0] sm:$0xff]
    %v2752 = vld [vmem:[#allocation7 + $0xf8] sm:$0xff]
    %v2753 = vld [vmem:[#allocation7 + $0x100] sm:$0xff]
    %v2754 = vld [vmem:[#allocation7 + $0x108] sm:$0xff]
    %v2755 = vld [vmem:[#allocation7 + $0x110] sm:$0xff]
    %v2756 = vld [vmem:[#allocation7 + $0x118] sm:$0xff]
    %v2757 = vld [vmem:[#allocation7 + $0x120] sm:$0xff]
    %v2758 = vld [vmem:[#allocation7 + $0x128] sm:$0xff]
    %v2759 = vld [vmem:[#allocation7 + $0x130] sm:$0xff]
    %v2760 = vld [vmem:[#allocation7 + $0x138] sm:$0xff]
    %v2761 = vld [vmem:[#allocation7 + $0x140] sm:$0xff]
    %v2762 = vld [vmem:[#allocation7 + $0x148] sm:$0xff]
    %v2763 = vld [vmem:[#allocation7 + $0x150] sm:$0xff]
    %v2764 = vld [vmem:[#allocation7 + $0x158] sm:$0xff]
    %v2765 = vld [vmem:[#allocation7 + $0x160] sm:$0xff]
    %v2766 = vld [vmem:[#allocation7 + $0x168] sm:$0xff]
    %v2767 = vld [vmem:[#allocation7 + $0x170] sm:$0xff]
    %v2768 = vld [vmem:[#allocation7 + $0x178] sm:$0xff]
    %v2769 = vld [vmem:[#allocation7 + $0x180] sm:$0xff]
    %v2770 = vld [vmem:[#allocation7 + $0x188] sm:$0xff]
    %v2771 = vld [vmem:[#allocation7 + $0x190] sm:$0xff]
    %v2772 = vld [vmem:[#allocation7 + $0x198] sm:$0xff]
    %v2773 = vld [vmem:[#allocation7 + $0x1a0] sm:$0xff]
    %v2774 = vld [vmem:[#allocation7 + $0x1a8] sm:$0xff]
    %v2775 = vld [vmem:[#allocation7 + $0x1b0] sm:$0xff]
    %v2776 = vld [vmem:[#allocation7 + $0x1b8] sm:$0xff]
    %v2777 = vld [vmem:[#allocation7 + $0x1c0] sm:$0xff]
    %v2778 = vld [vmem:[#allocation7 + $0x1c8] sm:$0xff]
    %v2779 = vld [vmem:[#allocation7 + $0x1d0] sm:$0x1]
    %v2780 = vlaneseq
    %v2781 = vshrl.u32 %v2780, 7
    %v2782 = vsub.s32 0, %v2781
    %v2783 = vrot.slane %v2779, %v2782
    %2784 = vmatprep.subr.mxu0 0.0
    %2785 = vmatpush1.msra.mxu0 %v2747
    %2786 = vmatprep.subr.mxu0 0.0
    %2787 = vmatpush1.msra.mxu0 %v2748
    %2788 = vmatprep.subr.mxu0 0.0
    %2789 = vmatpush1.msra.mxu0 %v2749
    %2790 = vmatprep.subr.mxu0 0.0
    %2791 = vmatpush1.msra.mxu0 %v2750
    %2792 = vmatprep.subr.mxu0 0.0
    %2793 = vmatpush1.msra.mxu0 %v2751
    %2794 = vmatprep.subr.mxu0 0.0
    %2795 = vmatpush1.msra.mxu0 %v2752
    %2796 = vmatprep.subr.mxu0 0.0
    %2797 = vmatpush1.msra.mxu0 %v2753
    %2798 = vmatprep.subr.mxu0 0.0
    %2799 = vmatpush1.msra.mxu0 %v2754
    %2800 = vmatprep.subr.mxu0 0.0
    %2801 = vmatpush1.msra.mxu0 %v2755
    %2802 = vmatprep.subr.mxu0 0.0
    %2803 = vmatpush1.msra.mxu0 %v2756
    %2804 = vmatprep.subr.mxu0 0.0
    %2805 = vmatpush1.msra.mxu0 %v2757
    %2806 = vmatprep.subr.mxu0 0.0
    %2807 = vmatpush1.msra.mxu0 %v2758
    %2808 = vmatprep.subr.mxu0 0.0
    %2809 = vmatpush1.msra.mxu0 %v2759
    %2810 = vmatprep.subr.mxu0 0.0
    %2811 = vmatpush1.msra.mxu0 %v2760
    %2812 = vmatprep.subr.mxu0 0.0
    %2813 = vmatpush1.msra.mxu0 %v2761
    %2814 = vmatprep.subr.mxu0 0.0
    %2815 = vmatpush1.msra.mxu0 %v2762
    %2816 = vmatprep.subr.mxu0 0.0
    %2817 = vmatpush1.msra.mxu0 %v2763
    %2818 = vmatprep.subr.mxu0 0.0
    %2819 = vmatpush1.msra.mxu0 %v2764
    %2820 = vmatprep.subr.mxu0 0.0
    %2821 = vmatpush1.msra.mxu0 %v2765
    %2822 = vmatprep.subr.mxu0 0.0
    %2823 = vmatpush1.msra.mxu0 %v2766
    %2824 = vmatprep.subr.mxu0 0.0
    %2825 = vmatpush1.msra.mxu0 %v2767
    %2826 = vmatprep.subr.mxu0 0.0
    %2827 = vmatpush1.msra.mxu0 %v2768
    %2828 = vmatprep.subr.mxu0 0.0
    %2829 = vmatpush1.msra.mxu0 %v2769
    %2830 = vmatprep.subr.mxu0 0.0
    %2831 = vmatpush1.msra.mxu0 %v2770
    %2832 = vmatprep.subr.mxu0 0.0
    %2833 = vmatpush1.msra.mxu0 %v2771
    %2834 = vmatprep.subr.mxu0 0.0
    %2835 = vmatpush1.msra.mxu0 %v2772
    %2836 = vmatprep.subr.mxu0 0.0
    %2837 = vmatpush1.msra.mxu0 %v2773
    %2838 = vmatprep.subr.mxu0 0.0
    %2839 = vmatpush1.msra.mxu0 %v2774
    %2840 = vmatprep.subr.mxu0 0.0
    %2841 = vmatpush1.msra.mxu0 %v2775
    %2842 = vmatprep.subr.mxu0 0.0
    %2843 = vmatpush1.msra.mxu0 %v2776
    %2844 = vmatprep.subr.mxu0 0.0
    %2845 = vmatpush1.msra.mxu0 %v2777
    %2846 = vmatprep.subr.mxu0 0.0
    %2847 = vmatpush1.msra.mxu0 %v2778
    %2848 = vmatprep.mubr.f32.mxu0 %v2746
    %2849 = vmatmul.mubr.f32.gmra.mrb[0].mxu0 %v2743
    %v2850 = vpop.f32.mrb[0].mxu0
    %v2851 = vadd.f32 %v2783, %v2850
    %v2852 = vpop.f32.mrb[0].mxu0
    %2853 = vdwg.mxu0
    %v2854 = vld [vmem:[#allocation7 + $0x1d8] sm:$0xff]
    %v2855 = vld [vmem:[#allocation7 + $0x1e0] sm:$0xff]
    %v2856 = vld [vmem:[#allocation7 + $0x1e8] sm:$0xff]
    %v2857 = vld [vmem:[#allocation7 + $0x1f0] sm:$0xff]
    %v2858 = vld [vmem:[#allocation7 + $0x1f8] sm:$0x1]
    %v2859 = vlaneseq
    %v2860 = vshrl.u32 %v2859, 7
    %v2861 = vsub.s32 0, %v2860
    %v2862 = vrot.slane %v2858, %v2861
    %2863 = vrot.lane.b32.xlu0 %v1377, 64
    %v2864 = vpop.permute.xlu0 %2863
    %v2865 = vsel %vm393, %v2864, 0
    %2867 = vmatprep.subr.mxu0 0.0
    %2868 = vmatpush1.msra.mxu0 %v2854
    %2869 = vmatprep.subr.mxu0 0.0
    %2870 = vmatpush1.msra.mxu0 %v2855
    %2871 = vmatprep.subr.mxu0 0.0
    %2872 = vmatpush1.msra.mxu0 %v2856
    %2873 = vmatprep.subr.mxu0 0.0
    %2874 = vmatpush1.msra.mxu0 %v2857
    %2875 = vmatprep.subr.mxu0 0.0
    %2876 = vmatpush1.msra.mxu0 0.0
    %2877 = vmatprep.subr.mxu0 0.0
    %2878 = vmatpush1.msra.mxu0 0.0
    %2879 = vmatprep.subr.mxu0 0.0
    %2880 = vmatpush1.msra.mxu0 0.0
    %2881 = vmatprep.subr.mxu0 0.0
    %2882 = vmatpush1.msra.mxu0 0.0
    %2883 = vmatprep.subr.mxu0 0.0
    %2884 = vmatpush1.msra.mxu0 0.0
    %2885 = vmatprep.subr.mxu0 0.0
    %2886 = vmatpush1.msra.mxu0 0.0
    %2887 = vmatprep.subr.mxu0 0.0
    %2888 = vmatpush1.msra.mxu0 0.0
    %2889 = vmatprep.subr.mxu0 0.0
    %2890 = vmatpush1.msra.mxu0 0.0
    %2891 = vmatprep.subr.mxu0 0.0
    %2892 = vmatpush1.msra.mxu0 0.0
    %2893 = vmatprep.subr.mxu0 0.0
    %2894 = vmatpush1.msra.mxu0 0.0
    %2895 = vmatprep.subr.mxu0 0.0
    %2896 = vmatpush1.msra.mxu0 0.0
    %2897 = vmatprep.subr.mxu0 0.0
    %2898 = vmatpush1.msra.mxu0 0.0
    %2899 = vmatprep.subr.mxu0 0.0
    %2900 = vmatpush1.msra.mxu0 0.0
    %2901 = vmatprep.subr.mxu0 0.0
    %2902 = vmatpush1.msra.mxu0 0.0
    %2903 = vmatprep.subr.mxu0 0.0
    %2904 = vmatpush1.msra.mxu0 0.0
    %2905 = vmatprep.subr.mxu0 0.0
    %2906 = vmatpush1.msra.mxu0 0.0
    %2907 = vmatprep.subr.mxu0 0.0
    %2908 = vmatpush1.msra.mxu0 0.0
    %2909 = vmatprep.subr.mxu0 0.0
    %2910 = vmatpush1.msra.mxu0 0.0
    %2911 = vmatprep.subr.mxu0 0.0
    %2912 = vmatpush1.msra.mxu0 0.0
    %2913 = vmatprep.subr.mxu0 0.0
    %2914 = vmatpush1.msra.mxu0 0.0
    %2915 = vmatprep.subr.mxu0 0.0
    %2916 = vmatpush1.msra.mxu0 0.0
    %2917 = vmatprep.subr.mxu0 0.0
    %2918 = vmatpush1.msra.mxu0 0.0
    %2919 = vmatprep.subr.mxu0 0.0
    %2920 = vmatpush1.msra.mxu0 0.0
    %2921 = vmatprep.subr.mxu0 0.0
    %2922 = vmatpush1.msra.mxu0 0.0
    %2923 = vmatprep.subr.mxu0 0.0
    %2924 = vmatpush1.msra.mxu0 0.0
    %2925 = vmatprep.subr.mxu0 0.0
    %2926 = vmatpush1.msra.mxu0 0.0
    %2927 = vmatprep.subr.mxu0 0.0
    %2928 = vmatpush1.msra.mxu0 0.0
    %2929 = vmatprep.subr.mxu0 0.0
    %2930 = vmatpush1.msra.mxu0 0.0
    %2931 = vmatprep.mubr.f32.mxu0 0.0
    %2932 = vmatmul.mubr.f32.gmra.mrb[0].mxu0 %v2865
    %v2933 = vpop.f32.mrb[0].mxu0
    %v2934 = vadd.f32 %v2862, %v2933
    %v2935 = vpop.f32.mrb[0].mxu0
    %2936 = vdwg.mxu0
    %v2937 = vmax.f32 %v2934, 0.0
    %v2938 = vld [vmem:[#allocation7 + $0x200] sm:$0xff]
    %v2939 = vld [vmem:[#allocation7 + $0x208] sm:$0xff]
    %v2940 = vld [vmem:[#allocation7 + $0x210] sm:$0xff]
    %v2941 = vld [vmem:[#allocation7 + $0x218] sm:$0xff]
    %v2942 = vld [vmem:[#allocation7 + $0x220] sm:$0x1]
    %v2943 = vld [vmem:[#allocation7 + $0x228] sm:$0xff]
    %v2944 = vld [vmem:[#allocation7 + $0x230] sm:$0xff]
    %v2945 = vld [vmem:[#allocation7 + $0x238] sm:$0xff]
    %v2946 = vld [vmem:[#allocation7 + $0x240] sm:$0xff]
    %v2947 = vld [vmem:[#allocation7 + $0x248] sm:$0x1]
    %v2948 = vlaneseq
    %v2949 = vshrl.u32 %v2948, 7
    %v2950 = vsub.s32 0, %v2949
    %v2951 = vrot.slane %v2942, %v2950
    %2952 = vrot.lane.b32.xlu0 %v1377, 32
    %v2953 = vpop.permute.xlu0 %2952
    %v2954 = vsel %vm393, %v2953, 0
    %2956 = vmatprep.subr.mxu0 0.0
    %2957 = vmatpush1.msra.mxu0 %v2938
    %2958 = vmatprep.subr.mxu0 0.0
    %2959 = vmatpush1.msra.mxu0 %v2939
    %2960 = vmatprep.subr.mxu0 0.0
    %2961 = vmatpush1.msra.mxu0 %v2940
    %2962 = vmatprep.subr.mxu0 0.0
    %2963 = vmatpush1.msra.mxu0 %v2941
    %2964 = vmatprep.subr.mxu0 0.0
    %2965 = vmatpush1.msra.mxu0 0.0
    %2966 = vmatprep.subr.mxu0 0.0
    %2967 = vmatpush1.msra.mxu0 0.0
    %2968 = vmatprep.subr.mxu0 0.0
    %2969 = vmatpush1.msra.mxu0 0.0
    %2970 = vmatprep.subr.mxu0 0.0
    %2971 = vmatpush1.msra.mxu0 0.0
    %2972 = vmatprep.subr.mxu0 0.0
    %2973 = vmatpush1.msra.mxu0 0.0
    %2974 = vmatprep.subr.mxu0 0.0
    %2975 = vmatpush1.msra.mxu0 0.0
    %2976 = vmatprep.subr.mxu0 0.0
    %2977 = vmatpush1.msra.mxu0 0.0
    %2978 = vmatprep.subr.mxu0 0.0
    %2979 = vmatpush1.msra.mxu0 0.0
    %2980 = vmatprep.subr.mxu0 0.0
    %2981 = vmatpush1.msra.mxu0 0.0
    %2982 = vmatprep.subr.mxu0 0.0
    %2983 = vmatpush1.msra.mxu0 0.0
    %2984 = vmatprep.subr.mxu0 0.0
    %2985 = vmatpush1.msra.mxu0 0.0
    %2986 = vmatprep.subr.mxu0 0.0
    %2987 = vmatpush1.msra.mxu0 0.0
    %2988 = vmatprep.subr.mxu0 0.0
    %2989 = vmatpush1.msra.mxu0 0.0
    %2990 = vmatprep.subr.mxu0 0.0
    %2991 = vmatpush1.msra.mxu0 0.0
    %2992 = vmatprep.subr.mxu0 0.0
    %2993 = vmatpush1.msra.mxu0 0.0
    %2994 = vmatprep.subr.mxu0 0.0
    %2995 = vmatpush1.msra.mxu0 0.0
    %2996 = vmatprep.subr.mxu0 0.0
    %2997 = vmatpush1.msra.mxu0 0.0
    %2998 = vmatprep.subr.mxu0 0.0
    %2999 = vmatpush1.msra.mxu0 0.0
    %3000 = vmatprep.subr.mxu0 0.0
    %3001 = vmatpush1.msra.mxu0 0.0
    %3002 = vmatprep.subr.mxu0 0.0
    %3003 = vmatpush1.msra.mxu0 0.0
    %3004 = vmatprep.subr.mxu0 0.0
    %3005 = vmatpush1.msra.mxu0 0.0
    %3006 = vmatprep.subr.mxu0 0.0
    %3007 = vmatpush1.msra.mxu0 0.0
    %3008 = vmatprep.subr.mxu0 0.0
    %3009 = vmatpush1.msra.mxu0 0.0
    %3010 = vmatprep.subr.mxu0 0.0
    %3011 = vmatpush1.msra.mxu0 0.0
    %3012 = vmatprep.subr.mxu0 0.0
    %3013 = vmatpush1.msra.mxu0 0.0
    %3014 = vmatprep.subr.mxu0 0.0
    %3015 = vmatpush1.msra.mxu0 0.0
    %3016 = vmatprep.subr.mxu0 0.0
    %3017 = vmatpush1.msra.mxu0 0.0
    %3018 = vmatprep.subr.mxu0 0.0
    %3019 = vmatpush1.msra.mxu0 0.0
    %3020 = vmatprep.mubr.f32.mxu0 0.0
    %3021 = vmatmul.mubr.f32.gmra.mrb[0].mxu0 %v2954
    %v3022 = vpop.f32.mrb[0].mxu0
    %v3023 = vadd.f32 %v2951, %v3022
    %v3024 = vpop.f32.mrb[0].mxu0
    %3025 = vdwg.mxu0
    %vm3026 = vcmp.gt.f32.partialorder %v3023, 0.0
    %v3027 = vmul.f32 %v3023, 0.01
    %v3028 = vsel %vm3026, %v3023, %v3027
    %v3029 = vlaneseq
    %v3030 = vshrl.u32 %v3029, 7
    %v3031 = vsub.s32 0, %v3030
    %v3032 = vrot.slane %v2947, %v3031
    %v3034 = vsel %vm393, %v3028, 0
    %3036 = vmatprep.subr.mxu0 0.0
    %3037 = vmatpush1.msra.mxu0 %v2943
    %3038 = vmatprep.subr.mxu0 0.0
    %3039 = vmatpush1.msra.mxu0 %v2944
    %3040 = vmatprep.subr.mxu0 0.0
    %3041 = vmatpush1.msra.mxu0 %v2945
    %3042 = vmatprep.subr.mxu0 0.0
    %3043 = vmatpush1.msra.mxu0 %v2946
    %3044 = vmatprep.subr.mxu0 0.0
    %3045 = vmatpush1.msra.mxu0 0.0
    %3046 = vmatprep.subr.mxu0 0.0
    %3047 = vmatpush1.msra.mxu0 0.0
    %3048 = vmatprep.subr.mxu0 0.0
    %3049 = vmatpush1.msra.mxu0 0.0
    %3050 = vmatprep.subr.mxu0 0.0
    %3051 = vmatpush1.msra.mxu0 0.0
    %3052 = vmatprep.subr.mxu0 0.0
    %3053 = vmatpush1.msra.mxu0 0.0
    %3054 = vmatprep.subr.mxu0 0.0
    %3055 = vmatpush1.msra.mxu0 0.0
    %3056 = vmatprep.subr.mxu0 0.0
    %3057 = vmatpush1.msra.mxu0 0.0
    %3058 = vmatprep.subr.mxu0 0.0
    %3059 = vmatpush1.msra.mxu0 0.0
    %3060 = vmatprep.subr.mxu0 0.0
    %3061 = vmatpush1.msra.mxu0 0.0
    %3062 = vmatprep.subr.mxu0 0.0
    %3063 = vmatpush1.msra.mxu0 0.0
    %3064 = vmatprep.subr.mxu0 0.0
    %3065 = vmatpush1.msra.mxu0 0.0
    %3066 = vmatprep.subr.mxu0 0.0
    %3067 = vmatpush1.msra.mxu0 0.0
    %3068 = vmatprep.subr.mxu0 0.0
    %3069 = vmatpush1.msra.mxu0 0.0
    %3070 = vmatprep.subr.mxu0 0.0
    %3071 = vmatpush1.msra.mxu0 0.0
    %3072 = vmatprep.subr.mxu0 0.0
    %3073 = vmatpush1.msra.mxu0 0.0
    %3074 = vmatprep.subr.mxu0 0.0
    %3075 = vmatpush1.msra.mxu0 0.0
    %3076 = vmatprep.subr.mxu0 0.0
    %3077 = vmatpush1.msra.mxu0 0.0
    %3078 = vmatprep.subr.mxu0 0.0
    %3079 = vmatpush1.msra.mxu0 0.0
    %3080 = vmatprep.subr.mxu0 0.0
    %3081 = vmatpush1.msra.mxu0 0.0
    %3082 = vmatprep.subr.mxu0 0.0
    %3083 = vmatpush1.msra.mxu0 0.0
    %3084 = vmatprep.subr.mxu0 0.0
    %3085 = vmatpush1.msra.mxu0 0.0
    %3086 = vmatprep.subr.mxu0 0.0
    %3087 = vmatpush1.msra.mxu0 0.0
    %3088 = vmatprep.subr.mxu0 0.0
    %3089 = vmatpush1.msra.mxu0 0.0
    %3090 = vmatprep.subr.mxu0 0.0
    %3091 = vmatpush1.msra.mxu0 0.0
    %3092 = vmatprep.subr.mxu0 0.0
    %3093 = vmatpush1.msra.mxu0 0.0
    %3094 = vmatprep.subr.mxu0 0.0
    %3095 = vmatpush1.msra.mxu0 0.0
    %3096 = vmatprep.subr.mxu0 0.0
    %3097 = vmatpush1.msra.mxu0 0.0
    %3098 = vmatprep.subr.mxu0 0.0
    %3099 = vmatpush1.msra.mxu0 0.0
    %3100 = vmatprep.mubr.f32.mxu0 0.0
    %3101 = vmatmul.mubr.f32.gmra.mrb[0].mxu0 %v3034
    %v3102 = vpop.f32.mrb[0].mxu0
    %v3103 = vadd.f32 %v3032, %v3102
    %v3104 = vpop.f32.mrb[0].mxu0
    %3105 = vdwg.mxu0
    %vm3106 = vcmask 15360
    %v3107 = vsel %vm3106, %v3103, -inf
    %3108 = vmax.xlane.f32.xlu0 %v3107
    %v3109 = vpop.xlane.xlu0 %3108
    %v3110 = vsub.f32 %v3103, %v3109
    %v3111 = vmul.f32 %v3110, 1.442695
    %v3112 = vpow.pop %v3111
    %v3113 = vsel %vm3106, %v3112, 0.0
    %3114 = vadd.xlane.f32.xlu0 %v3113
    %v3115 = vpop.xlane.xlu0 %3114
    %v3116 = vrcp.pop %v3115
    %v3117 = vmul.f32 %v3112, %v3116
    %3118 = vrot.lane.b32.xlu0 %v1288, 40
    %v3119 = vpop.permute.xlu0 %3118
    %3122 = vrot.lane.b32.xlu0 %v2937, 48
    %v3123 = vpop.permute.xlu0 %3122
    %3126 = vrot.lane.b32.xlu0 %v3117, 49
    %v3127 = vpop.permute.xlu0 %3126
    %v3129 = vsel %vm95, %v2851, %v3119
    %vm3130 = vcmask 359424
    %v3131 = vsel %vm3130, %v3129, %v3119
    %vm3132 = vcmask 392192
    %v3133 = vsel %vm3132, %v3131, %v3123
    %vm3134 = vcmask 400384
    %v3135 = vsel %vm3134, %v3133, %v3127
    %vm3136 = vcmask 416768
    %v3137 = vsel %vm3136, %v3135, 0.0
    %3138 = vst [vmem:[#allocation8] sm:$0xff] %v3137
    // Predicated region
    $region26: #{tpu_custom_call.1} parent=1 // pred_check
      _
    $region27: #{tpu_custom_call.1} parent=1 // pred_check_branch
      %3140 = sbr.rel (0) target = $region29
    $region28: #{tpu_custom_call.1} parent=1 // pred_region
      %s3142 = ssub.s32 128, 128
      %3143 = vsyncadd [#allocation4], %s3142
      %s3145 = sshll.u32 [#allocation8], 4
      %s3146 = int_to_ptr.vmem [resolvable:$true] %s3145
      %3148 = dma.vmem_to_hbm [thread:$0]  %s3146, 128, %s3, [#allocation4]
    $region29: #{tpu_custom_call.1} parent=1 // pred_fallthru
      _
    // Predicated region
    $region30: #{tpu_custom_call.1} parent=1 // pred_check
      _
    $region31: #{tpu_custom_call.1} parent=1 // pred_check_branch
      %3150 = sbr.rel (0) target = $region33
    $region32: #{tpu_custom_call.1} parent=1 // pred_region
      %3151 = dma.done [#allocation4], 128
    $region33: #{tpu_custom_call.1} parent=1 // pred_fallthru
      _
    %3152 = vsyncpa [#allocation3], 1
    %3153 = vsyncpa [#allocation6], 1
    %3154 = vsyncpa [#allocation4], 1

</llo_original>
